<compile_context>
chip_gen: v5e
topology: v5e:2x2
jax: 0.10.0
libtpu: 0.0.40
codegen_flags: <defaults>
</compile_context>

<pallas_src>
import functools

import numpy as np
import jax
import jax.numpy as jnp
from jax.experimental import pallas as pl
from jax.experimental.pallas import tpu as pltpu

# ---- fixed hyper-parameters from the module ---------------------------------
FS      = 16000
N_FFT   = 400
WIN     = 400
HOP     = 160                       # frame hop (samples)
N_FILTS = 80
N_FREQ  = N_FFT // 2 + 1            # 201
AMIN    = 1e-10
TOP_DB  = 80.0
OUT_EPS = 1e-9
DB_COEF = 10.0 / float(np.log(10.0))     # 10*log10(x) == DB_COEF * ln(x)

# ---- TPU-friendly padded dims ------------------------------------------------
K_PAD     = 256                     # freq bins 201 -> 256 (lane multiple)
M_PAD     = 128                     # filters   80 -> 128 (lane multiple)
FRAME_PAD = 512                     # 400-sample frame -> 512 (single aligned MXU K)


@functools.lru_cache(maxsize=1)
def _build_constants():
    """Fused windowed-DFT weights (512, 512) and a gammatone-style filterbank."""
    n = np.arange(WIN, dtype=np.float64)
    window = 0.5 - 0.5 * np.cos(2.0 * np.pi * n / WIN)        # periodic Hann
    k = np.arange(N_FREQ, dtype=np.float64)
    ang = 2.0 * np.pi * np.outer(n, k) / N_FFT                # (400, 201)

    # Combined RHS: columns [0:256) = cos (Re), [256:512) = -sin (Im).
    # Rows 400..511 are zero (frame padding), so K is a single aligned 512.
    w = np.zeros((FRAME_PAD, 2 * K_PAD), np.float32)          # (512, 512)
    w[:WIN, :N_FREQ] = (window[:, None] * np.cos(ang)).astype(np.float32)
    w[:WIN, K_PAD:K_PAD + N_FREQ] = (-window[:, None] * np.sin(ang)).astype(np.float32)
    dft_w = jnp.asarray(w, dtype=jnp.bfloat16)

    # Deterministic ERB-spaced triangular filterbank, (n_freq, n_filts), padded.
    # TODO(synk): true `spafe` gammatone impulse-response filters are not
    # reproduced here; this is a deterministic synthetic stand-in of the same
    # shape (80 filters x 201 bins).
    def erb(f):     return 21.4 * np.log10(1.0 + 0.00437 * f)
    def erb_inv(e): return (10.0 ** (e / 21.4) - 1.0) / 0.00437
    pts = erb_inv(np.linspace(erb(20.0), erb(FS / 2.0), N_FILTS + 2))
    bin_f = np.arange(N_FREQ, dtype=np.float64) * FS / N_FFT
    fb = np.zeros((K_PAD, M_PAD), np.float32)
    for m in range(N_FILTS):
        lo, ce, hi = pts[m], pts[m + 1], pts[m + 2]
        up = (bin_f - lo) / max(ce - lo, 1e-6)
        dn = (hi - bin_f) / max(hi - ce, 1e-6)
        fb[:N_FREQ, m] = np.maximum(0.0, np.minimum(up, dn))
    fb_bf16 = jnp.asarray(fb, dtype=jnp.bfloat16)
    return dft_w, fb_bf16


# ---- pass A: |STFT|^2 + filterbank, one T-tile per grid step -----------------
def _gamma_power_kernel(frames_ref, dftw_ref, fb_ref, gam_ref, tmax_ref):
    x = frames_ref[0]                                          # (TILE_T, 512) bf16

    # Single fused (cos | -sin) RHS: reim[:, :K_PAD] = Re, reim[:, K_PAD:] = Im.
    reim = jnp.dot(x, dftw_ref[...], preferred_element_type=jnp.float32)
    re = reim[:, :K_PAD]
    im = reim[:, K_PAD:]
    power = re * re + im * im                                  # (TILE_T, K_PAD) f32

    gam = jnp.dot(power.astype(jnp.bfloat16), fb_ref[...],
                  preferred_element_type=jnp.float32)          # (TILE_T, M_PAD) f32

    gam_ref[0] = gam.astype(gam_ref.dtype)                     # bf16 writeback
    # Per-tile max (rows past T and filters past 80 are exactly zero, gam >= 0,
    # so padding can never exceed the true per-utterance maximum).
    tmax_ref[0, 0] = jnp.max(gam, axis=0, keepdims=True)       # (1, 128) f32


def gamma_forward(feat, ilens=None):
    """feat: (B, N) float32 raw audio -> (logmel_feat (B, T, 80), output_lens (B,))."""
    B, N = feat.shape
    T = 1 + N // HOP                       # librosa center=True frame count
    tile_t = 256 if T <= 256 else 512      # multiple of 256; amortizes step cost
    nt = -(-T // tile_t)                   # ceil(T / tile_t)
    t_pad = nt * tile_t

    dft_w, fb = _build_constants()

    # librosa.util.normalize folded in as a post-scale on G and ref = max(G).
    # TODO(synk): librosa.util.normalize threshold/fill handling of near-silent
    # inputs is not replicated (floor at 1e-19 keeps 1/m^2 finite).
    m = jnp.maximum(jnp.max(jnp.abs(feat), axis=-1), jnp.float32(1e-19))
    inv_m2 = (1.0 / (m * m)).astype(jnp.float32)               # (B,)

    # Center/reflect padding (librosa.stft center=True).
    # TODO(synk): librosa >= 0.10 defaults to pad_mode='constant'; switch if the
    # target espnet environment uses a newer librosa.
    y = jnp.pad(feat, ((0, 0), (N_FFT // 2, N_FFT // 2)), mode="reflect")
    L = N + N_FFT
    n_hops = max(T + 2, -(-L // HOP))
    y = jnp.pad(y, ((0, 0), (0, n_hops * HOP - L)))
    hops = y.reshape(B, n_hops, HOP)                           # (B, n_hops, 160)

    # Frame slab: frame r = hops[r] ++ hops[r+1] ++ hops[r+2][:80], zero-padded
    # to 512 lanes; contiguous slices + concat only (no gather), XLA fuses it.
    frames = jnp.concatenate(
        [hops[:, 0:T],                                         # samples [  0:160)
         hops[:, 1:T + 1],                                     # samples [160:320)
         hops[:, 2:T + 2, :WIN - 2 * HOP],                     # samples [320:400)
         jnp.zeros((B, T, FRAME_PAD - WIN), y.dtype)], axis=-1)
    frames = frames.astype(jnp.bfloat16)
    # Rows past T stay exactly zero so they cannot perturb ref = max(G).
    frames = jnp.pad(frames, ((0, 0), (0, t_pad - T), (0, 0)))

    gam, tmax = pl.pallas_call(
        _gamma_power_kernel,
        out_shape=(jax.ShapeDtypeStruct((B, t_pad, M_PAD), jnp.bfloat16),
                   jax.ShapeDtypeStruct((B, nt, 1, 128), jnp.float32)),
        grid=(B, nt),
        in_specs=[
            pl.BlockSpec((1, tile_t, FRAME_PAD), lambda b, t: (b, t, 0)),
            pl.BlockSpec((FRAME_PAD, 2 * K_PAD), lambda b, t: (0, 0)),
            pl.BlockSpec((K_PAD, M_PAD), lambda b, t: (0, 0)),
        ],
        out_specs=(
            pl.BlockSpec((1, tile_t, M_PAD), lambda b, t: (b, t, 0)),
            pl.BlockSpec((1, 1, 1, 128), lambda b, t: (b, t, 0, 0)),
        ),
        compiler_params=pltpu.CompilerParams(
            dimension_semantics=("parallel", "parallel")),
    )(frames, dft_w, fb)

    # power_to_db(ref=np.max) + abs + eps: one fused XLA elementwise pass over
    # the valid (B, T, 80) region (gam read once, output written once).
    gam_v = gam[:, :T, :N_FILTS].astype(jnp.float32) * inv_m2[:, None, None]
    ref = jnp.max(tmax, axis=(1, 2, 3)) * inv_m2               # (B,)
    db_ref = DB_COEF * jnp.log(jnp.maximum(ref, jnp.float32(AMIN)))
    log_spec = DB_COEF * jnp.log(jnp.maximum(gam_v, jnp.float32(AMIN)))
    log_spec = log_spec - db_ref[:, None, None]
    # max(log_spec) is identically 0 (ref == max), so the top_db clamp is -80.
    log_spec = jnp.maximum(log_spec, -TOP_DB)
    logmel_feat = jnp.abs(log_spec) + OUT_EPS                  # (B, T, 80)

    if ilens is not None:
        # masked_fill(make_pad_mask(ilens, x, 1), 0.0)
        mask = jnp.arange(T)[None, :] >= ilens[:, None]
        logmel_feat = jnp.where(mask[:, :, None], 0.0, logmel_feat)
        output_lens = ilens.astype(jnp.int32)
    else:
        output_lens = jnp.full((B,), T, dtype=jnp.int32)
    return logmel_feat, output_lens


if __name__ == "__main__":
    key = jax.random.PRNGKey(0)
    B, N = 2, 8000                        # 0.5 s of 16 kHz audio per batch item
    feat = jax.random.normal(key, (B, N), dtype=jnp.float32)

    fwd = jax.jit(gamma_forward)
    logmel_feat, output_lens = fwd(feat)
    logmel_feat = jax.block_until_ready(logmel_feat)
    output_lens = jax.block_until_ready(output_lens)

    assert logmel_feat.shape == (B, 1 + N // HOP, N_FILTS)
    assert output_lens.shape == (B,)
    assert bool(jnp.all(jnp.isfinite(logmel_feat)))
    print("KERNEL_OK")
</pallas_src>

<mosaic_0001>
module attributes {stable_mosaic.version = 11 : i64} {
  func.func @_gamma_power_kernel(%arg0: i32, %arg1: i32, %arg2: memref<1x256x512xbf16, #tpu.memory_space<vmem>>, %arg3: memref<512x512xbf16, #tpu.memory_space<vmem>>, %arg4: memref<256x128xbf16, #tpu.memory_space<vmem>>, %arg5: memref<1x256x128xbf16, #tpu.memory_space<vmem>>, %arg6: memref<1x1x1x128xf32, #tpu.memory_space<vmem>>) attributes {dimension_semantics = [#tpu.dimension_semantics<parallel>, #tpu.dimension_semantics<parallel>], iteration_bounds = array<i64: 2, 1>, scalar_prefetch = 0 : i64, scratch_operands = 0 : i64, tpu.core_type = #tpu.core_type<tc>, window_params = [{transform_indices = @transform_0, window_bounds = array<i64: 1, 256, 512>}, {pipeline_mode = #tpu.pipeline_mode<synchronous>, transform_indices = @transform_1, window_bounds = array<i64: 512, 512>}, {pipeline_mode = #tpu.pipeline_mode<synchronous>, transform_indices = @transform_2, window_bounds = array<i64: 256, 128>}, {transform_indices = @transform_3, window_bounds = array<i64: 1, 256, 128>}, {transform_indices = @transform_4, window_bounds = array<i64: 1, 1, 1, 128>}]} {
    %c0 = arith.constant 0 : index
    %c0_0 = arith.constant 0 : index
    %c0_1 = arith.constant 0 : index
    %0 = vector.load %arg2[%c0, %c0_0, %c0_1] : memref<1x256x512xbf16, #tpu.memory_space<vmem>>, vector<1x256x512xbf16>
    %1 = vector.shape_cast %0 : vector<1x256x512xbf16> to vector<256x512xbf16>
    %c0_2 = arith.constant 0 : index
    %c0_3 = arith.constant 0 : index
    %2 = vector.load %arg3[%c0_2, %c0_3] : memref<512x512xbf16, #tpu.memory_space<vmem>>, vector<512x512xbf16>
    %cst = arith.constant dense<0.000000e+00> : vector<256x512xf32>
    %3 = tpu.matmul %1, %2, %cst {dimension_numbers = #tpu.dot_dimension_numbers<[1], [0], [0], [1], [0, 0, 1, 1], [], []>} : vector<256x512xbf16>, vector<512x512xbf16>, vector<256x512xf32> -> vector<256x512xf32>
    %4 = vector.extract_strided_slice %3 {offsets = [0, 0], sizes = [256, 256], strides = [1, 1]} : vector<256x512xf32> to vector<256x256xf32>
    %5 = vector.extract_strided_slice %3 {offsets = [0, 256], sizes = [256, 256], strides = [1, 1]} : vector<256x512xf32> to vector<256x256xf32>
    %6 = arith.mulf %4, %4 : vector<256x256xf32>
    %7 = arith.mulf %5, %5 : vector<256x256xf32>
    %8 = arith.addf %6, %7 : vector<256x256xf32>
    %9 = arith.truncf %8 : vector<256x256xf32> to vector<256x256xbf16>
    %c0_4 = arith.constant 0 : index
    %c0_5 = arith.constant 0 : index
    %10 = vector.load %arg4[%c0_4, %c0_5] : memref<256x128xbf16, #tpu.memory_space<vmem>>, vector<256x128xbf16>
    %cst_6 = arith.constant dense<0.000000e+00> : vector<256x128xf32>
    %11 = tpu.matmul %9, %10, %cst_6 {dimension_numbers = #tpu.dot_dimension_numbers<[1], [0], [0], [1], [0, 0, 1, 1], [], []>} : vector<256x256xbf16>, vector<256x128xbf16>, vector<256x128xf32> -> vector<256x128xf32>
    %12 = arith.truncf %11 : vector<256x128xf32> to vector<256x128xbf16>
    %c0_7 = arith.constant 0 : index
    %c0_8 = arith.constant 0 : index
    %c0_9 = arith.constant 0 : index
    %13 = vector.load %arg5[%c0_7, %c0_8, %c0_9] : memref<1x256x128xbf16, #tpu.memory_space<vmem>>, vector<1x256x128xbf16>
    %14 = vector.shape_cast %13 : vector<1x256x128xbf16> to vector<256x128xbf16>
    %15 = vector.shape_cast %12 : vector<256x128xbf16> to vector<1x256x128xbf16>
    tpu.vector_store %arg5[%c0_7, %c0_8, %c0_9], %15 {strides = array<i32>} : memref<1x256x128xbf16, #tpu.memory_space<vmem>>, vector<1x256x128xbf16>,
    %cst_10 = arith.constant dense<0xFF800000> : vector<128xf32>
    %16 = vector.multi_reduction <maximumf>, %11, %cst_10 [0] : vector<256x128xf32> to vector<128xf32>
    %17 = vector.shape_cast %16 : vector<128xf32> to vector<1x128xf32>
    %c0_11 = arith.constant 0 : index
    %c0_12 = arith.constant 0 : index
    %c0_13 = arith.constant 0 : index
    %c0_14 = arith.constant 0 : index
    %18 = vector.load %arg6[%c0_11, %c0_12, %c0_13, %c0_14] : memref<1x1x1x128xf32, #tpu.memory_space<vmem>>, vector<1x1x1x128xf32>
    %19 = vector.shape_cast %18 : vector<1x1x1x128xf32> to vector<1x128xf32>
    %20 = vector.shape_cast %17 : vector<1x128xf32> to vector<1x1x1x128xf32>
    tpu.vector_store %arg6[%c0_11, %c0_12, %c0_13, %c0_14], %20 {strides = array<i32>} : memref<1x1x1x128xf32, #tpu.memory_space<vmem>>, vector<1x1x1x128xf32>,
    return
  }
  func.func @transform_0(%arg0: i32, %arg1: i32) -> (i32, i32, i32) {
    %c0_i32 = arith.constant 0 : i32
    %c0_i32_0 = arith.constant 0 : i32
    return %arg0, %arg1, %c0_i32 : i32, i32, i32
  }
  func.func @transform_1(%arg0: i32, %arg1: i32) -> (i32, i32) {
    %c0_i32 = arith.constant 0 : i32
    %c0_i32_0 = arith.constant 0 : i32
    %c0_i32_1 = arith.constant 0 : i32
    return %c0_i32, %c0_i32_0 : i32, i32
  }
  func.func @transform_2(%arg0: i32, %arg1: i32) -> (i32, i32) {
    %c0_i32 = arith.constant 0 : i32
    %c0_i32_0 = arith.constant 0 : i32
    %c0_i32_1 = arith.constant 0 : i32
    return %c0_i32, %c0_i32_0 : i32, i32
  }
  func.func @transform_3(%arg0: i32, %arg1: i32) -> (i32, i32, i32) {
    %c0_i32 = arith.constant 0 : i32
    %c0_i32_0 = arith.constant 0 : i32
    return %arg0, %arg1, %c0_i32 : i32, i32, i32
  }
  func.func @transform_4(%arg0: i32, %arg1: i32) -> (i32, i32, i32, i32) {
    %c0_i32 = arith.constant 0 : i32
    %c0_i32_0 = arith.constant 0 : i32
    %c0_i32_1 = arith.constant 0 : i32
    return %arg0, %arg1, %c0_i32, %c0_i32_0 : i32, i32, i32, i32
  }
}

</mosaic_0001>

<llo_original>
// kernel: reverse
$region0: #{reverse}
  %s0 = inlined_call_operand.vmem [shape: bf16[2,256], index: 0, kind: input, shape index: {}]
  %s1 = inlined_call_operand.vmem [shape: bf16[2,256], index: 1, kind: output, shape index: {}]
  %v2 = vlaneseq
  %v3 = vsub.s32 127, %v2
  %4 = vset.pattern.permute.xlu0 %v3
  $region1: #{reverse} parent=0
    #allocation0 [shape = 'u8[4096]{0}', space=vmem, size = 0x1000, scoped, tag = 'operand span for operand 0']
    #allocation1 [shape = 'u8[1024]{0}', space=vmem, size = 0x400, scoped, tag = 'packed  for operand 0']
    #allocation2 [shape = 'u8[4096]{0}', space=vmem, size = 0x1000, scoped, tag = 'operand span for operand 1']
    #allocation3 [shape = 'u8[1024]{0}', space=vmem, size = 0x400, scoped, tag = 'packed  for operand 1']
    loop: start=0, step=1, limit=4
    $region2: #{reverse} parent=1 // loop_pre_header
      _
    $region3: #{reverse} parent=1 // loop_header
      %s6 = sphi 0, %s10
      %p7 = scmp.ge.s32.totalorder %s6, 4
      %s13 = sphi 0, %s25
      %s14 = sphi 0, %s21
      %s15 = sphi 0, %s13
      %s16 = sphi 0, %s14
      %s17 = sphi 0, %s15
      %s18 = sphi 0, %s16
    $region4: #{reverse} parent=1 // loop_header_branch
      %9 = sbr.rel (%p7) target = $region8
    $region5: #{reverse} parent=1 // loop_body
      %s11 = ssub.s32 %s6, 1
      %s12 = ssub.s32 %s6, 2
      %s19 = sadd.s32 1, %s14
      %p20 = scmp.ge.s32.totalorder %s19, 2
      %s21 = scalar_select %p20, 0, %s19
      %s22 = sadd.s32 1, %s13
      %s23 = scalar_select %p20, %s22, %s13
      %p24 = scmp.ge.s32.totalorder %s23, 1
      %s25 = scalar_select %p24, 0, %s23
      %p26 = scmp.le.s32.totalorder 1, %s6
      %p27 = scmp.lt.s32.totalorder %s6, 3
      %p28 = pnand %p26, %p27
      %p29 = pneg %p28
      // Predicated region
      $region9: #{reverse} parent=5 // pred_check
        _
      $region10: #{reverse} parent=5 // pred_check_branch
        %31 = sbr.rel (%p28) target = $region12
      $region11: #{reverse} parent=5 // pred_region
        %s32 = ssub.s32 %s6, 1
      $region12: #{reverse} parent=5 // pred_fallthru
        _
      %p33 = scmp.lt.s32.totalorder %s6, 2
      // Predicated region
      $region13: #{reverse} parent=5 // pred_check
        %p34 = pneg %p33
      $region14: #{reverse} parent=5 // pred_check_branch
        %36 = sbr.rel (%p34) target = $region16
      $region15: #{reverse} parent=5 // pred_region
        %s37 = sand.u32 %s6, 1
        %s38 = sand.u32 %s6, 1
        %s39 = scalar_lea.vmem [#allocation1], %s38
        %s40 = ssub.s32 1, %s14
        %s41 = smul.addr %s13, 2
        %s42 = sadd.s32 %s40, %s41
        %s43 = scalar_lea.vmem %s0, %s42
        // Predicated region
        $region17: #{reverse} parent=15 // pred_check
          _
        $region18: #{reverse} parent=15 // pred_check_branch
          %45 = sbr.rel (0) target = $region20
        $region19: #{reverse} parent=15 // pred_region
          // Predicated region
          $region21: #{reverse} parent=19 // pred_check
            _
          $region22: #{reverse} parent=19 // pred_check_branch
            %47 = sbr.rel target = $region24
          $region23: #{reverse} parent=19 // pred_region
            // Predicated region
            $region36: #{reverse} parent=23 // pred_check
              _
            $region37: #{reverse} parent=23 // pred_check_branch
              %63 = sbr.rel (0) target = $region39
            $region38: #{reverse} parent=23 // pred_region
              %s65 = ssub.s32 2, 1
              loop: start=0, step=1, limit=1
              $region40: #{reverse} parent=38 // loop_pre_header
                _
              $region41: #{reverse} parent=38 // loop_header
                %s67 = sphi 0, %s71
                %p68 = scmp.ge.s32.totalorder %s67, 1
                %s72 = sphi %s43, %s43
                %s73 = sphi %s39, %s39
              $region42: #{reverse} parent=38 // loop_header_branch
                %70 = sbr.rel (%p68) target = $region46
              $region43: #{reverse} parent=38 // loop_body
                %v74 = vld [vmem:[%s72] sm:%s65]
                %75 = vst [vmem:[%s73] sm:%s65] %v74
              $region44: #{reverse} parent=38 // loop_footer
                %s71 = sadd.s32 1, %s67
              $region45: #{reverse} parent=38 // loop_footer_branch
                %66 = sbr.rel target = $region41
              $region46: #{reverse} parent=38 // loop_exit
                _
            $region39: #{reverse} parent=23 // pred_fallthru
              _
          $region24: #{reverse} parent=19 // pred_fallthru
            _
          // Predicated region
          $region25: #{reverse} parent=19 // pred_check
            _
          $region26: #{reverse} parent=19 // pred_check_branch
            %49 = sbr.rel (0) target = $region28
          $region27: #{reverse} parent=19 // pred_region
            %s51 = ssub.s32 2, 1
            loop: start=0, step=1, limit=1
            $region29: #{reverse} parent=27 // loop_pre_header
              _
            $region30: #{reverse} parent=27 // loop_header
              %s53 = sphi 0, %s57
              %p54 = scmp.ge.s32.totalorder %s53, 1
              %s58 = sphi %s43, %s43
              %s59 = sphi %s39, %s39
            $region31: #{reverse} parent=27 // loop_header_branch
              %56 = sbr.rel (%p54) target = $region35
            $region32: #{reverse} parent=27 // loop_body
              %v60 = vld [vmem:[%s58] sm:%s51]
              %61 = vst [vmem:[%s59] sm:%s51] %v60
            $region33: #{reverse} parent=27 // loop_footer
              %s57 = sadd.s32 1, %s53
            $region34: #{reverse} parent=27 // loop_footer_branch
              %52 = sbr.rel target = $region30
            $region35: #{reverse} parent=27 // loop_exit
              _
          $region28: #{reverse} parent=19 // pred_fallthru
            _
        $region20: #{reverse} parent=15 // pred_fallthru
          _
        %76 = vnop
      $region16: #{reverse} parent=5 // pred_fallthru
        _
      %p77 = scmp.le.s32.totalorder 1, %s6
      %p78 = scmp.lt.s32.totalorder %s6, 3
      %p79 = pnand %p77, %p78
      %p80 = pneg %p79
      // Predicated region
      $region47: #{reverse} parent=5 // pred_check
        _
      $region48: #{reverse} parent=5 // pred_check_branch
        %82 = sbr.rel (%p79) target = $region50
      $region49: #{reverse} parent=5 // pred_region
        %s83 = ssub.s32 %s6, 1
        %s84 = sand.u32 %s11, 1
        %s85 = sand.u32 %s11, 1
        %s86 = scalar_lea.vmem [#allocation1], %s85
        %s87 = sand.u32 %s11, 1
        %s88 = sand.u32 %s11, 1
        %s89 = scalar_lea.vmem [#allocation1], %s88
        %s90 = sand.u32 %s11, 1
        %s91 = sand.u32 %s11, 1
        %s92 = scalar_lea.vmem [#allocation3], %s91
        %s94 = ssub.s32 4, 1
        %s95 = sshrl.u32 %s94, 1
        %s96 = sor.u32 %s94, %s95
        %s97 = sand.u32 %s96, 85
        %s98 = sshrl.u32 %s97, 1
        %s99 = sor.u32 %s97, %s98
        %s100 = sand.u32 51, %s99
        %s101 = sshrl.u32 %s100, 2
        %s102 = sor.u32 %s100, %s101
        %s103 = sand.u32 15, %s102
        %v104 = vld [vmem:[%s89] sm:%s103]
        %v105 = vunpack.c.l.bf16 %v104
        %v106 = vunpack.c.h.bf16 %v104
        %107 = vst [vmem:[#allocation0] sm:%s94] %v105
        %s108 = ssub.s32 1, %s16
        %v109 = vld [vmem:[#allocation0] sm:$0xff]
        %110 = vperm.xlu0 %4, %v109
        %v111 = vpop.permute.xlu0 %110
        %112 = vst [vmem:[#allocation2] sm:$0xff] %v111
        %s114 = ssub.s32 4, 1
        %v115 = vld [vmem:[#allocation2] sm:%s114]
        %v116 = vpack.c.bf16 0.0, %v115
        %s118 = ssub.s32 2, 1
        %119 = vst [vmem:[%s92] sm:%s118] %v116
        %s120 = sand.u32 %s11, 1
        %s121 = sand.u32 %s11, 1
        %s122 = scalar_lea.vmem [#allocation3], %s121
        %s123 = smul.addr %s15, 2
        %s124 = sadd.s32 %s16, %s123
        %s125 = scalar_lea.vmem %s1, %s124
        // Predicated region
        $region51: #{reverse} parent=49 // pred_check
          _
        $region52: #{reverse} parent=49 // pred_check_branch
          %127 = sbr.rel (0) target = $region54
        $region53: #{reverse} parent=49 // pred_region
          // Predicated region
          $region55: #{reverse} parent=53 // pred_check
            _
          $region56: #{reverse} parent=53 // pred_check_branch
            %129 = sbr.rel target = $region58
          $region57: #{reverse} parent=53 // pred_region
            // Predicated region
            $region70: #{reverse} parent=57 // pred_check
              _
            $region71: #{reverse} parent=57 // pred_check_branch
              %145 = sbr.rel (0) target = $region73
            $region72: #{reverse} parent=57 // pred_region
              %s147 = ssub.s32 2, 1
              loop: start=0, step=1, limit=1
              $region74: #{reverse} parent=72 // loop_pre_header
                _
              $region75: #{reverse} parent=72 // loop_header
                %s149 = sphi 0, %s153
                %p150 = scmp.ge.s32.totalorder %s149, 1
                %s154 = sphi %s122, %s122
                %s155 = sphi %s125, %s125
              $region76: #{reverse} parent=72 // loop_header_branch
                %152 = sbr.rel (%p150) target = $region80
              $region77: #{reverse} parent=72 // loop_body
                %v156 = vld [vmem:[%s154] sm:%s147]
                %157 = vst [vmem:[%s155] sm:%s147] %v156
              $region78: #{reverse} parent=72 // loop_footer
                %s153 = sadd.s32 1, %s149
              $region79: #{reverse} parent=72 // loop_footer_branch
                %148 = sbr.rel target = $region75
              $region80: #{reverse} parent=72 // loop_exit
                _
            $region73: #{reverse} parent=57 // pred_fallthru
              _
          $region58: #{reverse} parent=53 // pred_fallthru
            _
          // Predicated region
          $region59: #{reverse} parent=53 // pred_check
            _
          $region60: #{reverse} parent=53 // pred_check_branch
            %131 = sbr.rel (0) target = $region62
          $region61: #{reverse} parent=53 // pred_region
            %s133 = ssub.s32 2, 1
            loop: start=0, step=1, limit=1
            $region63: #{reverse} parent=61 // loop_pre_header
              _
            $region64: #{reverse} parent=61 // loop_header
              %s135 = sphi 0, %s139
              %p136 = scmp.ge.s32.totalorder %s135, 1
              %s140 = sphi %s122, %s122
              %s141 = sphi %s125, %s125
            $region65: #{reverse} parent=61 // loop_header_branch
              %138 = sbr.rel (%p136) target = $region69
            $region66: #{reverse} parent=61 // loop_body
              %v142 = vld [vmem:[%s140] sm:%s133]
              %143 = vst [vmem:[%s141] sm:%s133] %v142
            $region67: #{reverse} parent=61 // loop_footer
              %s139 = sadd.s32 1, %s135
            $region68: #{reverse} parent=61 // loop_footer_branch
              %134 = sbr.rel target = $region64
            $region69: #{reverse} parent=61 // loop_exit
              _
          $region62: #{reverse} parent=53 // pred_fallthru
            _
        $region54: #{reverse} parent=49 // pred_fallthru
          _
        %158 = vnop
      $region50: #{reverse} parent=5 // pred_fallthru
        _
      %p159 = scmp.le.s32.totalorder 2, %s6
      // Predicated region
      $region81: #{reverse} parent=5 // pred_check
        %p160 = pneg %p159
      $region82: #{reverse} parent=5 // pred_check_branch
        %162 = sbr.rel (%p160) target = $region84
      $region83: #{reverse} parent=5 // pred_region
        %s163 = ssub.s32 %s6, 2
        %s164 = sand.u32 %s12, 1
        %s165 = sand.u32 %s12, 1
        %s166 = scalar_lea.vmem [#allocation3], %s165
      $region84: #{reverse} parent=5 // pred_fallthru
        _
    $region6: #{reverse} parent=1 // loop_footer
      %s10 = sadd.s32 1, %s6
    $region7: #{reverse} parent=1 // loop_footer_branch
      %5 = sbr.rel target = $region3
    $region8: #{reverse} parent=1 // loop_exit
      _

// kernel: gamma_forward.1
$region0: #{gamma_forward.1}
  #allocation0 [shape = 'u32[]', space=smem, size = 0x4, offset = 0x4, fixed_abs, tag = 'smem constant byte address 0x4 - core index']
  #allocation1 [shape = 'u32[72,128]{1,0:T(1,128)}', space=vmem, size = 0x9000, scoped, tag = 'internal scratch']
  %s0 = inlined_call_operand.vmem [shape: bf16[2,256,512], index: 0, kind: input, shape index: {}]
  %s1 = inlined_call_operand.vmem [shape: bf16[512,512], index: 1, kind: input, shape index: {}]
  %s2 = inlined_call_operand.vmem [shape: bf16[256,128], index: 2, kind: input, shape index: {}]
  %s3 = inlined_call_operand.vmem [shape: bf16[2,256,128], index: 3, kind: output, shape index: {0}]
  %s4 = inlined_call_operand.vmem [shape: f32[2,1,1,128], index: 4, kind: output, shape index: {1}]
  %5 = xla_tuple %s3, %s4
  %s6 = sld [smem:[#allocation0]]
  $region53: #{gamma_forward.1} parent=0
    _
  %s8 = ssub.s32 1, %s6
  %s9 = scalar_select 0, %s8, %s6
  loop: start=0, step=1, limit=4
  $region2: #{gamma_forward.1} parent=0 // loop_pre_header
    _
  $region3: #{gamma_forward.1} parent=0 // loop_header
    %s11 = sphi 0, %s15
    %p12 = scmp.ge.s32.totalorder %s11, 4
    %s18 = sphi 0, %s30
    %s19 = sphi 0, %s26
    %s20 = sphi 0, %s18
    %s21 = sphi 0, %s19
    %s22 = sphi 0, %s20
    %s23 = sphi 0, %s21
    %s35 = sphi 0, %s37
    %s38 = sphi 0, %s35
    %s39 = sphi 0, %s38
    %s55 = sphi 0, %s39
    %s59 = sphi 0, %s59
    %s61 = sphi 0, %s59
    %s62 = sphi 0, %s61
    %s76 = sphi 0, %s62
    %s80 = sphi 0, %s80
    %s82 = sphi 0, %s80
    %s83 = sphi 0, %s82
    %s97 = sphi 0, %s83
    %s105 = sphi 0, %s107
    %s108 = sphi 0, %s105
    %s109 = sphi 0, %s108
    %s125 = sphi 0, %s109
    %s133 = sphi 0, %s135
    %s136 = sphi 0, %s133
    %s137 = sphi 0, %s136
    %s153 = sphi 0, %s137
  $region4: #{gamma_forward.1} parent=0 // loop_header_branch
    %14 = sbr.rel (%p12) target = $region8
  $region5: #{gamma_forward.1} parent=0 // loop_body
    %s16 = ssub.s32 %s11, 1
    %s17 = ssub.s32 %s11, 2
    %s24 = sadd.s32 1, %s19
    %p25 = scmp.ge.s32.totalorder %s24, 1
    %s26 = scalar_select %p25, 0, %s24
    %s27 = sadd.s32 1, %s18
    %s28 = scalar_select %p25, %s27, %s18
    %p29 = scmp.ge.s32.totalorder %s28, 2
    %s30 = scalar_select %p29, 0, %s28
    %s31 = ssub.s32 %s18, %s30
    %s32 = ssub.s32 %s19, %s26
    %s33 = sor.u32 %s31, %s32
    %p34 = scmp.eq.s32.totalorder %s33, 0
    %s36 = sadd.s32 %s35, 1
    %s37 = scalar_select %p34, %s35, %s36
    %p40 = pneg %p34
    %p41 = scmp.eq.s32.totalorder %s11, 1
    %p42 = por %p40, %p41
    %p43 = scmp.ne.s32.totalorder %s35, %s38
    %p44 = scmp.eq.s32.totalorder %s11, 0
    %p45 = por %p43, %p44
    %p46 = scmp.ne.s32.totalorder %s35, %s38
    %p47 = scmp.eq.s32.totalorder %s16, 1
    %p48 = por %p46, %p47
    %p49 = scmp.ne.s32.totalorder %s38, %s39
    %p50 = scmp.eq.s32.totalorder %s16, 0
    %p51 = por %p49, %p50
    %p52 = scmp.ne.s32.totalorder %s38, %s39
    %p53 = scmp.eq.s32.totalorder %s17, 1
    %p54 = por %p52, %p53
    %p56 = scmp.ne.s32.totalorder %s39, %s55
    %p57 = scmp.eq.s32.totalorder %s17, 0
    %p58 = por %p56, %p57
    %s60 = sadd.s32 %s59, 1
    %p63 = scmp.eq.s32.totalorder %s11, 1
    %p64 = scmp.ne.s32.totalorder %s59, %s61
    %p65 = scmp.eq.s32.totalorder %s11, 0
    %p66 = por %p64, %p65
    %p67 = scmp.ne.s32.totalorder %s59, %s61
    %p68 = scmp.eq.s32.totalorder %s16, 1
    %p69 = por %p67, %p68
    %p70 = scmp.ne.s32.totalorder %s61, %s62
    %p71 = scmp.eq.s32.totalorder %s16, 0
    %p72 = por %p70, %p71
    %p73 = scmp.ne.s32.totalorder %s61, %s62
    %p74 = scmp.eq.s32.totalorder %s17, 1
    %p75 = por %p73, %p74
    %p77 = scmp.ne.s32.totalorder %s62, %s76
    %p78 = scmp.eq.s32.totalorder %s17, 0
    %p79 = por %p77, %p78
    %s81 = sadd.s32 %s80, 1
    %p84 = scmp.eq.s32.totalorder %s11, 1
    %p85 = scmp.ne.s32.totalorder %s80, %s82
    %p86 = scmp.eq.s32.totalorder %s11, 0
    %p87 = por %p85, %p86
    %p88 = scmp.ne.s32.totalorder %s80, %s82
    %p89 = scmp.eq.s32.totalorder %s16, 1
    %p90 = por %p88, %p89
    %p91 = scmp.ne.s32.totalorder %s82, %s83
    %p92 = scmp.eq.s32.totalorder %s16, 0
    %p93 = por %p91, %p92
    %p94 = scmp.ne.s32.totalorder %s82, %s83
    %p95 = scmp.eq.s32.totalorder %s17, 1
    %p96 = por %p94, %p95
    %p98 = scmp.ne.s32.totalorder %s83, %s97
    %p99 = scmp.eq.s32.totalorder %s17, 0
    %p100 = por %p98, %p99
    %s101 = ssub.s32 %s18, %s30
    %s102 = ssub.s32 %s19, %s26
    %s103 = sor.u32 %s101, %s102
    %p104 = scmp.eq.s32.totalorder %s103, 0
    %s106 = sadd.s32 %s105, 1
    %s107 = scalar_select %p104, %s105, %s106
    %p110 = pneg %p104
    %p111 = scmp.eq.s32.totalorder %s11, 1
    %p112 = por %p110, %p111
    %p113 = scmp.ne.s32.totalorder %s105, %s108
    %p114 = scmp.eq.s32.totalorder %s11, 0
    %p115 = por %p113, %p114
    %p116 = scmp.ne.s32.totalorder %s105, %s108
    %p117 = scmp.eq.s32.totalorder %s16, 1
    %p118 = por %p116, %p117
    %p119 = scmp.ne.s32.totalorder %s108, %s109
    %p120 = scmp.eq.s32.totalorder %s16, 0
    %p121 = por %p119, %p120
    %p122 = scmp.ne.s32.totalorder %s108, %s109
    %p123 = scmp.eq.s32.totalorder %s17, 1
    %p124 = por %p122, %p123
    %p126 = scmp.ne.s32.totalorder %s109, %s125
    %p127 = scmp.eq.s32.totalorder %s17, 0
    %p128 = por %p126, %p127
    %s129 = ssub.s32 %s18, %s30
    %s130 = ssub.s32 %s19, %s26
    %s131 = sor.u32 %s129, %s130
    %p132 = scmp.eq.s32.totalorder %s131, 0
    %s134 = sadd.s32 %s133, 1
    %s135 = scalar_select %p132, %s133, %s134
    %p138 = pneg %p132
    %p139 = scmp.eq.s32.totalorder %s11, 1
    %p140 = por %p138, %p139
    %p141 = scmp.ne.s32.totalorder %s133, %s136
    %p142 = scmp.eq.s32.totalorder %s11, 0
    %p143 = por %p141, %p142
    %p144 = scmp.ne.s32.totalorder %s133, %s136
    %p145 = scmp.eq.s32.totalorder %s16, 1
    %p146 = por %p144, %p145
    %p147 = scmp.ne.s32.totalorder %s136, %s137
    %p148 = scmp.eq.s32.totalorder %s16, 0
    %p149 = por %p147, %p148
    %p150 = scmp.ne.s32.totalorder %s136, %s137
    %p151 = scmp.eq.s32.totalorder %s17, 1
    %p152 = por %p150, %p151
    %p154 = scmp.ne.s32.totalorder %s137, %s153
    %p155 = scmp.eq.s32.totalorder %s17, 0
    %p156 = por %p154, %p155
    %p157 = scmp.le.s32.totalorder 1, %s11
    %p158 = scmp.lt.s32.totalorder %s11, 3
    %p159 = pnand %p157, %p158
    %p160 = pneg %p159
    // Predicated region
    $region9: #{gamma_forward.1} parent=5 // pred_check
      _
    $region10: #{gamma_forward.1} parent=5 // pred_check_branch
      %162 = sbr.rel (%p159) target = $region12
    $region11: #{gamma_forward.1} parent=5 // pred_region
      %s163 = ssub.s32 %s11, 1
      // Predicated region
      $region13: #{gamma_forward.1} parent=11 // pred_check
        %p164 = pneg %p72
      $region14: #{gamma_forward.1} parent=11 // pred_check_branch
        %166 = sbr.rel (%p164) target = $region16
      $region15: #{gamma_forward.1} parent=11 // pred_region
        _
      $region16: #{gamma_forward.1} parent=11 // pred_fallthru
        _
      // Predicated region
      $region17: #{gamma_forward.1} parent=11 // pred_check
        %p167 = pneg %p93
      $region18: #{gamma_forward.1} parent=11 // pred_check_branch
        %169 = sbr.rel (%p167) target = $region20
      $region19: #{gamma_forward.1} parent=11 // pred_region
        _
      $region20: #{gamma_forward.1} parent=11 // pred_fallthru
        _
    $region12: #{gamma_forward.1} parent=5 // pred_fallthru
      _
    %p170 = scmp.lt.s32.totalorder %s11, 2
    // Predicated region
    $region21: #{gamma_forward.1} parent=5 // pred_check
      %p171 = pneg %p170
    $region22: #{gamma_forward.1} parent=5 // pred_check_branch
      %173 = sbr.rel (%p171) target = $region24
    $region23: #{gamma_forward.1} parent=5 // pred_region
      // Predicated region
      $region25: #{gamma_forward.1} parent=23 // pred_check
        %p174 = pneg %p45
      $region26: #{gamma_forward.1} parent=23 // pred_check_branch
        %176 = sbr.rel (%p174) target = $region28
      $region27: #{gamma_forward.1} parent=23 // pred_region
        %s177 = smul.u32 32, %s19
        %p178 = scmp.lt.s32.totalorder %s18, 1
        %s179 = scalar_select %p178, %s18, 1
        %p180 = scmp.lt.s32.totalorder %s177, 31
        %s181 = scalar_select %p180, %s177, 31
        %s182 = smul.addr %s181, 4
        %s183 = smul.addr %s179, 128
        %s184 = sadd.s32 %s182, %s183
        %s185 = smul.addr %s184, 4
        %s186 = scalar_lea.vmem %s0, %s185
        %s187 = smul.u32 32, %s19
      $region28: #{gamma_forward.1} parent=23 // pred_fallthru
        _
    $region24: #{gamma_forward.1} parent=5 // pred_fallthru
      _
    %p188 = scmp.le.s32.totalorder 1, %s11
    %p189 = scmp.lt.s32.totalorder %s11, 3
    %p190 = pnand %p188, %p189
    %p191 = pneg %p190
    // Predicated region
    $region29: #{gamma_forward.1} parent=5 // pred_check
      _
    $region30: #{gamma_forward.1} parent=5 // pred_check_branch
      %193 = sbr.rel (%p190) target = $region32
    $region31: #{gamma_forward.1} parent=5 // pred_region
      %s194 = ssub.s32 %s11, 1
      %s195 = smul.u32 32, %s21
      %p196 = scmp.lt.s32.totalorder %s20, 1
      %s197 = scalar_select %p196, %s20, 1
      %p198 = scmp.lt.s32.totalorder %s195, 31
      %s199 = scalar_select %p198, %s195, 31
      %s200 = smul.addr %s199, 4
      %s201 = smul.addr %s197, 128
      %s202 = sadd.s32 %s200, %s201
      %s203 = smul.addr %s202, 4
      %s204 = scalar_lea.vmem %s0, %s203
      %p205 = pneg %p51
      %p206 = pneg %p48
      %p207 = pneg %p72
      %p208 = pneg %p69
      %p209 = pneg %p93
      %p210 = pneg %p90
      %p211 = pneg %p121
      %p212 = pneg %p118
      %s213 = smul.u32 32, %s21
      %p214 = scmp.lt.s32.totalorder %s20, 1
      %s215 = scalar_select %p214, %s20, 1
      %p216 = scmp.lt.s32.totalorder %s213, 31
      %s217 = scalar_select %p216, %s213, 31
      %s218 = smul.addr %s215, 32
      %s219 = sadd.s32 %s217, %s218
      %s220 = smul.addr %s219, 4
      %s221 = scalar_lea.vmem %s3, %s220
      %p222 = pneg %p149
      %p223 = pneg %p146
      %p224 = scmp.lt.s32.totalorder %s20, 1
      %s225 = scalar_select %p224, %s20, 1
      %p226 = scmp.lt.s32.totalorder %s21, 0
      %s227 = scalar_select %p226, %s21, 0
      %s228 = sadd.s32 %s227, %s225
      %s229 = scalar_lea.vmem %s4, %s228
      %s230 = smul.u32 32, %s21
      %p231 = scmp.lt.s32.totalorder %s20, 1
      %s232 = scalar_select %p231, %s20, 1
      %p233 = scmp.lt.s32.totalorder %s230, 31
      %s234 = scalar_select %p233, %s230, 31
      %s235 = smul.addr %s234, 4
      %s236 = smul.addr %s232, 128
      %s237 = sadd.s32 %s235, %s236
      %s238 = smul.addr %s237, 4
      %s239 = scalar_lea.vmem %s0, %s238
      %s240 = smul.u32 32, %s21
      %s241 = smul.u32 32, %s21
      %p242 = scmp.lt.s32.totalorder %s20, 1
      %s243 = scalar_select %p242, %s20, 1
      %p244 = scmp.lt.s32.totalorder %s241, 31
      %s245 = scalar_select %p244, %s241, 31
      %s246 = smul.addr %s243, 32
      %s247 = sadd.s32 %s245, %s246
      %s248 = smul.addr %s247, 4
      %s249 = scalar_lea.vmem %s3, %s248
      %s250 = smul.u32 32, %s21
      %p251 = scmp.lt.s32.totalorder %s20, 1
      %s252 = scalar_select %p251, %s20, 1
      %p253 = scmp.lt.s32.totalorder %s21, 0
      %s254 = scalar_select %p253, %s21, 0
      %s255 = sadd.s32 %s254, %s252
      %s256 = scalar_lea.vmem %s4, %s255
      %v257 = vld [vmem:[%s239] sm:$0xff]
      %v258 = vld [vmem:[%s239 + $0x8] sm:$0xff]
      %v259 = vld [vmem:[%s239 + $0x10] sm:$0xff]
      %v260 = vld [vmem:[%s239 + $0x18] sm:$0xff]
      %v261 = vld [vmem:[%s239 + $0x20] sm:$0xff]
      %v262 = vld [vmem:[%s239 + $0x28] sm:$0xff]
      %v263 = vld [vmem:[%s239 + $0x30] sm:$0xff]
      %v264 = vld [vmem:[%s239 + $0x38] sm:$0xff]
      %v265 = vld [vmem:[%s239 + $0x40] sm:$0xff]
      %v266 = vld [vmem:[%s239 + $0x48] sm:$0xff]
      %v267 = vld [vmem:[%s239 + $0x50] sm:$0xff]
      %v268 = vld [vmem:[%s239 + $0x58] sm:$0xff]
      %v269 = vld [vmem:[%s239 + $0x60] sm:$0xff]
      %v270 = vld [vmem:[%s239 + $0x68] sm:$0xff]
      %v271 = vld [vmem:[%s239 + $0x70] sm:$0xff]
      %v272 = vld [vmem:[%s239 + $0x78] sm:$0xff]
      %v273 = vld [vmem:[%s239 + $0x80] sm:$0xff]
      %v274 = vld [vmem:[%s239 + $0x88] sm:$0xff]
      %v275 = vld [vmem:[%s239 + $0x90] sm:$0xff]
      %v276 = vld [vmem:[%s239 + $0x98] sm:$0xff]
      %v277 = vld [vmem:[%s239 + $0xa0] sm:$0xff]
      %v278 = vld [vmem:[%s239 + $0xa8] sm:$0xff]
      %v279 = vld [vmem:[%s239 + $0xb0] sm:$0xff]
      %v280 = vld [vmem:[%s239 + $0xb8] sm:$0xff]
      %v281 = vld [vmem:[%s239 + $0xc0] sm:$0xff]
      %v282 = vld [vmem:[%s239 + $0xc8] sm:$0xff]
      %v283 = vld [vmem:[%s239 + $0xd0] sm:$0xff]
      %v284 = vld [vmem:[%s239 + $0xd8] sm:$0xff]
      %v285 = vld [vmem:[%s239 + $0xe0] sm:$0xff]
      %v286 = vld [vmem:[%s239 + $0xe8] sm:$0xff]
      %v287 = vld [vmem:[%s239 + $0xf0] sm:$0xff]
      %v288 = vld [vmem:[%s239 + $0xf8] sm:$0xff]
      %v289 = vld [vmem:[%s239 + $0x100] sm:$0xff]
      %v290 = vld [vmem:[%s239 + $0x108] sm:$0xff]
      %v291 = vld [vmem:[%s239 + $0x110] sm:$0xff]
      %v292 = vld [vmem:[%s239 + $0x118] sm:$0xff]
      %v293 = vld [vmem:[%s239 + $0x120] sm:$0xff]
      %v294 = vld [vmem:[%s239 + $0x128] sm:$0xff]
      %v295 = vld [vmem:[%s239 + $0x130] sm:$0xff]
      %v296 = vld [vmem:[%s239 + $0x138] sm:$0xff]
      %v297 = vld [vmem:[%s239 + $0x140] sm:$0xff]
      %v298 = vld [vmem:[%s239 + $0x148] sm:$0xff]
      %v299 = vld [vmem:[%s239 + $0x150] sm:$0xff]
      %v300 = vld [vmem:[%s239 + $0x158] sm:$0xff]
      %v301 = vld [vmem:[%s239 + $0x160] sm:$0xff]
      %v302 = vld [vmem:[%s239 + $0x168] sm:$0xff]
      %v303 = vld [vmem:[%s239 + $0x170] sm:$0xff]
      %v304 = vld [vmem:[%s239 + $0x178] sm:$0xff]
      %v305 = vld [vmem:[%s239 + $0x180] sm:$0xff]
      %v306 = vld [vmem:[%s239 + $0x188] sm:$0xff]
      %v307 = vld [vmem:[%s239 + $0x190] sm:$0xff]
      %v308 = vld [vmem:[%s239 + $0x198] sm:$0xff]
      %v309 = vld [vmem:[%s239 + $0x1a0] sm:$0xff]
      %v310 = vld [vmem:[%s239 + $0x1a8] sm:$0xff]
      %v311 = vld [vmem:[%s239 + $0x1b0] sm:$0xff]
      %v312 = vld [vmem:[%s239 + $0x1b8] sm:$0xff]
      %v313 = vld [vmem:[%s239 + $0x1c0] sm:$0xff]
      %v314 = vld [vmem:[%s239 + $0x1c8] sm:$0xff]
      %v315 = vld [vmem:[%s239 + $0x1d0] sm:$0xff]
      %v316 = vld [vmem:[%s239 + $0x1d8] sm:$0xff]
      %v317 = vld [vmem:[%s239 + $0x1e0] sm:$0xff]
      %v318 = vld [vmem:[%s239 + $0x1e8] sm:$0xff]
      %v319 = vld [vmem:[%s239 + $0x1f0] sm:$0xff]
      %v320 = vld [vmem:[%s239 + $0x1f8] sm:$0xff]
      %v321 = vld [vmem:[%s1] sm:$0xff]
      %v322 = vld [vmem:[%s1 + $0x8] sm:$0xff]
      %v323 = vld [vmem:[%s1 + $0x10] sm:$0xff]
      %v324 = vld [vmem:[%s1 + $0x18] sm:$0xff]
      %v325 = vld [vmem:[%s1 + $0x20] sm:$0xff]
      %v326 = vld [vmem:[%s1 + $0x28] sm:$0xff]
      %v327 = vld [vmem:[%s1 + $0x30] sm:$0xff]
      %v328 = vld [vmem:[%s1 + $0x38] sm:$0xff]
      %v329 = vld [vmem:[%s1 + $0x40] sm:$0xff]
      %v330 = vld [vmem:[%s1 + $0x48] sm:$0xff]
      %v331 = vld [vmem:[%s1 + $0x50] sm:$0xff]
      %v332 = vld [vmem:[%s1 + $0x58] sm:$0xff]
      %v333 = vld [vmem:[%s1 + $0x60] sm:$0xff]
      %v334 = vld [vmem:[%s1 + $0x68] sm:$0xff]
      %v335 = vld [vmem:[%s1 + $0x70] sm:$0xff]
      %v336 = vld [vmem:[%s1 + $0x78] sm:$0xff]
      %v337 = vld [vmem:[%s1 + $0x80] sm:$0xff]
      %v338 = vld [vmem:[%s1 + $0x88] sm:$0xff]
      %v339 = vld [vmem:[%s1 + $0x90] sm:$0xff]
      %v340 = vld [vmem:[%s1 + $0x98] sm:$0xff]
      %v341 = vld [vmem:[%s1 + $0xa0] sm:$0xff]
      %v342 = vld [vmem:[%s1 + $0xa8] sm:$0xff]
      %v343 = vld [vmem:[%s1 + $0xb0] sm:$0xff]
      %v344 = vld [vmem:[%s1 + $0xb8] sm:$0xff]
      %v345 = vld [vmem:[%s1 + $0xc0] sm:$0xff]
      %v346 = vld [vmem:[%s1 + $0xc8] sm:$0xff]
      %v347 = vld [vmem:[%s1 + $0xd0] sm:$0xff]
      %v348 = vld [vmem:[%s1 + $0xd8] sm:$0xff]
      %v349 = vld [vmem:[%s1 + $0xe0] sm:$0xff]
      %v350 = vld [vmem:[%s1 + $0xe8] sm:$0xff]
      %v351 = vld [vmem:[%s1 + $0xf0] sm:$0xff]
      %v352 = vld [vmem:[%s1 + $0xf8] sm:$0xff]
      %v353 = vld [vmem:[%s1 + $0x100] sm:$0xff]
      %v354 = vld [vmem:[%s1 + $0x108] sm:$0xff]
      %v355 = vld [vmem:[%s1 + $0x110] sm:$0xff]
      %v356 = vld [vmem:[%s1 + $0x118] sm:$0xff]
      %v357 = vld [vmem:[%s1 + $0x120] sm:$0xff]
      %v358 = vld [vmem:[%s1 + $0x128] sm:$0xff]
      %v359 = vld [vmem:[%s1 + $0x130] sm:$0xff]
      %v360 = vld [vmem:[%s1 + $0x138] sm:$0xff]
      %v361 = vld [vmem:[%s1 + $0x140] sm:$0xff]
      %v362 = vld [vmem:[%s1 + $0x148] sm:$0xff]
      %v363 = vld [vmem:[%s1 + $0x150] sm:$0xff]
      %v364 = vld [vmem:[%s1 + $0x158] sm:$0xff]
      %v365 = vld [vmem:[%s1 + $0x160] sm:$0xff]
      %v366 = vld [vmem:[%s1 + $0x168] sm:$0xff]
      %v367 = vld [vmem:[%s1 + $0x170] sm:$0xff]
      %v368 = vld [vmem:[%s1 + $0x178] sm:$0xff]
      %v369 = vld [vmem:[%s1 + $0x180] sm:$0xff]
      %v370 = vld [vmem:[%s1 + $0x188] sm:$0xff]
      %v371 = vld [vmem:[%s1 + $0x190] sm:$0xff]
      %v372 = vld [vmem:[%s1 + $0x198] sm:$0xff]
      %v373 = vld [vmem:[%s1 + $0x1a0] sm:$0xff]
      %v374 = vld [vmem:[%s1 + $0x1a8] sm:$0xff]
      %v375 = vld [vmem:[%s1 + $0x1b0] sm:$0xff]
      %v376 = vld [vmem:[%s1 + $0x1b8] sm:$0xff]
      %v377 = vld [vmem:[%s1 + $0x1c0] sm:$0xff]
      %v378 = vld [vmem:[%s1 + $0x1c8] sm:$0xff]
      %v379 = vld [vmem:[%s1 + $0x1d0] sm:$0xff]
      %v380 = vld [vmem:[%s1 + $0x1d8] sm:$0xff]
      %v381 = vld [vmem:[%s1 + $0x1e0] sm:$0xff]
      %v382 = vld [vmem:[%s1 + $0x1e8] sm:$0xff]
      %v383 = vld [vmem:[%s1 + $0x1f0] sm:$0xff]
      %v384 = vld [vmem:[%s1 + $0x1f8] sm:$0xff]
      %v385 = vld [vmem:[%s1 + $0x200] sm:$0xff]
      %v386 = vld [vmem:[%s1 + $0x208] sm:$0xff]
      %v387 = vld [vmem:[%s1 + $0x210] sm:$0xff]
      %v388 = vld [vmem:[%s1 + $0x218] sm:$0xff]
      %v389 = vld [vmem:[%s1 + $0x220] sm:$0xff]
      %v390 = vld [vmem:[%s1 + $0x228] sm:$0xff]
      %v391 = vld [vmem:[%s1 + $0x230] sm:$0xff]
      %v392 = vld [vmem:[%s1 + $0x238] sm:$0xff]
      %v393 = vld [vmem:[%s1 + $0x240] sm:$0xff]
      %v394 = vld [vmem:[%s1 + $0x248] sm:$0xff]
      %v395 = vld [vmem:[%s1 + $0x250] sm:$0xff]
      %v396 = vld [vmem:[%s1 + $0x258] sm:$0xff]
      %v397 = vld [vmem:[%s1 + $0x260] sm:$0xff]
      %v398 = vld [vmem:[%s1 + $0x268] sm:$0xff]
      %v399 = vld [vmem:[%s1 + $0x270] sm:$0xff]
      %v400 = vld [vmem:[%s1 + $0x278] sm:$0xff]
      %v401 = vld [vmem:[%s1 + $0x280] sm:$0xff]
      %v402 = vld [vmem:[%s1 + $0x288] sm:$0xff]
      %v403 = vld [vmem:[%s1 + $0x290] sm:$0xff]
      %v404 = vld [vmem:[%s1 + $0x298] sm:$0xff]
      %v405 = vld [vmem:[%s1 + $0x2a0] sm:$0xff]
      %v406 = vld [vmem:[%s1 + $0x2a8] sm:$0xff]
      %v407 = vld [vmem:[%s1 + $0x2b0] sm:$0xff]
      %v408 = vld [vmem:[%s1 + $0x2b8] sm:$0xff]
      %v409 = vld [vmem:[%s1 + $0x2c0] sm:$0xff]
      %v410 = vld [vmem:[%s1 + $0x2c8] sm:$0xff]
      %v411 = vld [vmem:[%s1 + $0x2d0] sm:$0xff]
      %v412 = vld [vmem:[%s1 + $0x2d8] sm:$0xff]
      %v413 = vld [vmem:[%s1 + $0x2e0] sm:$0xff]
      %v414 = vld [vmem:[%s1 + $0x2e8] sm:$0xff]
      %v415 = vld [vmem:[%s1 + $0x2f0] sm:$0xff]
      %v416 = vld [vmem:[%s1 + $0x2f8] sm:$0xff]
      %v417 = vld [vmem:[%s1 + $0x300] sm:$0xff]
      %v418 = vld [vmem:[%s1 + $0x308] sm:$0xff]
      %v419 = vld [vmem:[%s1 + $0x310] sm:$0xff]
      %v420 = vld [vmem:[%s1 + $0x318] sm:$0xff]
      %v421 = vld [vmem:[%s1 + $0x320] sm:$0xff]
      %v422 = vld [vmem:[%s1 + $0x328] sm:$0xff]
      %v423 = vld [vmem:[%s1 + $0x330] sm:$0xff]
      %v424 = vld [vmem:[%s1 + $0x338] sm:$0xff]
      %v425 = vld [vmem:[%s1 + $0x340] sm:$0xff]
      %v426 = vld [vmem:[%s1 + $0x348] sm:$0xff]
      %v427 = vld [vmem:[%s1 + $0x350] sm:$0xff]
      %v428 = vld [vmem:[%s1 + $0x358] sm:$0xff]
      %v429 = vld [vmem:[%s1 + $0x360] sm:$0xff]
      %v430 = vld [vmem:[%s1 + $0x368] sm:$0xff]
      %v431 = vld [vmem:[%s1 + $0x370] sm:$0xff]
      %v432 = vld [vmem:[%s1 + $0x378] sm:$0xff]
      %v433 = vld [vmem:[%s1 + $0x380] sm:$0xff]
      %v434 = vld [vmem:[%s1 + $0x388] sm:$0xff]
      %v435 = vld [vmem:[%s1 + $0x390] sm:$0xff]
      %v436 = vld [vmem:[%s1 + $0x398] sm:$0xff]
      %v437 = vld [vmem:[%s1 + $0x3a0] sm:$0xff]
      %v438 = vld [vmem:[%s1 + $0x3a8] sm:$0xff]
      %v439 = vld [vmem:[%s1 + $0x3b0] sm:$0xff]
      %v440 = vld [vmem:[%s1 + $0x3b8] sm:$0xff]
      %v441 = vld [vmem:[%s1 + $0x3c0] sm:$0xff]
      %v442 = vld [vmem:[%s1 + $0x3c8] sm:$0xff]
      %v443 = vld [vmem:[%s1 + $0x3d0] sm:$0xff]
      %v444 = vld [vmem:[%s1 + $0x3d8] sm:$0xff]
      %v445 = vld [vmem:[%s1 + $0x3e0] sm:$0xff]
      %v446 = vld [vmem:[%s1 + $0x3e8] sm:$0xff]
      %v447 = vld [vmem:[%s1 + $0x3f0] sm:$0xff]
      %v448 = vld [vmem:[%s1 + $0x3f8] sm:$0xff]
      %v513 = vunpack.c.l.b16 %v257
      %v514 = vunpack.c.h.b16 %v257
      %v515 = vunpack.c.l.b16 %v258
      %v516 = vunpack.c.h.b16 %v258
      %v517 = vunpack.c.l.b16 %v259
      %v518 = vunpack.c.h.b16 %v259
      %v519 = vunpack.c.l.b16 %v260
      %v520 = vunpack.c.h.b16 %v260
      %v521 = vunpack.c.l.b16 %v261
      %v522 = vunpack.c.h.b16 %v261
      %v523 = vunpack.c.l.b16 %v262
      %v524 = vunpack.c.h.b16 %v262
      %v525 = vunpack.c.l.b16 %v263
      %v526 = vunpack.c.h.b16 %v263
      %v527 = vunpack.c.l.b16 %v264
      %v528 = vunpack.c.h.b16 %v264
      %v529 = vunpack.c.l.b16 %v265
      %v530 = vunpack.c.h.b16 %v265
      %v531 = vunpack.c.l.b16 %v266
      %v532 = vunpack.c.h.b16 %v266
      %v533 = vunpack.c.l.b16 %v267
      %v534 = vunpack.c.h.b16 %v267
      %v535 = vunpack.c.l.b16 %v268
      %v536 = vunpack.c.h.b16 %v268
      %v537 = vunpack.c.l.b16 %v269
      %v538 = vunpack.c.h.b16 %v269
      %v539 = vunpack.c.l.b16 %v270
      %v540 = vunpack.c.h.b16 %v270
      %v541 = vunpack.c.l.b16 %v271
      %v542 = vunpack.c.h.b16 %v271
      %v543 = vunpack.c.l.b16 %v272
      %v544 = vunpack.c.h.b16 %v272
      %v545 = vunpack.c.l.b16 %v273
      %v546 = vunpack.c.h.b16 %v273
      %v547 = vunpack.c.l.b16 %v274
      %v548 = vunpack.c.h.b16 %v274
      %v549 = vunpack.c.l.b16 %v275
      %v550 = vunpack.c.h.b16 %v275
      %v551 = vunpack.c.l.b16 %v276
      %v552 = vunpack.c.h.b16 %v276
      %v553 = vunpack.c.l.b16 %v277
      %v554 = vunpack.c.h.b16 %v277
      %v555 = vunpack.c.l.b16 %v278
      %v556 = vunpack.c.h.b16 %v278
      %v557 = vunpack.c.l.b16 %v279
      %v558 = vunpack.c.h.b16 %v279
      %v559 = vunpack.c.l.b16 %v280
      %v560 = vunpack.c.h.b16 %v280
      %v561 = vunpack.c.l.b16 %v281
      %v562 = vunpack.c.h.b16 %v281
      %v563 = vunpack.c.l.b16 %v282
      %v564 = vunpack.c.h.b16 %v282
      %v565 = vunpack.c.l.b16 %v283
      %v566 = vunpack.c.h.b16 %v283
      %v567 = vunpack.c.l.b16 %v284
      %v568 = vunpack.c.h.b16 %v284
      %v569 = vunpack.c.l.b16 %v285
      %v570 = vunpack.c.h.b16 %v285
      %v571 = vunpack.c.l.b16 %v286
      %v572 = vunpack.c.h.b16 %v286
      %v573 = vunpack.c.l.b16 %v287
      %v574 = vunpack.c.h.b16 %v287
      %v575 = vunpack.c.l.b16 %v288
      %v576 = vunpack.c.h.b16 %v288
      %v577 = vunpack.c.l.b16 %v289
      %v578 = vunpack.c.h.b16 %v289
      %v579 = vunpack.c.l.b16 %v290
      %v580 = vunpack.c.h.b16 %v290
      %v581 = vunpack.c.l.b16 %v291
      %v582 = vunpack.c.h.b16 %v291
      %v583 = vunpack.c.l.b16 %v292
      %v584 = vunpack.c.h.b16 %v292
      %v585 = vunpack.c.l.b16 %v293
      %v586 = vunpack.c.h.b16 %v293
      %v587 = vunpack.c.l.b16 %v294
      %v588 = vunpack.c.h.b16 %v294
      %v589 = vunpack.c.l.b16 %v295
      %v590 = vunpack.c.h.b16 %v295
      %v591 = vunpack.c.l.b16 %v296
      %v592 = vunpack.c.h.b16 %v296
      %v593 = vunpack.c.l.b16 %v297
      %v594 = vunpack.c.h.b16 %v297
      %v595 = vunpack.c.l.b16 %v298
      %v596 = vunpack.c.h.b16 %v298
      %v597 = vunpack.c.l.b16 %v299
      %v598 = vunpack.c.h.b16 %v299
      %v599 = vunpack.c.l.b16 %v300
      %v600 = vunpack.c.h.b16 %v300
      %v601 = vunpack.c.l.b16 %v301
      %v602 = vunpack.c.h.b16 %v301
      %v603 = vunpack.c.l.b16 %v302
      %v604 = vunpack.c.h.b16 %v302
      %v605 = vunpack.c.l.b16 %v303
      %v606 = vunpack.c.h.b16 %v303
      %v607 = vunpack.c.l.b16 %v304
      %v608 = vunpack.c.h.b16 %v304
      %v609 = vunpack.c.l.b16 %v305
      %v610 = vunpack.c.h.b16 %v305
      %v611 = vunpack.c.l.b16 %v306
      %v612 = vunpack.c.h.b16 %v306
      %v613 = vunpack.c.l.b16 %v307
      %v614 = vunpack.c.h.b16 %v307
      %v615 = vunpack.c.l.b16 %v308
      %v616 = vunpack.c.h.b16 %v308
      %v617 = vunpack.c.l.b16 %v309
      %v618 = vunpack.c.h.b16 %v309
      %v619 = vunpack.c.l.b16 %v310
      %v620 = vunpack.c.h.b16 %v310
      %v621 = vunpack.c.l.b16 %v311
      %v622 = vunpack.c.h.b16 %v311
      %v623 = vunpack.c.l.b16 %v312
      %v624 = vunpack.c.h.b16 %v312
      %v625 = vunpack.c.l.b16 %v313
      %v626 = vunpack.c.h.b16 %v313
      %v627 = vunpack.c.l.b16 %v314
      %v628 = vunpack.c.h.b16 %v314
      %v629 = vunpack.c.l.b16 %v315
      %v630 = vunpack.c.h.b16 %v315
      %v631 = vunpack.c.l.b16 %v316
      %v632 = vunpack.c.h.b16 %v316
      %v633 = vunpack.c.l.b16 %v317
      %v634 = vunpack.c.h.b16 %v317
      %v635 = vunpack.c.l.b16 %v318
      %v636 = vunpack.c.h.b16 %v318
      %v637 = vunpack.c.l.b16 %v319
      %v638 = vunpack.c.h.b16 %v319
      %v639 = vunpack.c.l.b16 %v320
      %v640 = vunpack.c.h.b16 %v320
      %v641 = vpack.c.b16 %v517, %v513
      %v642 = vpack.c.b16 %v518, %v514
      %v643 = vpack.c.b16 %v519, %v515
      %v644 = vpack.c.b16 %v520, %v516
      %v645 = vpack.c.b16 %v525, %v521
      %v646 = vpack.c.b16 %v526, %v522
      %v647 = vpack.c.b16 %v527, %v523
      %v648 = vpack.c.b16 %v528, %v524
      %v649 = vpack.c.b16 %v533, %v529
      %v650 = vpack.c.b16 %v534, %v530
      %v651 = vpack.c.b16 %v535, %v531
      %v652 = vpack.c.b16 %v536, %v532
      %v653 = vpack.c.b16 %v541, %v537
      %v654 = vpack.c.b16 %v542, %v538
      %v655 = vpack.c.b16 %v543, %v539
      %v656 = vpack.c.b16 %v544, %v540
      %v657 = vpack.c.b16 %v549, %v545
      %v658 = vpack.c.b16 %v550, %v546
      %v659 = vpack.c.b16 %v551, %v547
      %v660 = vpack.c.b16 %v552, %v548
      %v661 = vpack.c.b16 %v557, %v553
      %v662 = vpack.c.b16 %v558, %v554
      %v663 = vpack.c.b16 %v559, %v555
      %v664 = vpack.c.b16 %v560, %v556
      %v665 = vpack.c.b16 %v565, %v561
      %v666 = vpack.c.b16 %v566, %v562
      %v667 = vpack.c.b16 %v567, %v563
      %v668 = vpack.c.b16 %v568, %v564
      %v669 = vpack.c.b16 %v573, %v569
      %v670 = vpack.c.b16 %v574, %v570
      %v671 = vpack.c.b16 %v575, %v571
      %v672 = vpack.c.b16 %v576, %v572
      %v673 = vpack.c.b16 %v581, %v577
      %v674 = vpack.c.b16 %v582, %v578
      %v675 = vpack.c.b16 %v583, %v579
      %v676 = vpack.c.b16 %v584, %v580
      %v677 = vpack.c.b16 %v589, %v585
      %v678 = vpack.c.b16 %v590, %v586
      %v679 = vpack.c.b16 %v591, %v587
      %v680 = vpack.c.b16 %v592, %v588
      %v681 = vpack.c.b16 %v597, %v593
      %v682 = vpack.c.b16 %v598, %v594
      %v683 = vpack.c.b16 %v599, %v595
      %v684 = vpack.c.b16 %v600, %v596
      %v685 = vpack.c.b16 %v605, %v601
      %v686 = vpack.c.b16 %v606, %v602
      %v687 = vpack.c.b16 %v607, %v603
      %v688 = vpack.c.b16 %v608, %v604
      %v689 = vpack.c.b16 %v613, %v609
      %v690 = vpack.c.b16 %v614, %v610
      %v691 = vpack.c.b16 %v615, %v611
      %v692 = vpack.c.b16 %v616, %v612
      %v693 = vpack.c.b16 %v621, %v617
      %v694 = vpack.c.b16 %v622, %v618
      %v695 = vpack.c.b16 %v623, %v619
      %v696 = vpack.c.b16 %v624, %v620
      %v697 = vpack.c.b16 %v629, %v625
      %v698 = vpack.c.b16 %v630, %v626
      %v699 = vpack.c.b16 %v631, %v627
      %v700 = vpack.c.b16 %v632, %v628
      %v701 = vpack.c.b16 %v637, %v633
      %v702 = vpack.c.b16 %v638, %v634
      %v703 = vpack.c.b16 %v639, %v635
      %v704 = vpack.c.b16 %v640, %v636
      %v897 = vunpack.c.l.b16 %v321
      %v898 = vunpack.c.h.b16 %v321
      %v899 = vunpack.c.l.b16 %v322
      %v900 = vunpack.c.h.b16 %v322
      %v901 = vunpack.c.l.b16 %v323
      %v902 = vunpack.c.h.b16 %v323
      %v903 = vunpack.c.l.b16 %v324
      %v904 = vunpack.c.h.b16 %v324
      %v905 = vunpack.c.l.b16 %v325
      %v906 = vunpack.c.h.b16 %v325
      %v907 = vunpack.c.l.b16 %v326
      %v908 = vunpack.c.h.b16 %v326
      %v909 = vunpack.c.l.b16 %v327
      %v910 = vunpack.c.h.b16 %v327
      %v911 = vunpack.c.l.b16 %v328
      %v912 = vunpack.c.h.b16 %v328
      %v913 = vunpack.c.l.b16 %v329
      %v914 = vunpack.c.h.b16 %v329
      %v915 = vunpack.c.l.b16 %v330
      %v916 = vunpack.c.h.b16 %v330
      %v917 = vunpack.c.l.b16 %v331
      %v918 = vunpack.c.h.b16 %v331
      %v919 = vunpack.c.l.b16 %v332
      %v920 = vunpack.c.h.b16 %v332
      %v921 = vunpack.c.l.b16 %v333
      %v922 = vunpack.c.h.b16 %v333
      %v923 = vunpack.c.l.b16 %v334
      %v924 = vunpack.c.h.b16 %v334
      %v925 = vunpack.c.l.b16 %v335
      %v926 = vunpack.c.h.b16 %v335
      %v927 = vunpack.c.l.b16 %v336
      %v928 = vunpack.c.h.b16 %v336
      %v929 = vunpack.c.l.b16 %v337
      %v930 = vunpack.c.h.b16 %v337
      %v931 = vunpack.c.l.b16 %v338
      %v932 = vunpack.c.h.b16 %v338
      %v933 = vunpack.c.l.b16 %v339
      %v934 = vunpack.c.h.b16 %v339
      %v935 = vunpack.c.l.b16 %v340
      %v936 = vunpack.c.h.b16 %v340
      %v937 = vunpack.c.l.b16 %v341
      %v938 = vunpack.c.h.b16 %v341
      %v939 = vunpack.c.l.b16 %v342
      %v940 = vunpack.c.h.b16 %v342
      %v941 = vunpack.c.l.b16 %v343
      %v942 = vunpack.c.h.b16 %v343
      %v943 = vunpack.c.l.b16 %v344
      %v944 = vunpack.c.h.b16 %v344
      %v945 = vunpack.c.l.b16 %v345
      %v946 = vunpack.c.h.b16 %v345
      %v947 = vunpack.c.l.b16 %v346
      %v948 = vunpack.c.h.b16 %v346
      %v949 = vunpack.c.l.b16 %v347
      %v950 = vunpack.c.h.b16 %v347
      %v951 = vunpack.c.l.b16 %v348
      %v952 = vunpack.c.h.b16 %v348
      %v953 = vunpack.c.l.b16 %v349
      %v954 = vunpack.c.h.b16 %v349
      %v955 = vunpack.c.l.b16 %v350
      %v956 = vunpack.c.h.b16 %v350
      %v957 = vunpack.c.l.b16 %v351
      %v958 = vunpack.c.h.b16 %v351
      %v959 = vunpack.c.l.b16 %v352
      %v960 = vunpack.c.h.b16 %v352
      %v961 = vunpack.c.l.b16 %v353
      %v962 = vunpack.c.h.b16 %v353
      %v963 = vunpack.c.l.b16 %v354
      %v964 = vunpack.c.h.b16 %v354
      %v965 = vunpack.c.l.b16 %v355
      %v966 = vunpack.c.h.b16 %v355
      %v967 = vunpack.c.l.b16 %v356
      %v968 = vunpack.c.h.b16 %v356
      %v969 = vunpack.c.l.b16 %v357
      %v970 = vunpack.c.h.b16 %v357
      %v971 = vunpack.c.l.b16 %v358
      %v972 = vunpack.c.h.b16 %v358
      %v973 = vunpack.c.l.b16 %v359
      %v974 = vunpack.c.h.b16 %v359
      %v975 = vunpack.c.l.b16 %v360
      %v976 = vunpack.c.h.b16 %v360
      %v977 = vunpack.c.l.b16 %v361
      %v978 = vunpack.c.h.b16 %v361
      %v979 = vunpack.c.l.b16 %v362
      %v980 = vunpack.c.h.b16 %v362
      %v981 = vunpack.c.l.b16 %v363
      %v982 = vunpack.c.h.b16 %v363
      %v983 = vunpack.c.l.b16 %v364
      %v984 = vunpack.c.h.b16 %v364
      %v985 = vunpack.c.l.b16 %v365
      %v986 = vunpack.c.h.b16 %v365
      %v987 = vunpack.c.l.b16 %v366
      %v988 = vunpack.c.h.b16 %v366
      %v989 = vunpack.c.l.b16 %v367
      %v990 = vunpack.c.h.b16 %v367
      %v991 = vunpack.c.l.b16 %v368
      %v992 = vunpack.c.h.b16 %v368
      %v993 = vunpack.c.l.b16 %v369
      %v994 = vunpack.c.h.b16 %v369
      %v995 = vunpack.c.l.b16 %v370
      %v996 = vunpack.c.h.b16 %v370
      %v997 = vunpack.c.l.b16 %v371
      %v998 = vunpack.c.h.b16 %v371
      %v999 = vunpack.c.l.b16 %v372
      %v1000 = vunpack.c.h.b16 %v372
      %v1001 = vunpack.c.l.b16 %v373
      %v1002 = vunpack.c.h.b16 %v373
      %v1003 = vunpack.c.l.b16 %v374
      %v1004 = vunpack.c.h.b16 %v374
      %v1005 = vunpack.c.l.b16 %v375
      %v1006 = vunpack.c.h.b16 %v375
      %v1007 = vunpack.c.l.b16 %v376
      %v1008 = vunpack.c.h.b16 %v376
      %v1009 = vunpack.c.l.b16 %v377
      %v1010 = vunpack.c.h.b16 %v377
      %v1011 = vunpack.c.l.b16 %v378
      %v1012 = vunpack.c.h.b16 %v378
      %v1013 = vunpack.c.l.b16 %v379
      %v1014 = vunpack.c.h.b16 %v379
      %v1015 = vunpack.c.l.b16 %v380
      %v1016 = vunpack.c.h.b16 %v380
      %v1017 = vunpack.c.l.b16 %v381
      %v1018 = vunpack.c.h.b16 %v381
      %v1019 = vunpack.c.l.b16 %v382
      %v1020 = vunpack.c.h.b16 %v382
      %v1021 = vunpack.c.l.b16 %v383
      %v1022 = vunpack.c.h.b16 %v383
      %v1023 = vunpack.c.l.b16 %v384
      %v1024 = vunpack.c.h.b16 %v384
      %v1025 = vunpack.c.l.b16 %v385
      %v1026 = vunpack.c.h.b16 %v385
      %v1027 = vunpack.c.l.b16 %v386
      %v1028 = vunpack.c.h.b16 %v386
      %v1029 = vunpack.c.l.b16 %v387
      %v1030 = vunpack.c.h.b16 %v387
      %v1031 = vunpack.c.l.b16 %v388
      %v1032 = vunpack.c.h.b16 %v388
      %v1033 = vunpack.c.l.b16 %v389
      %v1034 = vunpack.c.h.b16 %v389
      %v1035 = vunpack.c.l.b16 %v390
      %v1036 = vunpack.c.h.b16 %v390
      %v1037 = vunpack.c.l.b16 %v391
      %v1038 = vunpack.c.h.b16 %v391
      %v1039 = vunpack.c.l.b16 %v392
      %v1040 = vunpack.c.h.b16 %v392
      %v1041 = vunpack.c.l.b16 %v393
      %v1042 = vunpack.c.h.b16 %v393
      %v1043 = vunpack.c.l.b16 %v394
      %v1044 = vunpack.c.h.b16 %v394
      %v1045 = vunpack.c.l.b16 %v395
      %v1046 = vunpack.c.h.b16 %v395
      %v1047 = vunpack.c.l.b16 %v396
      %v1048 = vunpack.c.h.b16 %v396
      %v1049 = vunpack.c.l.b16 %v397
      %v1050 = vunpack.c.h.b16 %v397
      %v1051 = vunpack.c.l.b16 %v398
      %v1052 = vunpack.c.h.b16 %v398
      %v1053 = vunpack.c.l.b16 %v399
      %v1054 = vunpack.c.h.b16 %v399
      %v1055 = vunpack.c.l.b16 %v400
      %v1056 = vunpack.c.h.b16 %v400
      %v1057 = vunpack.c.l.b16 %v401
      %v1058 = vunpack.c.h.b16 %v401
      %v1059 = vunpack.c.l.b16 %v402
      %v1060 = vunpack.c.h.b16 %v402
      %v1061 = vunpack.c.l.b16 %v403
      %v1062 = vunpack.c.h.b16 %v403
      %v1063 = vunpack.c.l.b16 %v404
      %v1064 = vunpack.c.h.b16 %v404
      %v1065 = vunpack.c.l.b16 %v405
      %v1066 = vunpack.c.h.b16 %v405
      %v1067 = vunpack.c.l.b16 %v406
      %v1068 = vunpack.c.h.b16 %v406
      %v1069 = vunpack.c.l.b16 %v407
      %v1070 = vunpack.c.h.b16 %v407
      %v1071 = vunpack.c.l.b16 %v408
      %v1072 = vunpack.c.h.b16 %v408
      %v1073 = vunpack.c.l.b16 %v409
      %v1074 = vunpack.c.h.b16 %v409
      %v1075 = vunpack.c.l.b16 %v410
      %v1076 = vunpack.c.h.b16 %v410
      %v1077 = vunpack.c.l.b16 %v411
      %v1078 = vunpack.c.h.b16 %v411
      %v1079 = vunpack.c.l.b16 %v412
      %v1080 = vunpack.c.h.b16 %v412
      %v1081 = vunpack.c.l.b16 %v413
      %v1082 = vunpack.c.h.b16 %v413
      %v1083 = vunpack.c.l.b16 %v414
      %v1084 = vunpack.c.h.b16 %v414
      %v1085 = vunpack.c.l.b16 %v415
      %v1086 = vunpack.c.h.b16 %v415
      %v1087 = vunpack.c.l.b16 %v416
      %v1088 = vunpack.c.h.b16 %v416
      %v1089 = vunpack.c.l.b16 %v417
      %v1090 = vunpack.c.h.b16 %v417
      %v1091 = vunpack.c.l.b16 %v418
      %v1092 = vunpack.c.h.b16 %v418
      %v1093 = vunpack.c.l.b16 %v419
      %v1094 = vunpack.c.h.b16 %v419
      %v1095 = vunpack.c.l.b16 %v420
      %v1096 = vunpack.c.h.b16 %v420
      %v1097 = vunpack.c.l.b16 %v421
      %v1098 = vunpack.c.h.b16 %v421
      %v1099 = vunpack.c.l.b16 %v422
      %v1100 = vunpack.c.h.b16 %v422
      %v1101 = vunpack.c.l.b16 %v423
      %v1102 = vunpack.c.h.b16 %v423
      %v1103 = vunpack.c.l.b16 %v424
      %v1104 = vunpack.c.h.b16 %v424
      %v1105 = vunpack.c.l.b16 %v425
      %v1106 = vunpack.c.h.b16 %v425
      %v1107 = vunpack.c.l.b16 %v426
      %v1108 = vunpack.c.h.b16 %v426
      %v1109 = vunpack.c.l.b16 %v427
      %v1110 = vunpack.c.h.b16 %v427
      %v1111 = vunpack.c.l.b16 %v428
      %v1112 = vunpack.c.h.b16 %v428
      %v1113 = vunpack.c.l.b16 %v429
      %v1114 = vunpack.c.h.b16 %v429
      %v1115 = vunpack.c.l.b16 %v430
      %v1116 = vunpack.c.h.b16 %v430
      %v1117 = vunpack.c.l.b16 %v431
      %v1118 = vunpack.c.h.b16 %v431
      %v1119 = vunpack.c.l.b16 %v432
      %v1120 = vunpack.c.h.b16 %v432
      %v1121 = vunpack.c.l.b16 %v433
      %v1122 = vunpack.c.h.b16 %v433
      %v1123 = vunpack.c.l.b16 %v434
      %v1124 = vunpack.c.h.b16 %v434
      %v1125 = vunpack.c.l.b16 %v435
      %v1126 = vunpack.c.h.b16 %v435
      %v1127 = vunpack.c.l.b16 %v436
      %v1128 = vunpack.c.h.b16 %v436
      %v1129 = vunpack.c.l.b16 %v437
      %v1130 = vunpack.c.h.b16 %v437
      %v1131 = vunpack.c.l.b16 %v438
      %v1132 = vunpack.c.h.b16 %v438
      %v1133 = vunpack.c.l.b16 %v439
      %v1134 = vunpack.c.h.b16 %v439
      %v1135 = vunpack.c.l.b16 %v440
      %v1136 = vunpack.c.h.b16 %v440
      %v1137 = vunpack.c.l.b16 %v441
      %v1138 = vunpack.c.h.b16 %v441
      %v1139 = vunpack.c.l.b16 %v442
      %v1140 = vunpack.c.h.b16 %v442
      %v1141 = vunpack.c.l.b16 %v443
      %v1142 = vunpack.c.h.b16 %v443
      %v1143 = vunpack.c.l.b16 %v444
      %v1144 = vunpack.c.h.b16 %v444
      %v1145 = vunpack.c.l.b16 %v445
      %v1146 = vunpack.c.h.b16 %v445
      %v1147 = vunpack.c.l.b16 %v446
      %v1148 = vunpack.c.h.b16 %v446
      %v1149 = vunpack.c.l.b16 %v447
      %v1150 = vunpack.c.h.b16 %v447
      %v1151 = vunpack.c.l.b16 %v448
      %v1152 = vunpack.c.h.b16 %v448
      %v1153 = vpack.c.b16 %v901, %v897
      %v1154 = vpack.c.b16 %v902, %v898
      %v1155 = vpack.c.b16 %v903, %v899
      %v1156 = vpack.c.b16 %v904, %v900
      %v1157 = vpack.c.b16 %v909, %v905
      %v1158 = vpack.c.b16 %v910, %v906
      %v1159 = vpack.c.b16 %v911, %v907
      %v1160 = vpack.c.b16 %v912, %v908
      %v1161 = vpack.c.b16 %v917, %v913
      %v1162 = vpack.c.b16 %v918, %v914
      %v1163 = vpack.c.b16 %v919, %v915
      %v1164 = vpack.c.b16 %v920, %v916
      %v1165 = vpack.c.b16 %v925, %v921
      %v1166 = vpack.c.b16 %v926, %v922
      %v1167 = vpack.c.b16 %v927, %v923
      %v1168 = vpack.c.b16 %v928, %v924
      %v1169 = vpack.c.b16 %v933, %v929
      %v1170 = vpack.c.b16 %v934, %v930
      %v1171 = vpack.c.b16 %v935, %v931
      %v1172 = vpack.c.b16 %v936, %v932
      %v1173 = vpack.c.b16 %v941, %v937
      %v1174 = vpack.c.b16 %v942, %v938
      %v1175 = vpack.c.b16 %v943, %v939
      %v1176 = vpack.c.b16 %v944, %v940
      %v1177 = vpack.c.b16 %v949, %v945
      %v1178 = vpack.c.b16 %v950, %v946
      %v1179 = vpack.c.b16 %v951, %v947
      %v1180 = vpack.c.b16 %v952, %v948
      %v1181 = vpack.c.b16 %v957, %v953
      %v1182 = vpack.c.b16 %v958, %v954
      %v1183 = vpack.c.b16 %v959, %v955
      %v1184 = vpack.c.b16 %v960, %v956
      %v1185 = vpack.c.b16 %v965, %v961
      %v1186 = vpack.c.b16 %v966, %v962
      %v1187 = vpack.c.b16 %v967, %v963
      %v1188 = vpack.c.b16 %v968, %v964
      %v1189 = vpack.c.b16 %v973, %v969
      %v1190 = vpack.c.b16 %v974, %v970
      %v1191 = vpack.c.b16 %v975, %v971
      %v1192 = vpack.c.b16 %v976, %v972
      %v1193 = vpack.c.b16 %v981, %v977
      %v1194 = vpack.c.b16 %v982, %v978
      %v1195 = vpack.c.b16 %v983, %v979
      %v1196 = vpack.c.b16 %v984, %v980
      %v1197 = vpack.c.b16 %v989, %v985
      %v1198 = vpack.c.b16 %v990, %v986
      %v1199 = vpack.c.b16 %v991, %v987
      %v1200 = vpack.c.b16 %v992, %v988
      %v1201 = vpack.c.b16 %v997, %v993
      %v1202 = vpack.c.b16 %v998, %v994
      %v1203 = vpack.c.b16 %v999, %v995
      %v1204 = vpack.c.b16 %v1000, %v996
      %v1205 = vpack.c.b16 %v1005, %v1001
      %v1206 = vpack.c.b16 %v1006, %v1002
      %v1207 = vpack.c.b16 %v1007, %v1003
      %v1208 = vpack.c.b16 %v1008, %v1004
      %v1209 = vpack.c.b16 %v1013, %v1009
      %v1210 = vpack.c.b16 %v1014, %v1010
      %v1211 = vpack.c.b16 %v1015, %v1011
      %v1212 = vpack.c.b16 %v1016, %v1012
      %v1213 = vpack.c.b16 %v1021, %v1017
      %v1214 = vpack.c.b16 %v1022, %v1018
      %v1215 = vpack.c.b16 %v1023, %v1019
      %v1216 = vpack.c.b16 %v1024, %v1020
      %v1217 = vpack.c.b16 %v1029, %v1025
      %v1218 = vpack.c.b16 %v1030, %v1026
      %v1219 = vpack.c.b16 %v1031, %v1027
      %v1220 = vpack.c.b16 %v1032, %v1028
      %v1221 = vpack.c.b16 %v1037, %v1033
      %v1222 = vpack.c.b16 %v1038, %v1034
      %v1223 = vpack.c.b16 %v1039, %v1035
      %v1224 = vpack.c.b16 %v1040, %v1036
      %v1225 = vpack.c.b16 %v1045, %v1041
      %v1226 = vpack.c.b16 %v1046, %v1042
      %v1227 = vpack.c.b16 %v1047, %v1043
      %v1228 = vpack.c.b16 %v1048, %v1044
      %v1229 = vpack.c.b16 %v1053, %v1049
      %v1230 = vpack.c.b16 %v1054, %v1050
      %v1231 = vpack.c.b16 %v1055, %v1051
      %v1232 = vpack.c.b16 %v1056, %v1052
      %v1233 = vpack.c.b16 %v1061, %v1057
      %v1234 = vpack.c.b16 %v1062, %v1058
      %v1235 = vpack.c.b16 %v1063, %v1059
      %v1236 = vpack.c.b16 %v1064, %v1060
      %v1237 = vpack.c.b16 %v1069, %v1065
      %v1238 = vpack.c.b16 %v1070, %v1066
      %v1239 = vpack.c.b16 %v1071, %v1067
      %v1240 = vpack.c.b16 %v1072, %v1068
      %v1241 = vpack.c.b16 %v1077, %v1073
      %v1242 = vpack.c.b16 %v1078, %v1074
      %v1243 = vpack.c.b16 %v1079, %v1075
      %v1244 = vpack.c.b16 %v1080, %v1076
      %v1245 = vpack.c.b16 %v1085, %v1081
      %v1246 = vpack.c.b16 %v1086, %v1082
      %v1247 = vpack.c.b16 %v1087, %v1083
      %v1248 = vpack.c.b16 %v1088, %v1084
      %v1249 = vpack.c.b16 %v1093, %v1089
      %v1250 = vpack.c.b16 %v1094, %v1090
      %v1251 = vpack.c.b16 %v1095, %v1091
      %v1252 = vpack.c.b16 %v1096, %v1092
      %v1253 = vpack.c.b16 %v1101, %v1097
      %v1254 = vpack.c.b16 %v1102, %v1098
      %v1255 = vpack.c.b16 %v1103, %v1099
      %v1256 = vpack.c.b16 %v1104, %v1100
      %v1257 = vpack.c.b16 %v1109, %v1105
      %v1258 = vpack.c.b16 %v1110, %v1106
      %v1259 = vpack.c.b16 %v1111, %v1107
      %v1260 = vpack.c.b16 %v1112, %v1108
      %v1261 = vpack.c.b16 %v1117, %v1113
      %v1262 = vpack.c.b16 %v1118, %v1114
      %v1263 = vpack.c.b16 %v1119, %v1115
      %v1264 = vpack.c.b16 %v1120, %v1116
      %v1265 = vpack.c.b16 %v1125, %v1121
      %v1266 = vpack.c.b16 %v1126, %v1122
      %v1267 = vpack.c.b16 %v1127, %v1123
      %v1268 = vpack.c.b16 %v1128, %v1124
      %v1269 = vpack.c.b16 %v1133, %v1129
      %v1270 = vpack.c.b16 %v1134, %v1130
      %v1271 = vpack.c.b16 %v1135, %v1131
      %v1272 = vpack.c.b16 %v1136, %v1132
      %v1273 = vpack.c.b16 %v1141, %v1137
      %v1274 = vpack.c.b16 %v1142, %v1138
      %v1275 = vpack.c.b16 %v1143, %v1139
      %v1276 = vpack.c.b16 %v1144, %v1140
      %v1277 = vpack.c.b16 %v1149, %v1145
      %v1278 = vpack.c.b16 %v1150, %v1146
      %v1279 = vpack.c.b16 %v1151, %v1147
      %v1280 = vpack.c.b16 %v1152, %v1148
      %1409 = vmatpush.bf16.msra.mxu0 %v1181
      %1410 = vmatpush.bf16.msra.mxu0 %v1177
      %1411 = vmatpush.bf16.msra.mxu0 %v1173
      %1412 = vmatpush.bf16.msra.mxu0 %v1169
      %1413 = vmatpush.bf16.msra.mxu0 %v1165
      %1414 = vmatpush.bf16.msra.mxu0 %v1161
      %1415 = vmatpush.bf16.msra.mxu0 %v1157
      %1416 = vmatpush.bf16.msra.mxu0 %v1153
      %1417 = vmatmul.bf16.gmra.mxu0 %v641
      %v1418 = vpop.f32.mrf.mxu0
      %v1419 = vadd.f32 0.0, %v1418
      %v1420 = vpop.f32.mrf.mxu0
      %v1421 = vadd.f32 0.0, %v1420
      %1422 = vmatmul.bf16.gmra.mxu0 %v645
      %v1423 = vpop.f32.mrf.mxu0
      %v1424 = vadd.f32 0.0, %v1423
      %v1425 = vpop.f32.mrf.mxu0
      %v1426 = vadd.f32 0.0, %v1425
      %1427 = vmatmul.bf16.gmra.mxu0 %v649
      %v1428 = vpop.f32.mrf.mxu0
      %v1429 = vadd.f32 0.0, %v1428
      %v1430 = vpop.f32.mrf.mxu0
      %v1431 = vadd.f32 0.0, %v1430
      %1432 = vmatmul.bf16.gmra.mxu0 %v653
      %v1433 = vpop.f32.mrf.mxu0
      %v1434 = vadd.f32 0.0, %v1433
      %v1435 = vpop.f32.mrf.mxu0
      %v1436 = vadd.f32 0.0, %v1435
      %1437 = vmatmul.bf16.gmra.mxu0 %v657
      %v1438 = vpop.f32.mrf.mxu0
      %v1439 = vadd.f32 0.0, %v1438
      %v1440 = vpop.f32.mrf.mxu0
      %v1441 = vadd.f32 0.0, %v1440
      %1442 = vmatmul.bf16.gmra.mxu0 %v661
      %v1443 = vpop.f32.mrf.mxu0
      %v1444 = vadd.f32 0.0, %v1443
      %v1445 = vpop.f32.mrf.mxu0
      %v1446 = vadd.f32 0.0, %v1445
      %1447 = vmatmul.bf16.gmra.mxu0 %v665
      %v1448 = vpop.f32.mrf.mxu0
      %v1449 = vadd.f32 0.0, %v1448
      %v1450 = vpop.f32.mrf.mxu0
      %v1451 = vadd.f32 0.0, %v1450
      %1452 = vmatmul.bf16.gmra.mxu0 %v669
      %v1453 = vpop.f32.mrf.mxu0
      %v1454 = vadd.f32 0.0, %v1453
      %v1455 = vpop.f32.mrf.mxu0
      %v1456 = vadd.f32 0.0, %v1455
      %1457 = vmatmul.bf16.gmra.mxu0 %v673
      %v1458 = vpop.f32.mrf.mxu0
      %v1459 = vadd.f32 0.0, %v1458
      %v1460 = vpop.f32.mrf.mxu0
      %v1461 = vadd.f32 0.0, %v1460
      %1462 = vmatmul.bf16.gmra.mxu0 %v677
      %v1463 = vpop.f32.mrf.mxu0
      %v1464 = vadd.f32 0.0, %v1463
      %v1465 = vpop.f32.mrf.mxu0
      %v1466 = vadd.f32 0.0, %v1465
      %1467 = vmatmul.bf16.gmra.mxu0 %v681
      %v1468 = vpop.f32.mrf.mxu0
      %v1469 = vadd.f32 0.0, %v1468
      %v1470 = vpop.f32.mrf.mxu0
      %v1471 = vadd.f32 0.0, %v1470
      %1472 = vmatmul.bf16.gmra.mxu0 %v685
      %v1473 = vpop.f32.mrf.mxu0
      %v1474 = vadd.f32 0.0, %v1473
      %v1475 = vpop.f32.mrf.mxu0
      %v1476 = vadd.f32 0.0, %v1475
      %1477 = vmatmul.bf16.gmra.mxu0 %v689
      %v1478 = vpop.f32.mrf.mxu0
      %v1479 = vadd.f32 0.0, %v1478
      %v1480 = vpop.f32.mrf.mxu0
      %v1481 = vadd.f32 0.0, %v1480
      %1482 = vmatmul.bf16.gmra.mxu0 %v693
      %v1483 = vpop.f32.mrf.mxu0
      %v1484 = vadd.f32 0.0, %v1483
      %v1485 = vpop.f32.mrf.mxu0
      %v1486 = vadd.f32 0.0, %v1485
      %1487 = vmatmul.bf16.gmra.mxu0 %v697
      %v1488 = vpop.f32.mrf.mxu0
      %v1489 = vadd.f32 0.0, %v1488
      %v1490 = vpop.f32.mrf.mxu0
      %v1491 = vadd.f32 0.0, %v1490
      %1492 = vmatmul.bf16.gmra.mxu0 %v701
      %v1493 = vpop.f32.mrf.mxu0
      %v1494 = vadd.f32 0.0, %v1493
      %v1495 = vpop.f32.mrf.mxu0
      %v1496 = vadd.f32 0.0, %v1495
      %1497 = vdwg.mxu0
      %1498 = vmatpush.bf16.msra.mxu0 %v1213
      %1499 = vmatpush.bf16.msra.mxu0 %v1209
      %1500 = vmatpush.bf16.msra.mxu0 %v1205
      %1501 = vmatpush.bf16.msra.mxu0 %v1201
      %1502 = vmatpush.bf16.msra.mxu0 %v1197
      %1503 = vmatpush.bf16.msra.mxu0 %v1193
      %1504 = vmatpush.bf16.msra.mxu0 %v1189
      %1505 = vmatpush.bf16.msra.mxu0 %v1185
      %1506 = vmatmul.bf16.gmra.mxu0 %v642
      %v1507 = vpop.f32.mrf.mxu0
      %v1508 = vadd.f32 %v1419, %v1507
      %v1509 = vpop.f32.mrf.mxu0
      %v1510 = vadd.f32 %v1421, %v1509
      %1511 = vmatmul.bf16.gmra.mxu0 %v646
      %v1512 = vpop.f32.mrf.mxu0
      %v1513 = vadd.f32 %v1424, %v1512
      %v1514 = vpop.f32.mrf.mxu0
      %v1515 = vadd.f32 %v1426, %v1514
      %1516 = vmatmul.bf16.gmra.mxu0 %v650
      %v1517 = vpop.f32.mrf.mxu0
      %v1518 = vadd.f32 %v1429, %v1517
      %v1519 = vpop.f32.mrf.mxu0
      %v1520 = vadd.f32 %v1431, %v1519
      %1521 = vmatmul.bf16.gmra.mxu0 %v654
      %v1522 = vpop.f32.mrf.mxu0
      %v1523 = vadd.f32 %v1434, %v1522
      %v1524 = vpop.f32.mrf.mxu0
      %v1525 = vadd.f32 %v1436, %v1524
      %1526 = vmatmul.bf16.gmra.mxu0 %v658
      %v1527 = vpop.f32.mrf.mxu0
      %v1528 = vadd.f32 %v1439, %v1527
      %v1529 = vpop.f32.mrf.mxu0
      %v1530 = vadd.f32 %v1441, %v1529
      %1531 = vmatmul.bf16.gmra.mxu0 %v662
      %v1532 = vpop.f32.mrf.mxu0
      %v1533 = vadd.f32 %v1444, %v1532
      %v1534 = vpop.f32.mrf.mxu0
      %v1535 = vadd.f32 %v1446, %v1534
      %1536 = vmatmul.bf16.gmra.mxu0 %v666
      %v1537 = vpop.f32.mrf.mxu0
      %v1538 = vadd.f32 %v1449, %v1537
      %v1539 = vpop.f32.mrf.mxu0
      %v1540 = vadd.f32 %v1451, %v1539
      %1541 = vmatmul.bf16.gmra.mxu0 %v670
      %v1542 = vpop.f32.mrf.mxu0
      %v1543 = vadd.f32 %v1454, %v1542
      %v1544 = vpop.f32.mrf.mxu0
      %v1545 = vadd.f32 %v1456, %v1544
      %1546 = vmatmul.bf16.gmra.mxu0 %v674
      %v1547 = vpop.f32.mrf.mxu0
      %v1548 = vadd.f32 %v1459, %v1547
      %v1549 = vpop.f32.mrf.mxu0
      %v1550 = vadd.f32 %v1461, %v1549
      %1551 = vmatmul.bf16.gmra.mxu0 %v678
      %v1552 = vpop.f32.mrf.mxu0
      %v1553 = vadd.f32 %v1464, %v1552
      %v1554 = vpop.f32.mrf.mxu0
      %v1555 = vadd.f32 %v1466, %v1554
      %1556 = vmatmul.bf16.gmra.mxu0 %v682
      %v1557 = vpop.f32.mrf.mxu0
      %v1558 = vadd.f32 %v1469, %v1557
      %v1559 = vpop.f32.mrf.mxu0
      %v1560 = vadd.f32 %v1471, %v1559
      %1561 = vmatmul.bf16.gmra.mxu0 %v686
      %v1562 = vpop.f32.mrf.mxu0
      %v1563 = vadd.f32 %v1474, %v1562
      %v1564 = vpop.f32.mrf.mxu0
      %v1565 = vadd.f32 %v1476, %v1564
      %1566 = vmatmul.bf16.gmra.mxu0 %v690
      %v1567 = vpop.f32.mrf.mxu0
      %v1568 = vadd.f32 %v1479, %v1567
      %v1569 = vpop.f32.mrf.mxu0
      %v1570 = vadd.f32 %v1481, %v1569
      %1571 = vmatmul.bf16.gmra.mxu0 %v694
      %v1572 = vpop.f32.mrf.mxu0
      %v1573 = vadd.f32 %v1484, %v1572
      %v1574 = vpop.f32.mrf.mxu0
      %v1575 = vadd.f32 %v1486, %v1574
      %1576 = vmatmul.bf16.gmra.mxu0 %v698
      %v1577 = vpop.f32.mrf.mxu0
      %v1578 = vadd.f32 %v1489, %v1577
      %v1579 = vpop.f32.mrf.mxu0
      %v1580 = vadd.f32 %v1491, %v1579
      %1581 = vmatmul.bf16.gmra.mxu0 %v702
      %v1582 = vpop.f32.mrf.mxu0
      %v1583 = vadd.f32 %v1494, %v1582
      %v1584 = vpop.f32.mrf.mxu0
      %v1585 = vadd.f32 %v1496, %v1584
      %1586 = vdwg.mxu0
      %1587 = vmatpush.bf16.msra.mxu0 %v1245
      %1588 = vmatpush.bf16.msra.mxu0 %v1241
      %1589 = vmatpush.bf16.msra.mxu0 %v1237
      %1590 = vmatpush.bf16.msra.mxu0 %v1233
      %1591 = vmatpush.bf16.msra.mxu0 %v1229
      %1592 = vmatpush.bf16.msra.mxu0 %v1225
      %1593 = vmatpush.bf16.msra.mxu0 %v1221
      %1594 = vmatpush.bf16.msra.mxu0 %v1217
      %1595 = vmatmul.bf16.gmra.mxu0 %v643
      %v1596 = vpop.f32.mrf.mxu0
      %v1597 = vadd.f32 %v1508, %v1596
      %v1598 = vpop.f32.mrf.mxu0
      %v1599 = vadd.f32 %v1510, %v1598
      %1600 = vmatmul.bf16.gmra.mxu0 %v647
      %v1601 = vpop.f32.mrf.mxu0
      %v1602 = vadd.f32 %v1513, %v1601
      %v1603 = vpop.f32.mrf.mxu0
      %v1604 = vadd.f32 %v1515, %v1603
      %1605 = vmatmul.bf16.gmra.mxu0 %v651
      %v1606 = vpop.f32.mrf.mxu0
      %v1607 = vadd.f32 %v1518, %v1606
      %v1608 = vpop.f32.mrf.mxu0
      %v1609 = vadd.f32 %v1520, %v1608
      %1610 = vmatmul.bf16.gmra.mxu0 %v655
      %v1611 = vpop.f32.mrf.mxu0
      %v1612 = vadd.f32 %v1523, %v1611
      %v1613 = vpop.f32.mrf.mxu0
      %v1614 = vadd.f32 %v1525, %v1613
      %1615 = vmatmul.bf16.gmra.mxu0 %v659
      %v1616 = vpop.f32.mrf.mxu0
      %v1617 = vadd.f32 %v1528, %v1616
      %v1618 = vpop.f32.mrf.mxu0
      %v1619 = vadd.f32 %v1530, %v1618
      %1620 = vmatmul.bf16.gmra.mxu0 %v663
      %v1621 = vpop.f32.mrf.mxu0
      %v1622 = vadd.f32 %v1533, %v1621
      %v1623 = vpop.f32.mrf.mxu0
      %v1624 = vadd.f32 %v1535, %v1623
      %1625 = vmatmul.bf16.gmra.mxu0 %v667
      %v1626 = vpop.f32.mrf.mxu0
      %v1627 = vadd.f32 %v1538, %v1626
      %v1628 = vpop.f32.mrf.mxu0
      %v1629 = vadd.f32 %v1540, %v1628
      %1630 = vmatmul.bf16.gmra.mxu0 %v671
      %v1631 = vpop.f32.mrf.mxu0
      %v1632 = vadd.f32 %v1543, %v1631
      %v1633 = vpop.f32.mrf.mxu0
      %v1634 = vadd.f32 %v1545, %v1633
      %1635 = vmatmul.bf16.gmra.mxu0 %v675
      %v1636 = vpop.f32.mrf.mxu0
      %v1637 = vadd.f32 %v1548, %v1636
      %v1638 = vpop.f32.mrf.mxu0
      %v1639 = vadd.f32 %v1550, %v1638
      %1640 = vmatmul.bf16.gmra.mxu0 %v679
      %v1641 = vpop.f32.mrf.mxu0
      %v1642 = vadd.f32 %v1553, %v1641
      %v1643 = vpop.f32.mrf.mxu0
      %v1644 = vadd.f32 %v1555, %v1643
      %1645 = vmatmul.bf16.gmra.mxu0 %v683
      %v1646 = vpop.f32.mrf.mxu0
      %v1647 = vadd.f32 %v1558, %v1646
      %v1648 = vpop.f32.mrf.mxu0
      %v1649 = vadd.f32 %v1560, %v1648
      %1650 = vmatmul.bf16.gmra.mxu0 %v687
      %v1651 = vpop.f32.mrf.mxu0
      %v1652 = vadd.f32 %v1563, %v1651
      %v1653 = vpop.f32.mrf.mxu0
      %v1654 = vadd.f32 %v1565, %v1653
      %1655 = vmatmul.bf16.gmra.mxu0 %v691
      %v1656 = vpop.f32.mrf.mxu0
      %v1657 = vadd.f32 %v1568, %v1656
      %v1658 = vpop.f32.mrf.mxu0
      %v1659 = vadd.f32 %v1570, %v1658
      %1660 = vmatmul.bf16.gmra.mxu0 %v695
      %v1661 = vpop.f32.mrf.mxu0
      %v1662 = vadd.f32 %v1573, %v1661
      %v1663 = vpop.f32.mrf.mxu0
      %v1664 = vadd.f32 %v1575, %v1663
      %1665 = vmatmul.bf16.gmra.mxu0 %v699
      %v1666 = vpop.f32.mrf.mxu0
      %v1667 = vadd.f32 %v1578, %v1666
      %v1668 = vpop.f32.mrf.mxu0
      %v1669 = vadd.f32 %v1580, %v1668
      %1670 = vmatmul.bf16.gmra.mxu0 %v703
      %v1671 = vpop.f32.mrf.mxu0
      %v1672 = vadd.f32 %v1583, %v1671
      %v1673 = vpop.f32.mrf.mxu0
      %v1674 = vadd.f32 %v1585, %v1673
      %1675 = vdwg.mxu0
      %1676 = vmatpush.bf16.msra.mxu0 %v1277
      %1677 = vmatpush.bf16.msra.mxu0 %v1273
      %1678 = vmatpush.bf16.msra.mxu0 %v1269
      %1679 = vmatpush.bf16.msra.mxu0 %v1265
      %1680 = vmatpush.bf16.msra.mxu0 %v1261
      %1681 = vmatpush.bf16.msra.mxu0 %v1257
      %1682 = vmatpush.bf16.msra.mxu0 %v1253
      %1683 = vmatpush.bf16.msra.mxu0 %v1249
      %1684 = vmatmul.bf16.gmra.mxu0 %v644
      %v1685 = vpop.f32.mrf.mxu0
      %v1686 = vadd.f32 %v1597, %v1685
      %v1687 = vpop.f32.mrf.mxu0
      %v1688 = vadd.f32 %v1599, %v1687
      %1689 = vmatmul.bf16.gmra.mxu0 %v648
      %v1690 = vpop.f32.mrf.mxu0
      %v1691 = vadd.f32 %v1602, %v1690
      %v1692 = vpop.f32.mrf.mxu0
      %v1693 = vadd.f32 %v1604, %v1692
      %1694 = vmatmul.bf16.gmra.mxu0 %v652
      %v1695 = vpop.f32.mrf.mxu0
      %v1696 = vadd.f32 %v1607, %v1695
      %v1697 = vpop.f32.mrf.mxu0
      %v1698 = vadd.f32 %v1609, %v1697
      %1699 = vmatmul.bf16.gmra.mxu0 %v656
      %v1700 = vpop.f32.mrf.mxu0
      %v1701 = vadd.f32 %v1612, %v1700
      %v1702 = vpop.f32.mrf.mxu0
      %v1703 = vadd.f32 %v1614, %v1702
      %1704 = vmatmul.bf16.gmra.mxu0 %v660
      %v1705 = vpop.f32.mrf.mxu0
      %v1706 = vadd.f32 %v1617, %v1705
      %v1707 = vpop.f32.mrf.mxu0
      %v1708 = vadd.f32 %v1619, %v1707
      %1709 = vmatmul.bf16.gmra.mxu0 %v664
      %v1710 = vpop.f32.mrf.mxu0
      %v1711 = vadd.f32 %v1622, %v1710
      %v1712 = vpop.f32.mrf.mxu0
      %v1713 = vadd.f32 %v1624, %v1712
      %1714 = vmatmul.bf16.gmra.mxu0 %v668
      %v1715 = vpop.f32.mrf.mxu0
      %v1716 = vadd.f32 %v1627, %v1715
      %v1717 = vpop.f32.mrf.mxu0
      %v1718 = vadd.f32 %v1629, %v1717
      %1719 = vmatmul.bf16.gmra.mxu0 %v672
      %v1720 = vpop.f32.mrf.mxu0
      %v1721 = vadd.f32 %v1632, %v1720
      %v1722 = vpop.f32.mrf.mxu0
      %v1723 = vadd.f32 %v1634, %v1722
      %1724 = vmatmul.bf16.gmra.mxu0 %v676
      %v1725 = vpop.f32.mrf.mxu0
      %v1726 = vadd.f32 %v1637, %v1725
      %v1727 = vpop.f32.mrf.mxu0
      %v1728 = vadd.f32 %v1639, %v1727
      %1729 = vmatmul.bf16.gmra.mxu0 %v680
      %v1730 = vpop.f32.mrf.mxu0
      %v1731 = vadd.f32 %v1642, %v1730
      %v1732 = vpop.f32.mrf.mxu0
      %v1733 = vadd.f32 %v1644, %v1732
      %1734 = vmatmul.bf16.gmra.mxu0 %v684
      %v1735 = vpop.f32.mrf.mxu0
      %v1736 = vadd.f32 %v1647, %v1735
      %v1737 = vpop.f32.mrf.mxu0
      %v1738 = vadd.f32 %v1649, %v1737
      %1739 = vmatmul.bf16.gmra.mxu0 %v688
      %v1740 = vpop.f32.mrf.mxu0
      %v1741 = vadd.f32 %v1652, %v1740
      %v1742 = vpop.f32.mrf.mxu0
      %v1743 = vadd.f32 %v1654, %v1742
      %1744 = vmatmul.bf16.gmra.mxu0 %v692
      %v1745 = vpop.f32.mrf.mxu0
      %v1746 = vadd.f32 %v1657, %v1745
      %v1747 = vpop.f32.mrf.mxu0
      %v1748 = vadd.f32 %v1659, %v1747
      %1749 = vmatmul.bf16.gmra.mxu0 %v696
      %v1750 = vpop.f32.mrf.mxu0
      %v1751 = vadd.f32 %v1662, %v1750
      %v1752 = vpop.f32.mrf.mxu0
      %v1753 = vadd.f32 %v1664, %v1752
      %1754 = vmatmul.bf16.gmra.mxu0 %v700
      %v1755 = vpop.f32.mrf.mxu0
      %v1756 = vadd.f32 %v1667, %v1755
      %v1757 = vpop.f32.mrf.mxu0
      %v1758 = vadd.f32 %v1669, %v1757
      %1759 = vmatmul.bf16.gmra.mxu0 %v704
      %v1760 = vpop.f32.mrf.mxu0
      %v1761 = vadd.f32 %v1672, %v1760
      %v1762 = vpop.f32.mrf.mxu0
      %v1763 = vadd.f32 %v1674, %v1762
      %1764 = vdwg.mxu0
      %1765 = vmatpush.bf16.msra.mxu0 %v1182
      %1766 = vmatpush.bf16.msra.mxu0 %v1178
      %1767 = vmatpush.bf16.msra.mxu0 %v1174
      %1768 = vmatpush.bf16.msra.mxu0 %v1170
      %1769 = vmatpush.bf16.msra.mxu0 %v1166
      %1770 = vmatpush.bf16.msra.mxu0 %v1162
      %1771 = vmatpush.bf16.msra.mxu0 %v1158
      %1772 = vmatpush.bf16.msra.mxu0 %v1154
      %1773 = vmatmul.bf16.gmra.mxu0 %v641
      %v1774 = vpop.f32.mrf.mxu0
      %v1775 = vadd.f32 0.0, %v1774
      %v1776 = vpop.f32.mrf.mxu0
      %v1777 = vadd.f32 0.0, %v1776
      %1778 = vmatmul.bf16.gmra.mxu0 %v645
      %v1779 = vpop.f32.mrf.mxu0
      %v1780 = vadd.f32 0.0, %v1779
      %v1781 = vpop.f32.mrf.mxu0
      %v1782 = vadd.f32 0.0, %v1781
      %1783 = vmatmul.bf16.gmra.mxu0 %v649
      %v1784 = vpop.f32.mrf.mxu0
      %v1785 = vadd.f32 0.0, %v1784
      %v1786 = vpop.f32.mrf.mxu0
      %v1787 = vadd.f32 0.0, %v1786
      %1788 = vmatmul.bf16.gmra.mxu0 %v653
      %v1789 = vpop.f32.mrf.mxu0
      %v1790 = vadd.f32 0.0, %v1789
      %v1791 = vpop.f32.mrf.mxu0
      %v1792 = vadd.f32 0.0, %v1791
      %1793 = vmatmul.bf16.gmra.mxu0 %v657
      %v1794 = vpop.f32.mrf.mxu0
      %v1795 = vadd.f32 0.0, %v1794
      %v1796 = vpop.f32.mrf.mxu0
      %v1797 = vadd.f32 0.0, %v1796
      %1798 = vmatmul.bf16.gmra.mxu0 %v661
      %v1799 = vpop.f32.mrf.mxu0
      %v1800 = vadd.f32 0.0, %v1799
      %v1801 = vpop.f32.mrf.mxu0
      %v1802 = vadd.f32 0.0, %v1801
      %1803 = vmatmul.bf16.gmra.mxu0 %v665
      %v1804 = vpop.f32.mrf.mxu0
      %v1805 = vadd.f32 0.0, %v1804
      %v1806 = vpop.f32.mrf.mxu0
      %v1807 = vadd.f32 0.0, %v1806
      %1808 = vmatmul.bf16.gmra.mxu0 %v669
      %v1809 = vpop.f32.mrf.mxu0
      %v1810 = vadd.f32 0.0, %v1809
      %v1811 = vpop.f32.mrf.mxu0
      %v1812 = vadd.f32 0.0, %v1811
      %1813 = vmatmul.bf16.gmra.mxu0 %v673
      %v1814 = vpop.f32.mrf.mxu0
      %v1815 = vadd.f32 0.0, %v1814
      %v1816 = vpop.f32.mrf.mxu0
      %v1817 = vadd.f32 0.0, %v1816
      %1818 = vmatmul.bf16.gmra.mxu0 %v677
      %v1819 = vpop.f32.mrf.mxu0
      %v1820 = vadd.f32 0.0, %v1819
      %v1821 = vpop.f32.mrf.mxu0
      %v1822 = vadd.f32 0.0, %v1821
      %1823 = vmatmul.bf16.gmra.mxu0 %v681
      %v1824 = vpop.f32.mrf.mxu0
      %v1825 = vadd.f32 0.0, %v1824
      %v1826 = vpop.f32.mrf.mxu0
      %v1827 = vadd.f32 0.0, %v1826
      %1828 = vmatmul.bf16.gmra.mxu0 %v685
      %v1829 = vpop.f32.mrf.mxu0
      %v1830 = vadd.f32 0.0, %v1829
      %v1831 = vpop.f32.mrf.mxu0
      %v1832 = vadd.f32 0.0, %v1831
      %1833 = vmatmul.bf16.gmra.mxu0 %v689
      %v1834 = vpop.f32.mrf.mxu0
      %v1835 = vadd.f32 0.0, %v1834
      %v1836 = vpop.f32.mrf.mxu0
      %v1837 = vadd.f32 0.0, %v1836
      %1838 = vmatmul.bf16.gmra.mxu0 %v693
      %v1839 = vpop.f32.mrf.mxu0
      %v1840 = vadd.f32 0.0, %v1839
      %v1841 = vpop.f32.mrf.mxu0
      %v1842 = vadd.f32 0.0, %v1841
      %1843 = vmatmul.bf16.gmra.mxu0 %v697
      %v1844 = vpop.f32.mrf.mxu0
      %v1845 = vadd.f32 0.0, %v1844
      %v1846 = vpop.f32.mrf.mxu0
      %v1847 = vadd.f32 0.0, %v1846
      %1848 = vmatmul.bf16.gmra.mxu0 %v701
      %v1849 = vpop.f32.mrf.mxu0
      %v1850 = vadd.f32 0.0, %v1849
      %v1851 = vpop.f32.mrf.mxu0
      %v1852 = vadd.f32 0.0, %v1851
      %1853 = vdwg.mxu0
      %1854 = vmatpush.bf16.msra.mxu0 %v1214
      %1855 = vmatpush.bf16.msra.mxu0 %v1210
      %1856 = vmatpush.bf16.msra.mxu0 %v1206
      %1857 = vmatpush.bf16.msra.mxu0 %v1202
      %1858 = vmatpush.bf16.msra.mxu0 %v1198
      %1859 = vmatpush.bf16.msra.mxu0 %v1194
      %1860 = vmatpush.bf16.msra.mxu0 %v1190
      %1861 = vmatpush.bf16.msra.mxu0 %v1186
      %1862 = vmatmul.bf16.gmra.mxu0 %v642
      %v1863 = vpop.f32.mrf.mxu0
      %v1864 = vadd.f32 %v1775, %v1863
      %v1865 = vpop.f32.mrf.mxu0
      %v1866 = vadd.f32 %v1777, %v1865
      %1867 = vmatmul.bf16.gmra.mxu0 %v646
      %v1868 = vpop.f32.mrf.mxu0
      %v1869 = vadd.f32 %v1780, %v1868
      %v1870 = vpop.f32.mrf.mxu0
      %v1871 = vadd.f32 %v1782, %v1870
      %1872 = vmatmul.bf16.gmra.mxu0 %v650
      %v1873 = vpop.f32.mrf.mxu0
      %v1874 = vadd.f32 %v1785, %v1873
      %v1875 = vpop.f32.mrf.mxu0
      %v1876 = vadd.f32 %v1787, %v1875
      %1877 = vmatmul.bf16.gmra.mxu0 %v654
      %v1878 = vpop.f32.mrf.mxu0
      %v1879 = vadd.f32 %v1790, %v1878
      %v1880 = vpop.f32.mrf.mxu0
      %v1881 = vadd.f32 %v1792, %v1880
      %1882 = vmatmul.bf16.gmra.mxu0 %v658
      %v1883 = vpop.f32.mrf.mxu0
      %v1884 = vadd.f32 %v1795, %v1883
      %v1885 = vpop.f32.mrf.mxu0
      %v1886 = vadd.f32 %v1797, %v1885
      %1887 = vmatmul.bf16.gmra.mxu0 %v662
      %v1888 = vpop.f32.mrf.mxu0
      %v1889 = vadd.f32 %v1800, %v1888
      %v1890 = vpop.f32.mrf.mxu0
      %v1891 = vadd.f32 %v1802, %v1890
      %1892 = vmatmul.bf16.gmra.mxu0 %v666
      %v1893 = vpop.f32.mrf.mxu0
      %v1894 = vadd.f32 %v1805, %v1893
      %v1895 = vpop.f32.mrf.mxu0
      %v1896 = vadd.f32 %v1807, %v1895
      %1897 = vmatmul.bf16.gmra.mxu0 %v670
      %v1898 = vpop.f32.mrf.mxu0
      %v1899 = vadd.f32 %v1810, %v1898
      %v1900 = vpop.f32.mrf.mxu0
      %v1901 = vadd.f32 %v1812, %v1900
      %1902 = vmatmul.bf16.gmra.mxu0 %v674
      %v1903 = vpop.f32.mrf.mxu0
      %v1904 = vadd.f32 %v1815, %v1903
      %v1905 = vpop.f32.mrf.mxu0
      %v1906 = vadd.f32 %v1817, %v1905
      %1907 = vmatmul.bf16.gmra.mxu0 %v678
      %v1908 = vpop.f32.mrf.mxu0
      %v1909 = vadd.f32 %v1820, %v1908
      %v1910 = vpop.f32.mrf.mxu0
      %v1911 = vadd.f32 %v1822, %v1910
      %1912 = vmatmul.bf16.gmra.mxu0 %v682
      %v1913 = vpop.f32.mrf.mxu0
      %v1914 = vadd.f32 %v1825, %v1913
      %v1915 = vpop.f32.mrf.mxu0
      %v1916 = vadd.f32 %v1827, %v1915
      %1917 = vmatmul.bf16.gmra.mxu0 %v686
      %v1918 = vpop.f32.mrf.mxu0
      %v1919 = vadd.f32 %v1830, %v1918
      %v1920 = vpop.f32.mrf.mxu0
      %v1921 = vadd.f32 %v1832, %v1920
      %1922 = vmatmul.bf16.gmra.mxu0 %v690
      %v1923 = vpop.f32.mrf.mxu0
      %v1924 = vadd.f32 %v1835, %v1923
      %v1925 = vpop.f32.mrf.mxu0
      %v1926 = vadd.f32 %v1837, %v1925
      %1927 = vmatmul.bf16.gmra.mxu0 %v694
      %v1928 = vpop.f32.mrf.mxu0
      %v1929 = vadd.f32 %v1840, %v1928
      %v1930 = vpop.f32.mrf.mxu0
      %v1931 = vadd.f32 %v1842, %v1930
      %1932 = vmatmul.bf16.gmra.mxu0 %v698
      %v1933 = vpop.f32.mrf.mxu0
      %v1934 = vadd.f32 %v1845, %v1933
      %v1935 = vpop.f32.mrf.mxu0
      %v1936 = vadd.f32 %v1847, %v1935
      %1937 = vmatmul.bf16.gmra.mxu0 %v702
      %v1938 = vpop.f32.mrf.mxu0
      %v1939 = vadd.f32 %v1850, %v1938
      %v1940 = vpop.f32.mrf.mxu0
      %v1941 = vadd.f32 %v1852, %v1940
      %1942 = vdwg.mxu0
      %1943 = vmatpush.bf16.msra.mxu0 %v1246
      %1944 = vmatpush.bf16.msra.mxu0 %v1242
      %1945 = vmatpush.bf16.msra.mxu0 %v1238
      %1946 = vmatpush.bf16.msra.mxu0 %v1234
      %1947 = vmatpush.bf16.msra.mxu0 %v1230
      %1948 = vmatpush.bf16.msra.mxu0 %v1226
      %1949 = vmatpush.bf16.msra.mxu0 %v1222
      %1950 = vmatpush.bf16.msra.mxu0 %v1218
      %1951 = vmatmul.bf16.gmra.mxu0 %v643
      %v1952 = vpop.f32.mrf.mxu0
      %v1953 = vadd.f32 %v1864, %v1952
      %v1954 = vpop.f32.mrf.mxu0
      %v1955 = vadd.f32 %v1866, %v1954
      %1956 = vmatmul.bf16.gmra.mxu0 %v647
      %v1957 = vpop.f32.mrf.mxu0
      %v1958 = vadd.f32 %v1869, %v1957
      %v1959 = vpop.f32.mrf.mxu0
      %v1960 = vadd.f32 %v1871, %v1959
      %1961 = vmatmul.bf16.gmra.mxu0 %v651
      %v1962 = vpop.f32.mrf.mxu0
      %v1963 = vadd.f32 %v1874, %v1962
      %v1964 = vpop.f32.mrf.mxu0
      %v1965 = vadd.f32 %v1876, %v1964
      %1966 = vmatmul.bf16.gmra.mxu0 %v655
      %v1967 = vpop.f32.mrf.mxu0
      %v1968 = vadd.f32 %v1879, %v1967
      %v1969 = vpop.f32.mrf.mxu0
      %v1970 = vadd.f32 %v1881, %v1969
      %1971 = vmatmul.bf16.gmra.mxu0 %v659
      %v1972 = vpop.f32.mrf.mxu0
      %v1973 = vadd.f32 %v1884, %v1972
      %v1974 = vpop.f32.mrf.mxu0
      %v1975 = vadd.f32 %v1886, %v1974
      %1976 = vmatmul.bf16.gmra.mxu0 %v663
      %v1977 = vpop.f32.mrf.mxu0
      %v1978 = vadd.f32 %v1889, %v1977
      %v1979 = vpop.f32.mrf.mxu0
      %v1980 = vadd.f32 %v1891, %v1979
      %1981 = vmatmul.bf16.gmra.mxu0 %v667
      %v1982 = vpop.f32.mrf.mxu0
      %v1983 = vadd.f32 %v1894, %v1982
      %v1984 = vpop.f32.mrf.mxu0
      %v1985 = vadd.f32 %v1896, %v1984
      %1986 = vmatmul.bf16.gmra.mxu0 %v671
      %v1987 = vpop.f32.mrf.mxu0
      %v1988 = vadd.f32 %v1899, %v1987
      %v1989 = vpop.f32.mrf.mxu0
      %v1990 = vadd.f32 %v1901, %v1989
      %1991 = vmatmul.bf16.gmra.mxu0 %v675
      %v1992 = vpop.f32.mrf.mxu0
      %v1993 = vadd.f32 %v1904, %v1992
      %v1994 = vpop.f32.mrf.mxu0
      %v1995 = vadd.f32 %v1906, %v1994
      %1996 = vmatmul.bf16.gmra.mxu0 %v679
      %v1997 = vpop.f32.mrf.mxu0
      %v1998 = vadd.f32 %v1909, %v1997
      %v1999 = vpop.f32.mrf.mxu0
      %v2000 = vadd.f32 %v1911, %v1999
      %2001 = vmatmul.bf16.gmra.mxu0 %v683
      %v2002 = vpop.f32.mrf.mxu0
      %v2003 = vadd.f32 %v1914, %v2002
      %v2004 = vpop.f32.mrf.mxu0
      %v2005 = vadd.f32 %v1916, %v2004
      %2006 = vmatmul.bf16.gmra.mxu0 %v687
      %v2007 = vpop.f32.mrf.mxu0
      %v2008 = vadd.f32 %v1919, %v2007
      %v2009 = vpop.f32.mrf.mxu0
      %v2010 = vadd.f32 %v1921, %v2009
      %2011 = vmatmul.bf16.gmra.mxu0 %v691
      %v2012 = vpop.f32.mrf.mxu0
      %v2013 = vadd.f32 %v1924, %v2012
      %v2014 = vpop.f32.mrf.mxu0
      %v2015 = vadd.f32 %v1926, %v2014
      %2016 = vmatmul.bf16.gmra.mxu0 %v695
      %v2017 = vpop.f32.mrf.mxu0
      %v2018 = vadd.f32 %v1929, %v2017
      %v2019 = vpop.f32.mrf.mxu0
      %v2020 = vadd.f32 %v1931, %v2019
      %2021 = vmatmul.bf16.gmra.mxu0 %v699
      %v2022 = vpop.f32.mrf.mxu0
      %v2023 = vadd.f32 %v1934, %v2022
      %v2024 = vpop.f32.mrf.mxu0
      %v2025 = vadd.f32 %v1936, %v2024
      %2026 = vmatmul.bf16.gmra.mxu0 %v703
      %v2027 = vpop.f32.mrf.mxu0
      %v2028 = vadd.f32 %v1939, %v2027
      %v2029 = vpop.f32.mrf.mxu0
      %v2030 = vadd.f32 %v1941, %v2029
      %2031 = vdwg.mxu0
      %2032 = vmatpush.bf16.msra.mxu0 %v1278
      %2033 = vmatpush.bf16.msra.mxu0 %v1274
      %2034 = vmatpush.bf16.msra.mxu0 %v1270
      %2035 = vmatpush.bf16.msra.mxu0 %v1266
      %2036 = vmatpush.bf16.msra.mxu0 %v1262
      %2037 = vmatpush.bf16.msra.mxu0 %v1258
      %2038 = vmatpush.bf16.msra.mxu0 %v1254
      %2039 = vmatpush.bf16.msra.mxu0 %v1250
      %2040 = vmatmul.bf16.gmra.mxu0 %v644
      %v2041 = vpop.f32.mrf.mxu0
      %v2042 = vadd.f32 %v1953, %v2041
      %v2043 = vpop.f32.mrf.mxu0
      %v2044 = vadd.f32 %v1955, %v2043
      %2045 = vmatmul.bf16.gmra.mxu0 %v648
      %v2046 = vpop.f32.mrf.mxu0
      %v2047 = vadd.f32 %v1958, %v2046
      %v2048 = vpop.f32.mrf.mxu0
      %v2049 = vadd.f32 %v1960, %v2048
      %2050 = vmatmul.bf16.gmra.mxu0 %v652
      %v2051 = vpop.f32.mrf.mxu0
      %v2052 = vadd.f32 %v1963, %v2051
      %v2053 = vpop.f32.mrf.mxu0
      %v2054 = vadd.f32 %v1965, %v2053
      %2055 = vmatmul.bf16.gmra.mxu0 %v656
      %v2056 = vpop.f32.mrf.mxu0
      %v2057 = vadd.f32 %v1968, %v2056
      %v2058 = vpop.f32.mrf.mxu0
      %v2059 = vadd.f32 %v1970, %v2058
      %2060 = vmatmul.bf16.gmra.mxu0 %v660
      %v2061 = vpop.f32.mrf.mxu0
      %v2062 = vadd.f32 %v1973, %v2061
      %v2063 = vpop.f32.mrf.mxu0
      %v2064 = vadd.f32 %v1975, %v2063
      %2065 = vmatmul.bf16.gmra.mxu0 %v664
      %v2066 = vpop.f32.mrf.mxu0
      %v2067 = vadd.f32 %v1978, %v2066
      %v2068 = vpop.f32.mrf.mxu0
      %v2069 = vadd.f32 %v1980, %v2068
      %2070 = vmatmul.bf16.gmra.mxu0 %v668
      %v2071 = vpop.f32.mrf.mxu0
      %v2072 = vadd.f32 %v1983, %v2071
      %v2073 = vpop.f32.mrf.mxu0
      %v2074 = vadd.f32 %v1985, %v2073
      %2075 = vmatmul.bf16.gmra.mxu0 %v672
      %v2076 = vpop.f32.mrf.mxu0
      %v2077 = vadd.f32 %v1988, %v2076
      %v2078 = vpop.f32.mrf.mxu0
      %v2079 = vadd.f32 %v1990, %v2078
      %2080 = vmatmul.bf16.gmra.mxu0 %v676
      %v2081 = vpop.f32.mrf.mxu0
      %v2082 = vadd.f32 %v1993, %v2081
      %v2083 = vpop.f32.mrf.mxu0
      %v2084 = vadd.f32 %v1995, %v2083
      %2085 = vmatmul.bf16.gmra.mxu0 %v680
      %v2086 = vpop.f32.mrf.mxu0
      %v2087 = vadd.f32 %v1998, %v2086
      %v2088 = vpop.f32.mrf.mxu0
      %v2089 = vadd.f32 %v2000, %v2088
      %2090 = vmatmul.bf16.gmra.mxu0 %v684
      %v2091 = vpop.f32.mrf.mxu0
      %v2092 = vadd.f32 %v2003, %v2091
      %v2093 = vpop.f32.mrf.mxu0
      %v2094 = vadd.f32 %v2005, %v2093
      %2095 = vmatmul.bf16.gmra.mxu0 %v688
      %v2096 = vpop.f32.mrf.mxu0
      %v2097 = vadd.f32 %v2008, %v2096
      %v2098 = vpop.f32.mrf.mxu0
      %v2099 = vadd.f32 %v2010, %v2098
      %2100 = vmatmul.bf16.gmra.mxu0 %v692
      %v2101 = vpop.f32.mrf.mxu0
      %v2102 = vadd.f32 %v2013, %v2101
      %v2103 = vpop.f32.mrf.mxu0
      %v2104 = vadd.f32 %v2015, %v2103
      %2105 = vmatmul.bf16.gmra.mxu0 %v696
      %v2106 = vpop.f32.mrf.mxu0
      %v2107 = vadd.f32 %v2018, %v2106
      %v2108 = vpop.f32.mrf.mxu0
      %v2109 = vadd.f32 %v2020, %v2108
      %2110 = vmatmul.bf16.gmra.mxu0 %v700
      %v2111 = vpop.f32.mrf.mxu0
      %v2112 = vadd.f32 %v2023, %v2111
      %v2113 = vpop.f32.mrf.mxu0
      %v2114 = vadd.f32 %v2025, %v2113
      %2115 = vmatmul.bf16.gmra.mxu0 %v704
      %v2116 = vpop.f32.mrf.mxu0
      %v2117 = vadd.f32 %v2028, %v2116
      %v2118 = vpop.f32.mrf.mxu0
      %v2119 = vadd.f32 %v2030, %v2118
      %2120 = vdwg.mxu0
      %2121 = vmatpush.bf16.msra.mxu0 %v1183
      %2122 = vmatpush.bf16.msra.mxu0 %v1179
      %2123 = vmatpush.bf16.msra.mxu0 %v1175
      %2124 = vmatpush.bf16.msra.mxu0 %v1171
      %2125 = vmatpush.bf16.msra.mxu0 %v1167
      %2126 = vmatpush.bf16.msra.mxu0 %v1163
      %2127 = vmatpush.bf16.msra.mxu0 %v1159
      %2128 = vmatpush.bf16.msra.mxu0 %v1155
      %2129 = vmatmul.bf16.gmra.mxu0 %v641
      %v2130 = vpop.f32.mrf.mxu0
      %v2131 = vadd.f32 0.0, %v2130
      %v2132 = vpop.f32.mrf.mxu0
      %v2133 = vadd.f32 0.0, %v2132
      %2134 = vmatmul.bf16.gmra.mxu0 %v645
      %v2135 = vpop.f32.mrf.mxu0
      %v2136 = vadd.f32 0.0, %v2135
      %v2137 = vpop.f32.mrf.mxu0
      %v2138 = vadd.f32 0.0, %v2137
      %2139 = vmatmul.bf16.gmra.mxu0 %v649
      %v2140 = vpop.f32.mrf.mxu0
      %v2141 = vadd.f32 0.0, %v2140
      %v2142 = vpop.f32.mrf.mxu0
      %v2143 = vadd.f32 0.0, %v2142
      %2144 = vmatmul.bf16.gmra.mxu0 %v653
      %v2145 = vpop.f32.mrf.mxu0
      %v2146 = vadd.f32 0.0, %v2145
      %v2147 = vpop.f32.mrf.mxu0
      %v2148 = vadd.f32 0.0, %v2147
      %2149 = vmatmul.bf16.gmra.mxu0 %v657
      %v2150 = vpop.f32.mrf.mxu0
      %v2151 = vadd.f32 0.0, %v2150
      %v2152 = vpop.f32.mrf.mxu0
      %v2153 = vadd.f32 0.0, %v2152
      %2154 = vmatmul.bf16.gmra.mxu0 %v661
      %v2155 = vpop.f32.mrf.mxu0
      %v2156 = vadd.f32 0.0, %v2155
      %v2157 = vpop.f32.mrf.mxu0
      %v2158 = vadd.f32 0.0, %v2157
      %2159 = vmatmul.bf16.gmra.mxu0 %v665
      %v2160 = vpop.f32.mrf.mxu0
      %v2161 = vadd.f32 0.0, %v2160
      %v2162 = vpop.f32.mrf.mxu0
      %v2163 = vadd.f32 0.0, %v2162
      %2164 = vmatmul.bf16.gmra.mxu0 %v669
      %v2165 = vpop.f32.mrf.mxu0
      %v2166 = vadd.f32 0.0, %v2165
      %v2167 = vpop.f32.mrf.mxu0
      %v2168 = vadd.f32 0.0, %v2167
      %2169 = vmatmul.bf16.gmra.mxu0 %v673
      %v2170 = vpop.f32.mrf.mxu0
      %v2171 = vadd.f32 0.0, %v2170
      %v2172 = vpop.f32.mrf.mxu0
      %v2173 = vadd.f32 0.0, %v2172
      %2174 = vmatmul.bf16.gmra.mxu0 %v677
      %v2175 = vpop.f32.mrf.mxu0
      %v2176 = vadd.f32 0.0, %v2175
      %v2177 = vpop.f32.mrf.mxu0
      %v2178 = vadd.f32 0.0, %v2177
      %2179 = vmatmul.bf16.gmra.mxu0 %v681
      %v2180 = vpop.f32.mrf.mxu0
      %v2181 = vadd.f32 0.0, %v2180
      %v2182 = vpop.f32.mrf.mxu0
      %v2183 = vadd.f32 0.0, %v2182
      %2184 = vmatmul.bf16.gmra.mxu0 %v685
      %v2185 = vpop.f32.mrf.mxu0
      %v2186 = vadd.f32 0.0, %v2185
      %v2187 = vpop.f32.mrf.mxu0
      %v2188 = vadd.f32 0.0, %v2187
      %2189 = vmatmul.bf16.gmra.mxu0 %v689
      %v2190 = vpop.f32.mrf.mxu0
      %v2191 = vadd.f32 0.0, %v2190
      %v2192 = vpop.f32.mrf.mxu0
      %v2193 = vadd.f32 0.0, %v2192
      %2194 = vmatmul.bf16.gmra.mxu0 %v693
      %v2195 = vpop.f32.mrf.mxu0
      %v2196 = vadd.f32 0.0, %v2195
      %v2197 = vpop.f32.mrf.mxu0
      %v2198 = vadd.f32 0.0, %v2197
      %2199 = vmatmul.bf16.gmra.mxu0 %v697
      %v2200 = vpop.f32.mrf.mxu0
      %v2201 = vadd.f32 0.0, %v2200
      %v2202 = vpop.f32.mrf.mxu0
      %v2203 = vadd.f32 0.0, %v2202
      %2204 = vmatmul.bf16.gmra.mxu0 %v701
      %v2205 = vpop.f32.mrf.mxu0
      %v2206 = vadd.f32 0.0, %v2205
      %v2207 = vpop.f32.mrf.mxu0
      %v2208 = vadd.f32 0.0, %v2207
      %2209 = vdwg.mxu0
      %2210 = vmatpush.bf16.msra.mxu0 %v1215
      %2211 = vmatpush.bf16.msra.mxu0 %v1211
      %2212 = vmatpush.bf16.msra.mxu0 %v1207
      %2213 = vmatpush.bf16.msra.mxu0 %v1203
      %2214 = vmatpush.bf16.msra.mxu0 %v1199
      %2215 = vmatpush.bf16.msra.mxu0 %v1195
      %2216 = vmatpush.bf16.msra.mxu0 %v1191
      %2217 = vmatpush.bf16.msra.mxu0 %v1187
      %2218 = vmatmul.bf16.gmra.mxu0 %v642
      %v2219 = vpop.f32.mrf.mxu0
      %v2220 = vadd.f32 %v2131, %v2219
      %v2221 = vpop.f32.mrf.mxu0
      %v2222 = vadd.f32 %v2133, %v2221
      %2223 = vmatmul.bf16.gmra.mxu0 %v646
      %v2224 = vpop.f32.mrf.mxu0
      %v2225 = vadd.f32 %v2136, %v2224
      %v2226 = vpop.f32.mrf.mxu0
      %v2227 = vadd.f32 %v2138, %v2226
      %2228 = vmatmul.bf16.gmra.mxu0 %v650
      %v2229 = vpop.f32.mrf.mxu0
      %v2230 = vadd.f32 %v2141, %v2229
      %v2231 = vpop.f32.mrf.mxu0
      %v2232 = vadd.f32 %v2143, %v2231
      %2233 = vmatmul.bf16.gmra.mxu0 %v654
      %v2234 = vpop.f32.mrf.mxu0
      %v2235 = vadd.f32 %v2146, %v2234
      %v2236 = vpop.f32.mrf.mxu0
      %v2237 = vadd.f32 %v2148, %v2236
      %2238 = vmatmul.bf16.gmra.mxu0 %v658
      %v2239 = vpop.f32.mrf.mxu0
      %v2240 = vadd.f32 %v2151, %v2239
      %v2241 = vpop.f32.mrf.mxu0
      %v2242 = vadd.f32 %v2153, %v2241
      %2243 = vmatmul.bf16.gmra.mxu0 %v662
      %v2244 = vpop.f32.mrf.mxu0
      %v2245 = vadd.f32 %v2156, %v2244
      %v2246 = vpop.f32.mrf.mxu0
      %v2247 = vadd.f32 %v2158, %v2246
      %2248 = vmatmul.bf16.gmra.mxu0 %v666
      %v2249 = vpop.f32.mrf.mxu0
      %v2250 = vadd.f32 %v2161, %v2249
      %v2251 = vpop.f32.mrf.mxu0
      %v2252 = vadd.f32 %v2163, %v2251
      %2253 = vmatmul.bf16.gmra.mxu0 %v670
      %v2254 = vpop.f32.mrf.mxu0
      %v2255 = vadd.f32 %v2166, %v2254
      %v2256 = vpop.f32.mrf.mxu0
      %v2257 = vadd.f32 %v2168, %v2256
      %2258 = vmatmul.bf16.gmra.mxu0 %v674
      %v2259 = vpop.f32.mrf.mxu0
      %v2260 = vadd.f32 %v2171, %v2259
      %v2261 = vpop.f32.mrf.mxu0
      %v2262 = vadd.f32 %v2173, %v2261
      %2263 = vmatmul.bf16.gmra.mxu0 %v678
      %v2264 = vpop.f32.mrf.mxu0
      %v2265 = vadd.f32 %v2176, %v2264
      %v2266 = vpop.f32.mrf.mxu0
      %v2267 = vadd.f32 %v2178, %v2266
      %2268 = vmatmul.bf16.gmra.mxu0 %v682
      %v2269 = vpop.f32.mrf.mxu0
      %v2270 = vadd.f32 %v2181, %v2269
      %v2271 = vpop.f32.mrf.mxu0
      %v2272 = vadd.f32 %v2183, %v2271
      %2273 = vmatmul.bf16.gmra.mxu0 %v686
      %v2274 = vpop.f32.mrf.mxu0
      %v2275 = vadd.f32 %v2186, %v2274
      %v2276 = vpop.f32.mrf.mxu0
      %v2277 = vadd.f32 %v2188, %v2276
      %2278 = vmatmul.bf16.gmra.mxu0 %v690
      %v2279 = vpop.f32.mrf.mxu0
      %v2280 = vadd.f32 %v2191, %v2279
      %v2281 = vpop.f32.mrf.mxu0
      %v2282 = vadd.f32 %v2193, %v2281
      %2283 = vmatmul.bf16.gmra.mxu0 %v694
      %v2284 = vpop.f32.mrf.mxu0
      %v2285 = vadd.f32 %v2196, %v2284
      %v2286 = vpop.f32.mrf.mxu0
      %v2287 = vadd.f32 %v2198, %v2286
      %2288 = vmatmul.bf16.gmra.mxu0 %v698
      %v2289 = vpop.f32.mrf.mxu0
      %v2290 = vadd.f32 %v2201, %v2289
      %v2291 = vpop.f32.mrf.mxu0
      %v2292 = vadd.f32 %v2203, %v2291
      %2293 = vmatmul.bf16.gmra.mxu0 %v702
      %v2294 = vpop.f32.mrf.mxu0
      %v2295 = vadd.f32 %v2206, %v2294
      %v2296 = vpop.f32.mrf.mxu0
      %v2297 = vadd.f32 %v2208, %v2296
      %2298 = vdwg.mxu0
      %2299 = vmatpush.bf16.msra.mxu0 %v1247
      %2300 = vmatpush.bf16.msra.mxu0 %v1243
      %2301 = vmatpush.bf16.msra.mxu0 %v1239
      %2302 = vmatpush.bf16.msra.mxu0 %v1235
      %2303 = vmatpush.bf16.msra.mxu0 %v1231
      %2304 = vmatpush.bf16.msra.mxu0 %v1227
      %2305 = vmatpush.bf16.msra.mxu0 %v1223
      %2306 = vmatpush.bf16.msra.mxu0 %v1219
      %2307 = vmatmul.bf16.gmra.mxu0 %v643
      %v2308 = vpop.f32.mrf.mxu0
      %v2309 = vadd.f32 %v2220, %v2308
      %v2310 = vpop.f32.mrf.mxu0
      %v2311 = vadd.f32 %v2222, %v2310
      %2312 = vmatmul.bf16.gmra.mxu0 %v647
      %v2313 = vpop.f32.mrf.mxu0
      %v2314 = vadd.f32 %v2225, %v2313
      %v2315 = vpop.f32.mrf.mxu0
      %v2316 = vadd.f32 %v2227, %v2315
      %2317 = vmatmul.bf16.gmra.mxu0 %v651
      %v2318 = vpop.f32.mrf.mxu0
      %v2319 = vadd.f32 %v2230, %v2318
      %v2320 = vpop.f32.mrf.mxu0
      %v2321 = vadd.f32 %v2232, %v2320
      %2322 = vmatmul.bf16.gmra.mxu0 %v655
      %v2323 = vpop.f32.mrf.mxu0
      %v2324 = vadd.f32 %v2235, %v2323
      %v2325 = vpop.f32.mrf.mxu0
      %v2326 = vadd.f32 %v2237, %v2325
      %2327 = vmatmul.bf16.gmra.mxu0 %v659
      %v2328 = vpop.f32.mrf.mxu0
      %v2329 = vadd.f32 %v2240, %v2328
      %v2330 = vpop.f32.mrf.mxu0
      %v2331 = vadd.f32 %v2242, %v2330
      %2332 = vmatmul.bf16.gmra.mxu0 %v663
      %v2333 = vpop.f32.mrf.mxu0
      %v2334 = vadd.f32 %v2245, %v2333
      %v2335 = vpop.f32.mrf.mxu0
      %v2336 = vadd.f32 %v2247, %v2335
      %2337 = vmatmul.bf16.gmra.mxu0 %v667
      %v2338 = vpop.f32.mrf.mxu0
      %v2339 = vadd.f32 %v2250, %v2338
      %v2340 = vpop.f32.mrf.mxu0
      %v2341 = vadd.f32 %v2252, %v2340
      %2342 = vmatmul.bf16.gmra.mxu0 %v671
      %v2343 = vpop.f32.mrf.mxu0
      %v2344 = vadd.f32 %v2255, %v2343
      %v2345 = vpop.f32.mrf.mxu0
      %v2346 = vadd.f32 %v2257, %v2345
      %2347 = vmatmul.bf16.gmra.mxu0 %v675
      %v2348 = vpop.f32.mrf.mxu0
      %v2349 = vadd.f32 %v2260, %v2348
      %v2350 = vpop.f32.mrf.mxu0
      %v2351 = vadd.f32 %v2262, %v2350
      %2352 = vmatmul.bf16.gmra.mxu0 %v679
      %v2353 = vpop.f32.mrf.mxu0
      %v2354 = vadd.f32 %v2265, %v2353
      %v2355 = vpop.f32.mrf.mxu0
      %v2356 = vadd.f32 %v2267, %v2355
      %2357 = vmatmul.bf16.gmra.mxu0 %v683
      %v2358 = vpop.f32.mrf.mxu0
      %v2359 = vadd.f32 %v2270, %v2358
      %v2360 = vpop.f32.mrf.mxu0
      %v2361 = vadd.f32 %v2272, %v2360
      %2362 = vmatmul.bf16.gmra.mxu0 %v687
      %v2363 = vpop.f32.mrf.mxu0
      %v2364 = vadd.f32 %v2275, %v2363
      %v2365 = vpop.f32.mrf.mxu0
      %v2366 = vadd.f32 %v2277, %v2365
      %2367 = vmatmul.bf16.gmra.mxu0 %v691
      %v2368 = vpop.f32.mrf.mxu0
      %v2369 = vadd.f32 %v2280, %v2368
      %v2370 = vpop.f32.mrf.mxu0
      %v2371 = vadd.f32 %v2282, %v2370
      %2372 = vmatmul.bf16.gmra.mxu0 %v695
      %v2373 = vpop.f32.mrf.mxu0
      %v2374 = vadd.f32 %v2285, %v2373
      %v2375 = vpop.f32.mrf.mxu0
      %v2376 = vadd.f32 %v2287, %v2375
      %2377 = vmatmul.bf16.gmra.mxu0 %v699
      %v2378 = vpop.f32.mrf.mxu0
      %v2379 = vadd.f32 %v2290, %v2378
      %v2380 = vpop.f32.mrf.mxu0
      %v2381 = vadd.f32 %v2292, %v2380
      %2382 = vmatmul.bf16.gmra.mxu0 %v703
      %v2383 = vpop.f32.mrf.mxu0
      %v2384 = vadd.f32 %v2295, %v2383
      %v2385 = vpop.f32.mrf.mxu0
      %v2386 = vadd.f32 %v2297, %v2385
      %2387 = vdwg.mxu0
      %2388 = vmatpush.bf16.msra.mxu0 %v1279
      %2389 = vmatpush.bf16.msra.mxu0 %v1275
      %2390 = vmatpush.bf16.msra.mxu0 %v1271
      %2391 = vmatpush.bf16.msra.mxu0 %v1267
      %2392 = vmatpush.bf16.msra.mxu0 %v1263
      %2393 = vmatpush.bf16.msra.mxu0 %v1259
      %2394 = vmatpush.bf16.msra.mxu0 %v1255
      %2395 = vmatpush.bf16.msra.mxu0 %v1251
      %2396 = vmatmul.bf16.gmra.mxu0 %v644
      %v2397 = vpop.f32.mrf.mxu0
      %v2398 = vadd.f32 %v2309, %v2397
      %v2399 = vpop.f32.mrf.mxu0
      %v2400 = vadd.f32 %v2311, %v2399
      %2401 = vmatmul.bf16.gmra.mxu0 %v648
      %v2402 = vpop.f32.mrf.mxu0
      %v2403 = vadd.f32 %v2314, %v2402
      %v2404 = vpop.f32.mrf.mxu0
      %v2405 = vadd.f32 %v2316, %v2404
      %2406 = vmatmul.bf16.gmra.mxu0 %v652
      %v2407 = vpop.f32.mrf.mxu0
      %v2408 = vadd.f32 %v2319, %v2407
      %v2409 = vpop.f32.mrf.mxu0
      %v2410 = vadd.f32 %v2321, %v2409
      %2411 = vmatmul.bf16.gmra.mxu0 %v656
      %v2412 = vpop.f32.mrf.mxu0
      %v2413 = vadd.f32 %v2324, %v2412
      %v2414 = vpop.f32.mrf.mxu0
      %v2415 = vadd.f32 %v2326, %v2414
      %2416 = vmatmul.bf16.gmra.mxu0 %v660
      %v2417 = vpop.f32.mrf.mxu0
      %v2418 = vadd.f32 %v2329, %v2417
      %v2419 = vpop.f32.mrf.mxu0
      %v2420 = vadd.f32 %v2331, %v2419
      %2421 = vmatmul.bf16.gmra.mxu0 %v664
      %v2422 = vpop.f32.mrf.mxu0
      %v2423 = vadd.f32 %v2334, %v2422
      %v2424 = vpop.f32.mrf.mxu0
      %v2425 = vadd.f32 %v2336, %v2424
      %2426 = vmatmul.bf16.gmra.mxu0 %v668
      %v2427 = vpop.f32.mrf.mxu0
      %v2428 = vadd.f32 %v2339, %v2427
      %v2429 = vpop.f32.mrf.mxu0
      %v2430 = vadd.f32 %v2341, %v2429
      %2431 = vmatmul.bf16.gmra.mxu0 %v672
      %v2432 = vpop.f32.mrf.mxu0
      %v2433 = vadd.f32 %v2344, %v2432
      %v2434 = vpop.f32.mrf.mxu0
      %v2435 = vadd.f32 %v2346, %v2434
      %2436 = vmatmul.bf16.gmra.mxu0 %v676
      %v2437 = vpop.f32.mrf.mxu0
      %v2438 = vadd.f32 %v2349, %v2437
      %v2439 = vpop.f32.mrf.mxu0
      %v2440 = vadd.f32 %v2351, %v2439
      %2441 = vmatmul.bf16.gmra.mxu0 %v680
      %v2442 = vpop.f32.mrf.mxu0
      %v2443 = vadd.f32 %v2354, %v2442
      %v2444 = vpop.f32.mrf.mxu0
      %v2445 = vadd.f32 %v2356, %v2444
      %2446 = vmatmul.bf16.gmra.mxu0 %v684
      %v2447 = vpop.f32.mrf.mxu0
      %v2448 = vadd.f32 %v2359, %v2447
      %v2449 = vpop.f32.mrf.mxu0
      %v2450 = vadd.f32 %v2361, %v2449
      %2451 = vmatmul.bf16.gmra.mxu0 %v688
      %v2452 = vpop.f32.mrf.mxu0
      %v2453 = vadd.f32 %v2364, %v2452
      %v2454 = vpop.f32.mrf.mxu0
      %v2455 = vadd.f32 %v2366, %v2454
      %2456 = vmatmul.bf16.gmra.mxu0 %v692
      %v2457 = vpop.f32.mrf.mxu0
      %v2458 = vadd.f32 %v2369, %v2457
      %v2459 = vpop.f32.mrf.mxu0
      %v2460 = vadd.f32 %v2371, %v2459
      %2461 = vmatmul.bf16.gmra.mxu0 %v696
      %v2462 = vpop.f32.mrf.mxu0
      %v2463 = vadd.f32 %v2374, %v2462
      %v2464 = vpop.f32.mrf.mxu0
      %v2465 = vadd.f32 %v2376, %v2464
      %2466 = vmatmul.bf16.gmra.mxu0 %v700
      %v2467 = vpop.f32.mrf.mxu0
      %v2468 = vadd.f32 %v2379, %v2467
      %v2469 = vpop.f32.mrf.mxu0
      %v2470 = vadd.f32 %v2381, %v2469
      %2471 = vmatmul.bf16.gmra.mxu0 %v704
      %v2472 = vpop.f32.mrf.mxu0
      %v2473 = vadd.f32 %v2384, %v2472
      %v2474 = vpop.f32.mrf.mxu0
      %v2475 = vadd.f32 %v2386, %v2474
      %2476 = vdwg.mxu0
      %2477 = vmatpush.bf16.msra.mxu0 %v1184
      %2478 = vmatpush.bf16.msra.mxu0 %v1180
      %2479 = vmatpush.bf16.msra.mxu0 %v1176
      %2480 = vmatpush.bf16.msra.mxu0 %v1172
      %2481 = vmatpush.bf16.msra.mxu0 %v1168
      %2482 = vmatpush.bf16.msra.mxu0 %v1164
      %2483 = vmatpush.bf16.msra.mxu0 %v1160
      %2484 = vmatpush.bf16.msra.mxu0 %v1156
      %2485 = vmatmul.bf16.gmra.mxu0 %v641
      %v2486 = vpop.f32.mrf.mxu0
      %v2487 = vadd.f32 0.0, %v2486
      %v2488 = vpop.f32.mrf.mxu0
      %v2489 = vadd.f32 0.0, %v2488
      %2490 = vmatmul.bf16.gmra.mxu0 %v645
      %v2491 = vpop.f32.mrf.mxu0
      %v2492 = vadd.f32 0.0, %v2491
      %v2493 = vpop.f32.mrf.mxu0
      %v2494 = vadd.f32 0.0, %v2493
      %2495 = vmatmul.bf16.gmra.mxu0 %v649
      %v2496 = vpop.f32.mrf.mxu0
      %v2497 = vadd.f32 0.0, %v2496
      %v2498 = vpop.f32.mrf.mxu0
      %v2499 = vadd.f32 0.0, %v2498
      %2500 = vmatmul.bf16.gmra.mxu0 %v653
      %v2501 = vpop.f32.mrf.mxu0
      %v2502 = vadd.f32 0.0, %v2501
      %v2503 = vpop.f32.mrf.mxu0
      %v2504 = vadd.f32 0.0, %v2503
      %2505 = vmatmul.bf16.gmra.mxu0 %v657
      %v2506 = vpop.f32.mrf.mxu0
      %v2507 = vadd.f32 0.0, %v2506
      %v2508 = vpop.f32.mrf.mxu0
      %v2509 = vadd.f32 0.0, %v2508
      %2510 = vmatmul.bf16.gmra.mxu0 %v661
      %v2511 = vpop.f32.mrf.mxu0
      %v2512 = vadd.f32 0.0, %v2511
      %v2513 = vpop.f32.mrf.mxu0
      %v2514 = vadd.f32 0.0, %v2513
      %2515 = vmatmul.bf16.gmra.mxu0 %v665
      %v2516 = vpop.f32.mrf.mxu0
      %v2517 = vadd.f32 0.0, %v2516
      %v2518 = vpop.f32.mrf.mxu0
      %v2519 = vadd.f32 0.0, %v2518
      %2520 = vmatmul.bf16.gmra.mxu0 %v669
      %v2521 = vpop.f32.mrf.mxu0
      %v2522 = vadd.f32 0.0, %v2521
      %v2523 = vpop.f32.mrf.mxu0
      %v2524 = vadd.f32 0.0, %v2523
      %2525 = vmatmul.bf16.gmra.mxu0 %v673
      %v2526 = vpop.f32.mrf.mxu0
      %v2527 = vadd.f32 0.0, %v2526
      %v2528 = vpop.f32.mrf.mxu0
      %v2529 = vadd.f32 0.0, %v2528
      %2530 = vmatmul.bf16.gmra.mxu0 %v677
      %v2531 = vpop.f32.mrf.mxu0
      %v2532 = vadd.f32 0.0, %v2531
      %v2533 = vpop.f32.mrf.mxu0
      %v2534 = vadd.f32 0.0, %v2533
      %2535 = vmatmul.bf16.gmra.mxu0 %v681
      %v2536 = vpop.f32.mrf.mxu0
      %v2537 = vadd.f32 0.0, %v2536
      %v2538 = vpop.f32.mrf.mxu0
      %v2539 = vadd.f32 0.0, %v2538
      %2540 = vmatmul.bf16.gmra.mxu0 %v685
      %v2541 = vpop.f32.mrf.mxu0
      %v2542 = vadd.f32 0.0, %v2541
      %v2543 = vpop.f32.mrf.mxu0
      %v2544 = vadd.f32 0.0, %v2543
      %2545 = vmatmul.bf16.gmra.mxu0 %v689
      %v2546 = vpop.f32.mrf.mxu0
      %v2547 = vadd.f32 0.0, %v2546
      %v2548 = vpop.f32.mrf.mxu0
      %v2549 = vadd.f32 0.0, %v2548
      %2550 = vmatmul.bf16.gmra.mxu0 %v693
      %v2551 = vpop.f32.mrf.mxu0
      %v2552 = vadd.f32 0.0, %v2551
      %v2553 = vpop.f32.mrf.mxu0
      %v2554 = vadd.f32 0.0, %v2553
      %2555 = vmatmul.bf16.gmra.mxu0 %v697
      %v2556 = vpop.f32.mrf.mxu0
      %v2557 = vadd.f32 0.0, %v2556
      %v2558 = vpop.f32.mrf.mxu0
      %v2559 = vadd.f32 0.0, %v2558
      %2560 = vmatmul.bf16.gmra.mxu0 %v701
      %v2561 = vpop.f32.mrf.mxu0
      %v2562 = vadd.f32 0.0, %v2561
      %v2563 = vpop.f32.mrf.mxu0
      %v2564 = vadd.f32 0.0, %v2563
      %2565 = vdwg.mxu0
      %2566 = vmatpush.bf16.msra.mxu0 %v1216
      %2567 = vmatpush.bf16.msra.mxu0 %v1212
      %2568 = vmatpush.bf16.msra.mxu0 %v1208
      %2569 = vmatpush.bf16.msra.mxu0 %v1204
      %2570 = vmatpush.bf16.msra.mxu0 %v1200
      %2571 = vmatpush.bf16.msra.mxu0 %v1196
      %2572 = vmatpush.bf16.msra.mxu0 %v1192
      %2573 = vmatpush.bf16.msra.mxu0 %v1188
      %2574 = vmatmul.bf16.gmra.mxu0 %v642
      %v2575 = vpop.f32.mrf.mxu0
      %v2576 = vadd.f32 %v2487, %v2575
      %v2577 = vpop.f32.mrf.mxu0
      %v2578 = vadd.f32 %v2489, %v2577
      %2579 = vmatmul.bf16.gmra.mxu0 %v646
      %v2580 = vpop.f32.mrf.mxu0
      %v2581 = vadd.f32 %v2492, %v2580
      %v2582 = vpop.f32.mrf.mxu0
      %v2583 = vadd.f32 %v2494, %v2582
      %2584 = vmatmul.bf16.gmra.mxu0 %v650
      %v2585 = vpop.f32.mrf.mxu0
      %v2586 = vadd.f32 %v2497, %v2585
      %v2587 = vpop.f32.mrf.mxu0
      %v2588 = vadd.f32 %v2499, %v2587
      %2589 = vmatmul.bf16.gmra.mxu0 %v654
      %v2590 = vpop.f32.mrf.mxu0
      %v2591 = vadd.f32 %v2502, %v2590
      %v2592 = vpop.f32.mrf.mxu0
      %v2593 = vadd.f32 %v2504, %v2592
      %2594 = vmatmul.bf16.gmra.mxu0 %v658
      %v2595 = vpop.f32.mrf.mxu0
      %v2596 = vadd.f32 %v2507, %v2595
      %v2597 = vpop.f32.mrf.mxu0
      %v2598 = vadd.f32 %v2509, %v2597
      %2599 = vmatmul.bf16.gmra.mxu0 %v662
      %v2600 = vpop.f32.mrf.mxu0
      %v2601 = vadd.f32 %v2512, %v2600
      %v2602 = vpop.f32.mrf.mxu0
      %v2603 = vadd.f32 %v2514, %v2602
      %2604 = vmatmul.bf16.gmra.mxu0 %v666
      %v2605 = vpop.f32.mrf.mxu0
      %v2606 = vadd.f32 %v2517, %v2605
      %v2607 = vpop.f32.mrf.mxu0
      %v2608 = vadd.f32 %v2519, %v2607
      %2609 = vmatmul.bf16.gmra.mxu0 %v670
      %v2610 = vpop.f32.mrf.mxu0
      %v2611 = vadd.f32 %v2522, %v2610
      %v2612 = vpop.f32.mrf.mxu0
      %v2613 = vadd.f32 %v2524, %v2612
      %2614 = vmatmul.bf16.gmra.mxu0 %v674
      %v2615 = vpop.f32.mrf.mxu0
      %v2616 = vadd.f32 %v2527, %v2615
      %v2617 = vpop.f32.mrf.mxu0
      %v2618 = vadd.f32 %v2529, %v2617
      %2619 = vmatmul.bf16.gmra.mxu0 %v678
      %v2620 = vpop.f32.mrf.mxu0
      %v2621 = vadd.f32 %v2532, %v2620
      %v2622 = vpop.f32.mrf.mxu0
      %v2623 = vadd.f32 %v2534, %v2622
      %2624 = vmatmul.bf16.gmra.mxu0 %v682
      %v2625 = vpop.f32.mrf.mxu0
      %v2626 = vadd.f32 %v2537, %v2625
      %v2627 = vpop.f32.mrf.mxu0
      %v2628 = vadd.f32 %v2539, %v2627
      %2629 = vmatmul.bf16.gmra.mxu0 %v686
      %v2630 = vpop.f32.mrf.mxu0
      %v2631 = vadd.f32 %v2542, %v2630
      %v2632 = vpop.f32.mrf.mxu0
      %v2633 = vadd.f32 %v2544, %v2632
      %2634 = vmatmul.bf16.gmra.mxu0 %v690
      %v2635 = vpop.f32.mrf.mxu0
      %v2636 = vadd.f32 %v2547, %v2635
      %v2637 = vpop.f32.mrf.mxu0
      %v2638 = vadd.f32 %v2549, %v2637
      %2639 = vmatmul.bf16.gmra.mxu0 %v694
      %v2640 = vpop.f32.mrf.mxu0
      %v2641 = vadd.f32 %v2552, %v2640
      %v2642 = vpop.f32.mrf.mxu0
      %v2643 = vadd.f32 %v2554, %v2642
      %2644 = vmatmul.bf16.gmra.mxu0 %v698
      %v2645 = vpop.f32.mrf.mxu0
      %v2646 = vadd.f32 %v2557, %v2645
      %v2647 = vpop.f32.mrf.mxu0
      %v2648 = vadd.f32 %v2559, %v2647
      %2649 = vmatmul.bf16.gmra.mxu0 %v702
      %v2650 = vpop.f32.mrf.mxu0
      %v2651 = vadd.f32 %v2562, %v2650
      %v2652 = vpop.f32.mrf.mxu0
      %v2653 = vadd.f32 %v2564, %v2652
      %2654 = vdwg.mxu0
      %2655 = vmatpush.bf16.msra.mxu0 %v1248
      %2656 = vmatpush.bf16.msra.mxu0 %v1244
      %2657 = vmatpush.bf16.msra.mxu0 %v1240
      %2658 = vmatpush.bf16.msra.mxu0 %v1236
      %2659 = vmatpush.bf16.msra.mxu0 %v1232
      %2660 = vmatpush.bf16.msra.mxu0 %v1228
      %2661 = vmatpush.bf16.msra.mxu0 %v1224
      %2662 = vmatpush.bf16.msra.mxu0 %v1220
      %2663 = vmatmul.bf16.gmra.mxu0 %v643
      %v2664 = vpop.f32.mrf.mxu0
      %v2665 = vadd.f32 %v2576, %v2664
      %v2666 = vpop.f32.mrf.mxu0
      %v2667 = vadd.f32 %v2578, %v2666
      %2668 = vmatmul.bf16.gmra.mxu0 %v647
      %v2669 = vpop.f32.mrf.mxu0
      %v2670 = vadd.f32 %v2581, %v2669
      %v2671 = vpop.f32.mrf.mxu0
      %v2672 = vadd.f32 %v2583, %v2671
      %2673 = vmatmul.bf16.gmra.mxu0 %v651
      %v2674 = vpop.f32.mrf.mxu0
      %v2675 = vadd.f32 %v2586, %v2674
      %v2676 = vpop.f32.mrf.mxu0
      %v2677 = vadd.f32 %v2588, %v2676
      %2678 = vmatmul.bf16.gmra.mxu0 %v655
      %v2679 = vpop.f32.mrf.mxu0
      %v2680 = vadd.f32 %v2591, %v2679
      %v2681 = vpop.f32.mrf.mxu0
      %v2682 = vadd.f32 %v2593, %v2681
      %2683 = vmatmul.bf16.gmra.mxu0 %v659
      %v2684 = vpop.f32.mrf.mxu0
      %v2685 = vadd.f32 %v2596, %v2684
      %v2686 = vpop.f32.mrf.mxu0
      %v2687 = vadd.f32 %v2598, %v2686
      %2688 = vmatmul.bf16.gmra.mxu0 %v663
      %v2689 = vpop.f32.mrf.mxu0
      %v2690 = vadd.f32 %v2601, %v2689
      %v2691 = vpop.f32.mrf.mxu0
      %v2692 = vadd.f32 %v2603, %v2691
      %2693 = vmatmul.bf16.gmra.mxu0 %v667
      %v2694 = vpop.f32.mrf.mxu0
      %v2695 = vadd.f32 %v2606, %v2694
      %v2696 = vpop.f32.mrf.mxu0
      %v2697 = vadd.f32 %v2608, %v2696
      %2698 = vmatmul.bf16.gmra.mxu0 %v671
      %v2699 = vpop.f32.mrf.mxu0
      %v2700 = vadd.f32 %v2611, %v2699
      %v2701 = vpop.f32.mrf.mxu0
      %v2702 = vadd.f32 %v2613, %v2701
      %2703 = vmatmul.bf16.gmra.mxu0 %v675
      %v2704 = vpop.f32.mrf.mxu0
      %v2705 = vadd.f32 %v2616, %v2704
      %v2706 = vpop.f32.mrf.mxu0
      %v2707 = vadd.f32 %v2618, %v2706
      %2708 = vmatmul.bf16.gmra.mxu0 %v679
      %v2709 = vpop.f32.mrf.mxu0
      %v2710 = vadd.f32 %v2621, %v2709
      %v2711 = vpop.f32.mrf.mxu0
      %v2712 = vadd.f32 %v2623, %v2711
      %2713 = vmatmul.bf16.gmra.mxu0 %v683
      %v2714 = vpop.f32.mrf.mxu0
      %v2715 = vadd.f32 %v2626, %v2714
      %v2716 = vpop.f32.mrf.mxu0
      %v2717 = vadd.f32 %v2628, %v2716
      %2718 = vmatmul.bf16.gmra.mxu0 %v687
      %v2719 = vpop.f32.mrf.mxu0
      %v2720 = vadd.f32 %v2631, %v2719
      %v2721 = vpop.f32.mrf.mxu0
      %v2722 = vadd.f32 %v2633, %v2721
      %2723 = vmatmul.bf16.gmra.mxu0 %v691
      %v2724 = vpop.f32.mrf.mxu0
      %v2725 = vadd.f32 %v2636, %v2724
      %v2726 = vpop.f32.mrf.mxu0
      %v2727 = vadd.f32 %v2638, %v2726
      %2728 = vmatmul.bf16.gmra.mxu0 %v695
      %v2729 = vpop.f32.mrf.mxu0
      %v2730 = vadd.f32 %v2641, %v2729
      %v2731 = vpop.f32.mrf.mxu0
      %v2732 = vadd.f32 %v2643, %v2731
      %2733 = vmatmul.bf16.gmra.mxu0 %v699
      %v2734 = vpop.f32.mrf.mxu0
      %v2735 = vadd.f32 %v2646, %v2734
      %v2736 = vpop.f32.mrf.mxu0
      %v2737 = vadd.f32 %v2648, %v2736
      %2738 = vmatmul.bf16.gmra.mxu0 %v703
      %v2739 = vpop.f32.mrf.mxu0
      %v2740 = vadd.f32 %v2651, %v2739
      %v2741 = vpop.f32.mrf.mxu0
      %v2742 = vadd.f32 %v2653, %v2741
      %2743 = vdwg.mxu0
      %2744 = vmatpush.bf16.msra.mxu0 %v1280
      %2745 = vmatpush.bf16.msra.mxu0 %v1276
      %2746 = vmatpush.bf16.msra.mxu0 %v1272
      %2747 = vmatpush.bf16.msra.mxu0 %v1268
      %2748 = vmatpush.bf16.msra.mxu0 %v1264
      %2749 = vmatpush.bf16.msra.mxu0 %v1260
      %2750 = vmatpush.bf16.msra.mxu0 %v1256
      %2751 = vmatpush.bf16.msra.mxu0 %v1252
      %2752 = vmatmul.bf16.gmra.mxu0 %v644
      %v2753 = vpop.f32.mrf.mxu0
      %v2754 = vadd.f32 %v2665, %v2753
      %v2755 = vpop.f32.mrf.mxu0
      %v2756 = vadd.f32 %v2667, %v2755
      %2757 = vmatmul.bf16.gmra.mxu0 %v648
      %v2758 = vpop.f32.mrf.mxu0
      %v2759 = vadd.f32 %v2670, %v2758
      %v2760 = vpop.f32.mrf.mxu0
      %v2761 = vadd.f32 %v2672, %v2760
      %2762 = vmatmul.bf16.gmra.mxu0 %v652
      %v2763 = vpop.f32.mrf.mxu0
      %v2764 = vadd.f32 %v2675, %v2763
      %v2765 = vpop.f32.mrf.mxu0
      %v2766 = vadd.f32 %v2677, %v2765
      %2767 = vmatmul.bf16.gmra.mxu0 %v656
      %v2768 = vpop.f32.mrf.mxu0
      %v2769 = vadd.f32 %v2680, %v2768
      %v2770 = vpop.f32.mrf.mxu0
      %v2771 = vadd.f32 %v2682, %v2770
      %2772 = vmatmul.bf16.gmra.mxu0 %v660
      %v2773 = vpop.f32.mrf.mxu0
      %v2774 = vadd.f32 %v2685, %v2773
      %v2775 = vpop.f32.mrf.mxu0
      %v2776 = vadd.f32 %v2687, %v2775
      %2777 = vmatmul.bf16.gmra.mxu0 %v664
      %v2778 = vpop.f32.mrf.mxu0
      %v2779 = vadd.f32 %v2690, %v2778
      %v2780 = vpop.f32.mrf.mxu0
      %v2781 = vadd.f32 %v2692, %v2780
      %2782 = vmatmul.bf16.gmra.mxu0 %v668
      %v2783 = vpop.f32.mrf.mxu0
      %v2784 = vadd.f32 %v2695, %v2783
      %v2785 = vpop.f32.mrf.mxu0
      %v2786 = vadd.f32 %v2697, %v2785
      %2787 = vmatmul.bf16.gmra.mxu0 %v672
      %v2788 = vpop.f32.mrf.mxu0
      %v2789 = vadd.f32 %v2700, %v2788
      %v2790 = vpop.f32.mrf.mxu0
      %v2791 = vadd.f32 %v2702, %v2790
      %2792 = vmatmul.bf16.gmra.mxu0 %v676
      %v2793 = vpop.f32.mrf.mxu0
      %v2794 = vadd.f32 %v2705, %v2793
      %v2795 = vpop.f32.mrf.mxu0
      %v2796 = vadd.f32 %v2707, %v2795
      %2797 = vmatmul.bf16.gmra.mxu0 %v680
      %v2798 = vpop.f32.mrf.mxu0
      %v2799 = vadd.f32 %v2710, %v2798
      %v2800 = vpop.f32.mrf.mxu0
      %v2801 = vadd.f32 %v2712, %v2800
      %2802 = vmatmul.bf16.gmra.mxu0 %v684
      %v2803 = vpop.f32.mrf.mxu0
      %v2804 = vadd.f32 %v2715, %v2803
      %v2805 = vpop.f32.mrf.mxu0
      %v2806 = vadd.f32 %v2717, %v2805
      %2807 = vmatmul.bf16.gmra.mxu0 %v688
      %v2808 = vpop.f32.mrf.mxu0
      %v2809 = vadd.f32 %v2720, %v2808
      %v2810 = vpop.f32.mrf.mxu0
      %v2811 = vadd.f32 %v2722, %v2810
      %2812 = vmatmul.bf16.gmra.mxu0 %v692
      %v2813 = vpop.f32.mrf.mxu0
      %v2814 = vadd.f32 %v2725, %v2813
      %v2815 = vpop.f32.mrf.mxu0
      %v2816 = vadd.f32 %v2727, %v2815
      %2817 = vmatmul.bf16.gmra.mxu0 %v696
      %v2818 = vpop.f32.mrf.mxu0
      %v2819 = vadd.f32 %v2730, %v2818
      %v2820 = vpop.f32.mrf.mxu0
      %v2821 = vadd.f32 %v2732, %v2820
      %2822 = vmatmul.bf16.gmra.mxu0 %v700
      %v2823 = vpop.f32.mrf.mxu0
      %v2824 = vadd.f32 %v2735, %v2823
      %v2825 = vpop.f32.mrf.mxu0
      %v2826 = vadd.f32 %v2737, %v2825
      %2827 = vmatmul.bf16.gmra.mxu0 %v704
      %v2828 = vpop.f32.mrf.mxu0
      %v2829 = vadd.f32 %v2740, %v2828
      %v2830 = vpop.f32.mrf.mxu0
      %v2831 = vadd.f32 %v2742, %v2830
      %2832 = vdwg.mxu0
      %v2833 = vmul.f32 %v1686, %v1686
      %v2834 = vmul.f32 %v2042, %v2042
      %v2835 = vmul.f32 %v1688, %v1688
      %v2836 = vmul.f32 %v2044, %v2044
      %v2837 = vmul.f32 %v1691, %v1691
      %v2838 = vmul.f32 %v2047, %v2047
      %v2839 = vmul.f32 %v1693, %v1693
      %v2840 = vmul.f32 %v2049, %v2049
      %v2841 = vmul.f32 %v1696, %v1696
      %v2842 = vmul.f32 %v2052, %v2052
      %v2843 = vmul.f32 %v1698, %v1698
      %v2844 = vmul.f32 %v2054, %v2054
      %v2845 = vmul.f32 %v1701, %v1701
      %v2846 = vmul.f32 %v2057, %v2057
      %v2847 = vmul.f32 %v1703, %v1703
      %v2848 = vmul.f32 %v2059, %v2059
      %v2849 = vmul.f32 %v1706, %v1706
      %v2850 = vmul.f32 %v2062, %v2062
      %v2851 = vmul.f32 %v1708, %v1708
      %v2852 = vmul.f32 %v2064, %v2064
      %v2853 = vmul.f32 %v1711, %v1711
      %v2854 = vmul.f32 %v2067, %v2067
      %v2855 = vmul.f32 %v1713, %v1713
      %v2856 = vmul.f32 %v2069, %v2069
      %v2857 = vmul.f32 %v1716, %v1716
      %v2858 = vmul.f32 %v2072, %v2072
      %v2859 = vmul.f32 %v1718, %v1718
      %v2860 = vmul.f32 %v2074, %v2074
      %v2861 = vmul.f32 %v1721, %v1721
      %v2862 = vmul.f32 %v2077, %v2077
      %v2863 = vmul.f32 %v1723, %v1723
      %v2864 = vmul.f32 %v2079, %v2079
      %v2865 = vmul.f32 %v1726, %v1726
      %v2866 = vmul.f32 %v2082, %v2082
      %v2867 = vmul.f32 %v1728, %v1728
      %v2868 = vmul.f32 %v2084, %v2084
      %v2869 = vmul.f32 %v1731, %v1731
      %v2870 = vmul.f32 %v2087, %v2087
      %v2871 = vmul.f32 %v1733, %v1733
      %v2872 = vmul.f32 %v2089, %v2089
      %v2873 = vmul.f32 %v1736, %v1736
      %v2874 = vmul.f32 %v2092, %v2092
      %v2875 = vmul.f32 %v1738, %v1738
      %v2876 = vmul.f32 %v2094, %v2094
      %v2877 = vmul.f32 %v1741, %v1741
      %v2878 = vmul.f32 %v2097, %v2097
      %v2879 = vmul.f32 %v1743, %v1743
      %v2880 = vmul.f32 %v2099, %v2099
      %v2881 = vmul.f32 %v1746, %v1746
      %v2882 = vmul.f32 %v2102, %v2102
      %v2883 = vmul.f32 %v1748, %v1748
      %v2884 = vmul.f32 %v2104, %v2104
      %v2885 = vmul.f32 %v1751, %v1751
      %v2886 = vmul.f32 %v2107, %v2107
      %v2887 = vmul.f32 %v1753, %v1753
      %v2888 = vmul.f32 %v2109, %v2109
      %v2889 = vmul.f32 %v1756, %v1756
      %v2890 = vmul.f32 %v2112, %v2112
      %v2891 = vmul.f32 %v1758, %v1758
      %v2892 = vmul.f32 %v2114, %v2114
      %v2893 = vmul.f32 %v1761, %v1761
      %v2894 = vmul.f32 %v2117, %v2117
      %v2895 = vmul.f32 %v1763, %v1763
      %v2896 = vmul.f32 %v2119, %v2119
      %v2897 = vmul.f32 %v2398, %v2398
      %v2898 = vmul.f32 %v2754, %v2754
      %v2899 = vmul.f32 %v2400, %v2400
      %v2900 = vmul.f32 %v2756, %v2756
      %v2901 = vmul.f32 %v2403, %v2403
      %v2902 = vmul.f32 %v2759, %v2759
      %v2903 = vmul.f32 %v2405, %v2405
      %v2904 = vmul.f32 %v2761, %v2761
      %v2905 = vmul.f32 %v2408, %v2408
      %v2906 = vmul.f32 %v2764, %v2764
      %v2907 = vmul.f32 %v2410, %v2410
      %v2908 = vmul.f32 %v2766, %v2766
      %v2909 = vmul.f32 %v2413, %v2413
      %v2910 = vmul.f32 %v2769, %v2769
      %v2911 = vmul.f32 %v2415, %v2415
      %v2912 = vmul.f32 %v2771, %v2771
      %v2913 = vmul.f32 %v2418, %v2418
      %v2914 = vmul.f32 %v2774, %v2774
      %v2915 = vmul.f32 %v2420, %v2420
      %v2916 = vmul.f32 %v2776, %v2776
      %v2917 = vmul.f32 %v2423, %v2423
      %v2918 = vmul.f32 %v2779, %v2779
      %v2919 = vmul.f32 %v2425, %v2425
      %v2920 = vmul.f32 %v2781, %v2781
      %v2921 = vmul.f32 %v2428, %v2428
      %v2922 = vmul.f32 %v2784, %v2784
      %v2923 = vmul.f32 %v2430, %v2430
      %v2924 = vmul.f32 %v2786, %v2786
      %v2925 = vmul.f32 %v2433, %v2433
      %v2926 = vmul.f32 %v2789, %v2789
      %v2927 = vmul.f32 %v2435, %v2435
      %v2928 = vmul.f32 %v2791, %v2791
      %v2929 = vmul.f32 %v2438, %v2438
      %v2930 = vmul.f32 %v2794, %v2794
      %v2931 = vmul.f32 %v2440, %v2440
      %v2932 = vmul.f32 %v2796, %v2796
      %v2933 = vmul.f32 %v2443, %v2443
      %v2934 = vmul.f32 %v2799, %v2799
      %v2935 = vmul.f32 %v2445, %v2445
      %v2936 = vmul.f32 %v2801, %v2801
      %v2937 = vmul.f32 %v2448, %v2448
      %v2938 = vmul.f32 %v2804, %v2804
      %v2939 = vmul.f32 %v2450, %v2450
      %v2940 = vmul.f32 %v2806, %v2806
      %v2941 = vmul.f32 %v2453, %v2453
      %v2942 = vmul.f32 %v2809, %v2809
      %v2943 = vmul.f32 %v2455, %v2455
      %v2944 = vmul.f32 %v2811, %v2811
      %v2945 = vmul.f32 %v2458, %v2458
      %v2946 = vmul.f32 %v2814, %v2814
      %v2947 = vmul.f32 %v2460, %v2460
      %v2948 = vmul.f32 %v2816, %v2816
      %v2949 = vmul.f32 %v2463, %v2463
      %v2950 = vmul.f32 %v2819, %v2819
      %v2951 = vmul.f32 %v2465, %v2465
      %v2952 = vmul.f32 %v2821, %v2821
      %v2953 = vmul.f32 %v2468, %v2468
      %v2954 = vmul.f32 %v2824, %v2824
      %v2955 = vmul.f32 %v2470, %v2470
      %v2956 = vmul.f32 %v2826, %v2826
      %v2957 = vmul.f32 %v2473, %v2473
      %v2958 = vmul.f32 %v2829, %v2829
      %v2959 = vmul.f32 %v2475, %v2475
      %v2960 = vmul.f32 %v2831, %v2831
      %v2961 = vadd.f32 %v2833, %v2897
      %v2962 = vadd.f32 %v2834, %v2898
      %v2963 = vadd.f32 %v2835, %v2899
      %v2964 = vadd.f32 %v2836, %v2900
      %v2965 = vadd.f32 %v2837, %v2901
      %v2966 = vadd.f32 %v2838, %v2902
      %v2967 = vadd.f32 %v2839, %v2903
      %v2968 = vadd.f32 %v2840, %v2904
      %v2969 = vadd.f32 %v2841, %v2905
      %v2970 = vadd.f32 %v2842, %v2906
      %v2971 = vadd.f32 %v2843, %v2907
      %v2972 = vadd.f32 %v2844, %v2908
      %v2973 = vadd.f32 %v2845, %v2909
      %v2974 = vadd.f32 %v2846, %v2910
      %v2975 = vadd.f32 %v2847, %v2911
      %v2976 = vadd.f32 %v2848, %v2912
      %v2977 = vadd.f32 %v2849, %v2913
      %v2978 = vadd.f32 %v2850, %v2914
      %v2979 = vadd.f32 %v2851, %v2915
      %v2980 = vadd.f32 %v2852, %v2916
      %v2981 = vadd.f32 %v2853, %v2917
      %v2982 = vadd.f32 %v2854, %v2918
      %v2983 = vadd.f32 %v2855, %v2919
      %v2984 = vadd.f32 %v2856, %v2920
      %v2985 = vadd.f32 %v2857, %v2921
      %v2986 = vadd.f32 %v2858, %v2922
      %v2987 = vadd.f32 %v2859, %v2923
      %v2988 = vadd.f32 %v2860, %v2924
      %v2989 = vadd.f32 %v2861, %v2925
      %v2990 = vadd.f32 %v2862, %v2926
      %v2991 = vadd.f32 %v2863, %v2927
      %v2992 = vadd.f32 %v2864, %v2928
      %v2993 = vadd.f32 %v2865, %v2929
      %v2994 = vadd.f32 %v2866, %v2930
      %v2995 = vadd.f32 %v2867, %v2931
      %v2996 = vadd.f32 %v2868, %v2932
      %v2997 = vadd.f32 %v2869, %v2933
      %v2998 = vadd.f32 %v2870, %v2934
      %v2999 = vadd.f32 %v2871, %v2935
      %v3000 = vadd.f32 %v2872, %v2936
      %v3001 = vadd.f32 %v2873, %v2937
      %v3002 = vadd.f32 %v2874, %v2938
      %v3003 = vadd.f32 %v2875, %v2939
      %v3004 = vadd.f32 %v2876, %v2940
      %v3005 = vadd.f32 %v2877, %v2941
      %v3006 = vadd.f32 %v2878, %v2942
      %v3007 = vadd.f32 %v2879, %v2943
      %v3008 = vadd.f32 %v2880, %v2944
      %v3009 = vadd.f32 %v2881, %v2945
      %v3010 = vadd.f32 %v2882, %v2946
      %v3011 = vadd.f32 %v2883, %v2947
      %v3012 = vadd.f32 %v2884, %v2948
      %v3013 = vadd.f32 %v2885, %v2949
      %v3014 = vadd.f32 %v2886, %v2950
      %v3015 = vadd.f32 %v2887, %v2951
      %v3016 = vadd.f32 %v2888, %v2952
      %v3017 = vadd.f32 %v2889, %v2953
      %v3018 = vadd.f32 %v2890, %v2954
      %v3019 = vadd.f32 %v2891, %v2955
      %v3020 = vadd.f32 %v2892, %v2956
      %v3021 = vadd.f32 %v2893, %v2957
      %v3022 = vadd.f32 %v2894, %v2958
      %v3023 = vadd.f32 %v2895, %v2959
      %v3024 = vadd.f32 %v2896, %v2960
      %v3025 = vpack.c.bf16 %v2963, %v2961
      %v3026 = vpack.c.bf16 %v2964, %v2962
      %v3027 = vpack.c.bf16 %v2967, %v2965
      %v3028 = vpack.c.bf16 %v2968, %v2966
      %v3029 = vpack.c.bf16 %v2971, %v2969
      %v3030 = vpack.c.bf16 %v2972, %v2970
      %v3031 = vpack.c.bf16 %v2975, %v2973
      %v3032 = vpack.c.bf16 %v2976, %v2974
      %v3033 = vpack.c.bf16 %v2979, %v2977
      %v3034 = vpack.c.bf16 %v2980, %v2978
      %v3035 = vpack.c.bf16 %v2983, %v2981
      %v3036 = vpack.c.bf16 %v2984, %v2982
      %v3037 = vpack.c.bf16 %v2987, %v2985
      %v3038 = vpack.c.bf16 %v2988, %v2986
      %v3039 = vpack.c.bf16 %v2991, %v2989
      %v3040 = vpack.c.bf16 %v2992, %v2990
      %v3041 = vpack.c.bf16 %v2995, %v2993
      %v3042 = vpack.c.bf16 %v2996, %v2994
      %v3043 = vpack.c.bf16 %v2999, %v2997
      %v3044 = vpack.c.bf16 %v3000, %v2998
      %v3045 = vpack.c.bf16 %v3003, %v3001
      %v3046 = vpack.c.bf16 %v3004, %v3002
      %v3047 = vpack.c.bf16 %v3007, %v3005
      %v3048 = vpack.c.bf16 %v3008, %v3006
      %v3049 = vpack.c.bf16 %v3011, %v3009
      %v3050 = vpack.c.bf16 %v3012, %v3010
      %v3051 = vpack.c.bf16 %v3015, %v3013
      %v3052 = vpack.c.bf16 %v3016, %v3014
      %v3053 = vpack.c.bf16 %v3019, %v3017
      %v3054 = vpack.c.bf16 %v3020, %v3018
      %v3055 = vpack.c.bf16 %v3023, %v3021
      %v3056 = vpack.c.bf16 %v3024, %v3022
      %v3057 = vld [vmem:[%s2] sm:$0xf]
      %v3058 = vld [vmem:[%s2 + $0x4] sm:$0xf]
      %v3059 = vld [vmem:[%s2 + $0x8] sm:$0xf]
      %v3060 = vld [vmem:[%s2 + $0xc] sm:$0xf]
      %v3061 = vld [vmem:[%s2 + $0x10] sm:$0xf]
      %v3062 = vld [vmem:[%s2 + $0x14] sm:$0xf]
      %v3063 = vld [vmem:[%s2 + $0x18] sm:$0xf]
      %v3064 = vld [vmem:[%s2 + $0x1c] sm:$0xf]
      %v3065 = vld [vmem:[%s2 + $0x20] sm:$0xf]
      %v3066 = vld [vmem:[%s2 + $0x24] sm:$0xf]
      %v3067 = vld [vmem:[%s2 + $0x28] sm:$0xf]
      %v3068 = vld [vmem:[%s2 + $0x2c] sm:$0xf]
      %v3069 = vld [vmem:[%s2 + $0x30] sm:$0xf]
      %v3070 = vld [vmem:[%s2 + $0x34] sm:$0xf]
      %v3071 = vld [vmem:[%s2 + $0x38] sm:$0xf]
      %v3072 = vld [vmem:[%s2 + $0x3c] sm:$0xf]
      %v3073 = vld [vmem:[%s2 + $0x40] sm:$0xf]
      %v3074 = vld [vmem:[%s2 + $0x44] sm:$0xf]
      %v3075 = vld [vmem:[%s2 + $0x48] sm:$0xf]
      %v3076 = vld [vmem:[%s2 + $0x4c] sm:$0xf]
      %v3077 = vld [vmem:[%s2 + $0x50] sm:$0xf]
      %v3078 = vld [vmem:[%s2 + $0x54] sm:$0xf]
      %v3079 = vld [vmem:[%s2 + $0x58] sm:$0xf]
      %v3080 = vld [vmem:[%s2 + $0x5c] sm:$0xf]
      %v3081 = vld [vmem:[%s2 + $0x60] sm:$0xf]
      %v3082 = vld [vmem:[%s2 + $0x64] sm:$0xf]
      %v3083 = vld [vmem:[%s2 + $0x68] sm:$0xf]
      %v3084 = vld [vmem:[%s2 + $0x6c] sm:$0xf]
      %v3085 = vld [vmem:[%s2 + $0x70] sm:$0xf]
      %v3086 = vld [vmem:[%s2 + $0x74] sm:$0xf]
      %v3087 = vld [vmem:[%s2 + $0x78] sm:$0xf]
      %v3088 = vld [vmem:[%s2 + $0x7c] sm:$0xf]
      %v3121 = vunpack.c.l.b16 %v3057
      %v3122 = vunpack.c.l.b16 %v3058
      %v3123 = vunpack.c.l.b16 %v3059
      %v3124 = vunpack.c.l.b16 %v3060
      %v3125 = vunpack.c.l.b16 %v3061
      %v3126 = vunpack.c.l.b16 %v3062
      %v3127 = vunpack.c.l.b16 %v3063
      %v3128 = vunpack.c.l.b16 %v3064
      %v3129 = vunpack.c.l.b16 %v3065
      %v3130 = vunpack.c.l.b16 %v3066
      %v3131 = vunpack.c.l.b16 %v3067
      %v3132 = vunpack.c.l.b16 %v3068
      %v3133 = vunpack.c.l.b16 %v3069
      %v3134 = vunpack.c.l.b16 %v3070
      %v3135 = vunpack.c.l.b16 %v3071
      %v3136 = vunpack.c.l.b16 %v3072
      %v3137 = vunpack.c.l.b16 %v3073
      %v3138 = vunpack.c.l.b16 %v3074
      %v3139 = vunpack.c.l.b16 %v3075
      %v3140 = vunpack.c.l.b16 %v3076
      %v3141 = vunpack.c.l.b16 %v3077
      %v3142 = vunpack.c.l.b16 %v3078
      %v3143 = vunpack.c.l.b16 %v3079
      %v3144 = vunpack.c.l.b16 %v3080
      %v3145 = vunpack.c.l.b16 %v3081
      %v3146 = vunpack.c.l.b16 %v3082
      %v3147 = vunpack.c.l.b16 %v3083
      %v3148 = vunpack.c.l.b16 %v3084
      %v3149 = vunpack.c.l.b16 %v3085
      %v3150 = vunpack.c.l.b16 %v3086
      %v3151 = vunpack.c.l.b16 %v3087
      %v3152 = vunpack.c.l.b16 %v3088
      %v3153 = vpack.c.b16 %v3122, %v3121
      %v3154 = vpack.c.b16 %v3124, %v3123
      %v3155 = vpack.c.b16 %v3126, %v3125
      %v3156 = vpack.c.b16 %v3128, %v3127
      %v3157 = vpack.c.b16 %v3130, %v3129
      %v3158 = vpack.c.b16 %v3132, %v3131
      %v3159 = vpack.c.b16 %v3134, %v3133
      %v3160 = vpack.c.b16 %v3136, %v3135
      %v3161 = vpack.c.b16 %v3138, %v3137
      %v3162 = vpack.c.b16 %v3140, %v3139
      %v3163 = vpack.c.b16 %v3142, %v3141
      %v3164 = vpack.c.b16 %v3144, %v3143
      %v3165 = vpack.c.b16 %v3146, %v3145
      %v3166 = vpack.c.b16 %v3148, %v3147
      %v3167 = vpack.c.b16 %v3150, %v3149
      %v3168 = vpack.c.b16 %v3152, %v3151
      %3185 = vmatpush.bf16.msra.mxu0 %v3160
      %3186 = vmatpush.bf16.msra.mxu0 %v3159
      %3187 = vmatpush.bf16.msra.mxu0 %v3158
      %3188 = vmatpush.bf16.msra.mxu0 %v3157
      %3189 = vmatpush.bf16.msra.mxu0 %v3156
      %3190 = vmatpush.bf16.msra.mxu0 %v3155
      %3191 = vmatpush.bf16.msra.mxu0 %v3154
      %3192 = vmatpush.bf16.msra.mxu0 %v3153
      %3193 = vmatmul.bf16.gmra.mxu0 %v3025
      %v3194 = vpop.f32.mrf.mxu0
      %v3195 = vadd.f32 0.0, %v3194
      %v3196 = vpop.f32.mrf.mxu0
      %v3197 = vadd.f32 0.0, %v3196
      %3198 = vmatmul.bf16.gmra.mxu0 %v3027
      %v3199 = vpop.f32.mrf.mxu0
      %v3200 = vadd.f32 0.0, %v3199
      %v3201 = vpop.f32.mrf.mxu0
      %v3202 = vadd.f32 0.0, %v3201
      %3203 = vmatmul.bf16.gmra.mxu0 %v3029
      %v3204 = vpop.f32.mrf.mxu0
      %v3205 = vadd.f32 0.0, %v3204
      %v3206 = vpop.f32.mrf.mxu0
      %v3207 = vadd.f32 0.0, %v3206
      %3208 = vmatmul.bf16.gmra.mxu0 %v3031
      %v3209 = vpop.f32.mrf.mxu0
      %v3210 = vadd.f32 0.0, %v3209
      %v3211 = vpop.f32.mrf.mxu0
      %v3212 = vadd.f32 0.0, %v3211
      %3213 = vmatmul.bf16.gmra.mxu0 %v3033
      %v3214 = vpop.f32.mrf.mxu0
      %v3215 = vadd.f32 0.0, %v3214
      %v3216 = vpop.f32.mrf.mxu0
      %v3217 = vadd.f32 0.0, %v3216
      %3218 = vmatmul.bf16.gmra.mxu0 %v3035
      %v3219 = vpop.f32.mrf.mxu0
      %v3220 = vadd.f32 0.0, %v3219
      %v3221 = vpop.f32.mrf.mxu0
      %v3222 = vadd.f32 0.0, %v3221
      %3223 = vmatmul.bf16.gmra.mxu0 %v3037
      %v3224 = vpop.f32.mrf.mxu0
      %v3225 = vadd.f32 0.0, %v3224
      %v3226 = vpop.f32.mrf.mxu0
      %v3227 = vadd.f32 0.0, %v3226
      %3228 = vmatmul.bf16.gmra.mxu0 %v3039
      %v3229 = vpop.f32.mrf.mxu0
      %v3230 = vadd.f32 0.0, %v3229
      %v3231 = vpop.f32.mrf.mxu0
      %v3232 = vadd.f32 0.0, %v3231
      %3233 = vmatmul.bf16.gmra.mxu0 %v3041
      %v3234 = vpop.f32.mrf.mxu0
      %v3235 = vadd.f32 0.0, %v3234
      %v3236 = vpop.f32.mrf.mxu0
      %v3237 = vadd.f32 0.0, %v3236
      %3238 = vmatmul.bf16.gmra.mxu0 %v3043
      %v3239 = vpop.f32.mrf.mxu0
      %v3240 = vadd.f32 0.0, %v3239
      %v3241 = vpop.f32.mrf.mxu0
      %v3242 = vadd.f32 0.0, %v3241
      %3243 = vmatmul.bf16.gmra.mxu0 %v3045
      %v3244 = vpop.f32.mrf.mxu0
      %v3245 = vadd.f32 0.0, %v3244
      %v3246 = vpop.f32.mrf.mxu0
      %v3247 = vadd.f32 0.0, %v3246
      %3248 = vmatmul.bf16.gmra.mxu0 %v3047
      %v3249 = vpop.f32.mrf.mxu0
      %v3250 = vadd.f32 0.0, %v3249
      %v3251 = vpop.f32.mrf.mxu0
      %v3252 = vadd.f32 0.0, %v3251
      %3253 = vmatmul.bf16.gmra.mxu0 %v3049
      %v3254 = vpop.f32.mrf.mxu0
      %v3255 = vadd.f32 0.0, %v3254
      %v3256 = vpop.f32.mrf.mxu0
      %v3257 = vadd.f32 0.0, %v3256
      %3258 = vmatmul.bf16.gmra.mxu0 %v3051
      %v3259 = vpop.f32.mrf.mxu0
      %v3260 = vadd.f32 0.0, %v3259
      %v3261 = vpop.f32.mrf.mxu0
      %v3262 = vadd.f32 0.0, %v3261
      %3263 = vmatmul.bf16.gmra.mxu0 %v3053
      %v3264 = vpop.f32.mrf.mxu0
      %v3265 = vadd.f32 0.0, %v3264
      %v3266 = vpop.f32.mrf.mxu0
      %v3267 = vadd.f32 0.0, %v3266
      %3268 = vmatmul.bf16.gmra.mxu0 %v3055
      %v3269 = vpop.f32.mrf.mxu0
      %v3270 = vadd.f32 0.0, %v3269
      %v3271 = vpop.f32.mrf.mxu0
      %v3272 = vadd.f32 0.0, %v3271
      %3273 = vdwg.mxu0
      %3274 = vmatpush.bf16.msra.mxu0 %v3168
      %3275 = vmatpush.bf16.msra.mxu0 %v3167
      %3276 = vmatpush.bf16.msra.mxu0 %v3166
      %3277 = vmatpush.bf16.msra.mxu0 %v3165
      %3278 = vmatpush.bf16.msra.mxu0 %v3164
      %3279 = vmatpush.bf16.msra.mxu0 %v3163
      %3280 = vmatpush.bf16.msra.mxu0 %v3162
      %3281 = vmatpush.bf16.msra.mxu0 %v3161
      %3282 = vmatmul.bf16.gmra.mxu0 %v3026
      %v3283 = vpop.f32.mrf.mxu0
      %v3284 = vadd.f32 %v3195, %v3283
      %v3285 = vpop.f32.mrf.mxu0
      %v3286 = vadd.f32 %v3197, %v3285
      %3287 = vmatmul.bf16.gmra.mxu0 %v3028
      %v3288 = vpop.f32.mrf.mxu0
      %v3289 = vadd.f32 %v3200, %v3288
      %v3290 = vpop.f32.mrf.mxu0
      %v3291 = vadd.f32 %v3202, %v3290
      %3292 = vmatmul.bf16.gmra.mxu0 %v3030
      %v3293 = vpop.f32.mrf.mxu0
      %v3294 = vadd.f32 %v3205, %v3293
      %v3295 = vpop.f32.mrf.mxu0
      %v3296 = vadd.f32 %v3207, %v3295
      %3297 = vmatmul.bf16.gmra.mxu0 %v3032
      %v3298 = vpop.f32.mrf.mxu0
      %v3299 = vadd.f32 %v3210, %v3298
      %v3300 = vpop.f32.mrf.mxu0
      %v3301 = vadd.f32 %v3212, %v3300
      %3302 = vmatmul.bf16.gmra.mxu0 %v3034
      %v3303 = vpop.f32.mrf.mxu0
      %v3304 = vadd.f32 %v3215, %v3303
      %v3305 = vpop.f32.mrf.mxu0
      %v3306 = vadd.f32 %v3217, %v3305
      %3307 = vmatmul.bf16.gmra.mxu0 %v3036
      %v3308 = vpop.f32.mrf.mxu0
      %v3309 = vadd.f32 %v3220, %v3308
      %v3310 = vpop.f32.mrf.mxu0
      %v3311 = vadd.f32 %v3222, %v3310
      %3312 = vmatmul.bf16.gmra.mxu0 %v3038
      %v3313 = vpop.f32.mrf.mxu0
      %v3314 = vadd.f32 %v3225, %v3313
      %v3315 = vpop.f32.mrf.mxu0
      %v3316 = vadd.f32 %v3227, %v3315
      %3317 = vmatmul.bf16.gmra.mxu0 %v3040
      %v3318 = vpop.f32.mrf.mxu0
      %v3319 = vadd.f32 %v3230, %v3318
      %v3320 = vpop.f32.mrf.mxu0
      %v3321 = vadd.f32 %v3232, %v3320
      %3322 = vmatmul.bf16.gmra.mxu0 %v3042
      %v3323 = vpop.f32.mrf.mxu0
      %v3324 = vadd.f32 %v3235, %v3323
      %v3325 = vpop.f32.mrf.mxu0
      %v3326 = vadd.f32 %v3237, %v3325
      %3327 = vmatmul.bf16.gmra.mxu0 %v3044
      %v3328 = vpop.f32.mrf.mxu0
      %v3329 = vadd.f32 %v3240, %v3328
      %v3330 = vpop.f32.mrf.mxu0
      %v3331 = vadd.f32 %v3242, %v3330
      %3332 = vmatmul.bf16.gmra.mxu0 %v3046
      %v3333 = vpop.f32.mrf.mxu0
      %v3334 = vadd.f32 %v3245, %v3333
      %v3335 = vpop.f32.mrf.mxu0
      %v3336 = vadd.f32 %v3247, %v3335
      %3337 = vmatmul.bf16.gmra.mxu0 %v3048
      %v3338 = vpop.f32.mrf.mxu0
      %v3339 = vadd.f32 %v3250, %v3338
      %v3340 = vpop.f32.mrf.mxu0
      %v3341 = vadd.f32 %v3252, %v3340
      %3342 = vmatmul.bf16.gmra.mxu0 %v3050
      %v3343 = vpop.f32.mrf.mxu0
      %v3344 = vadd.f32 %v3255, %v3343
      %v3345 = vpop.f32.mrf.mxu0
      %v3346 = vadd.f32 %v3257, %v3345
      %3347 = vmatmul.bf16.gmra.mxu0 %v3052
      %v3348 = vpop.f32.mrf.mxu0
      %v3349 = vadd.f32 %v3260, %v3348
      %v3350 = vpop.f32.mrf.mxu0
      %v3351 = vadd.f32 %v3262, %v3350
      %3352 = vmatmul.bf16.gmra.mxu0 %v3054
      %v3353 = vpop.f32.mrf.mxu0
      %v3354 = vadd.f32 %v3265, %v3353
      %v3355 = vpop.f32.mrf.mxu0
      %v3356 = vadd.f32 %v3267, %v3355
      %3357 = vmatmul.bf16.gmra.mxu0 %v3056
      %v3358 = vpop.f32.mrf.mxu0
      %v3359 = vadd.f32 %v3270, %v3358
      %v3360 = vpop.f32.mrf.mxu0
      %v3361 = vadd.f32 %v3272, %v3360
      %3362 = vdwg.mxu0
      %v3363 = vpack.c.bf16 %v3284, %v3284
      %v3364 = vpack.c.bf16 %v3286, %v3286
      %v3365 = vpack.c.bf16 %v3289, %v3289
      %v3366 = vpack.c.bf16 %v3291, %v3291
      %v3367 = vpack.c.bf16 %v3294, %v3294
      %v3368 = vpack.c.bf16 %v3296, %v3296
      %v3369 = vpack.c.bf16 %v3299, %v3299
      %v3370 = vpack.c.bf16 %v3301, %v3301
      %v3371 = vpack.c.bf16 %v3304, %v3304
      %v3372 = vpack.c.bf16 %v3306, %v3306
      %v3373 = vpack.c.bf16 %v3309, %v3309
      %v3374 = vpack.c.bf16 %v3311, %v3311
      %v3375 = vpack.c.bf16 %v3314, %v3314
      %v3376 = vpack.c.bf16 %v3316, %v3316
      %v3377 = vpack.c.bf16 %v3319, %v3319
      %v3378 = vpack.c.bf16 %v3321, %v3321
      %v3379 = vpack.c.bf16 %v3324, %v3324
      %v3380 = vpack.c.bf16 %v3326, %v3326
      %v3381 = vpack.c.bf16 %v3329, %v3329
      %v3382 = vpack.c.bf16 %v3331, %v3331
      %v3383 = vpack.c.bf16 %v3334, %v3334
      %v3384 = vpack.c.bf16 %v3336, %v3336
      %v3385 = vpack.c.bf16 %v3339, %v3339
      %v3386 = vpack.c.bf16 %v3341, %v3341
      %v3387 = vpack.c.bf16 %v3344, %v3344
      %v3388 = vpack.c.bf16 %v3346, %v3346
      %v3389 = vpack.c.bf16 %v3349, %v3349
      %v3390 = vpack.c.bf16 %v3351, %v3351
      %v3391 = vpack.c.bf16 %v3354, %v3354
      %v3392 = vpack.c.bf16 %v3356, %v3356
      %v3393 = vpack.c.bf16 %v3359, %v3359
      %v3394 = vpack.c.bf16 %v3361, %v3361
      %3395 = vst [vmem:[%s249] sm:$0xf] %v3363
      %3396 = vst [vmem:[%s249 + $0x4] sm:$0xf] %v3364
      %3397 = vst [vmem:[%s249 + $0x8] sm:$0xf] %v3365
      %3398 = vst [vmem:[%s249 + $0xc] sm:$0xf] %v3366
      %3399 = vst [vmem:[%s249 + $0x10] sm:$0xf] %v3367
      %3400 = vst [vmem:[%s249 + $0x14] sm:$0xf] %v3368
      %3401 = vst [vmem:[%s249 + $0x18] sm:$0xf] %v3369
      %3402 = vst [vmem:[%s249 + $0x1c] sm:$0xf] %v3370
      %3403 = vst [vmem:[%s249 + $0x20] sm:$0xf] %v3371
      %3404 = vst [vmem:[%s249 + $0x24] sm:$0xf] %v3372
      %3405 = vst [vmem:[%s249 + $0x28] sm:$0xf] %v3373
      %3406 = vst [vmem:[%s249 + $0x2c] sm:$0xf] %v3374
      %3407 = vst [vmem:[%s249 + $0x30] sm:$0xf] %v3375
      %3408 = vst [vmem:[%s249 + $0x34] sm:$0xf] %v3376
      %3409 = vst [vmem:[%s249 + $0x38] sm:$0xf] %v3377
      %3410 = vst [vmem:[%s249 + $0x3c] sm:$0xf] %v3378
      %3411 = vst [vmem:[%s249 + $0x40] sm:$0xf] %v3379
      %3412 = vst [vmem:[%s249 + $0x44] sm:$0xf] %v3380
      %3413 = vst [vmem:[%s249 + $0x48] sm:$0xf] %v3381
      %3414 = vst [vmem:[%s249 + $0x4c] sm:$0xf] %v3382
      %3415 = vst [vmem:[%s249 + $0x50] sm:$0xf] %v3383
      %3416 = vst [vmem:[%s249 + $0x54] sm:$0xf] %v3384
      %3417 = vst [vmem:[%s249 + $0x58] sm:$0xf] %v3385
      %3418 = vst [vmem:[%s249 + $0x5c] sm:$0xf] %v3386
      %3419 = vst [vmem:[%s249 + $0x60] sm:$0xf] %v3387
      %3420 = vst [vmem:[%s249 + $0x64] sm:$0xf] %v3388
      %3421 = vst [vmem:[%s249 + $0x68] sm:$0xf] %v3389
      %3422 = vst [vmem:[%s249 + $0x6c] sm:$0xf] %v3390
      %3423 = vst [vmem:[%s249 + $0x70] sm:$0xf] %v3391
      %3424 = vst [vmem:[%s249 + $0x74] sm:$0xf] %v3392
      %3425 = vst [vmem:[%s249 + $0x78] sm:$0xf] %v3393
      %3426 = vst [vmem:[%s249 + $0x7c] sm:$0xf] %v3394
      %v3427 = vmax.f32 %v3284, %v3294
      %v3428 = vmax.f32 %v3286, %v3296
      %v3429 = vmax.f32 %v3289, %v3299
      %v3430 = vmax.f32 %v3291, %v3301
      %v3431 = vmax.f32 %v3427, %v3304
      %v3432 = vmax.f32 %v3428, %v3306
      %v3433 = vmax.f32 %v3429, %v3309
      %v3434 = vmax.f32 %v3430, %v3311
      %v3435 = vmax.f32 %v3431, %v3314
      %v3436 = vmax.f32 %v3432, %v3316
      %v3437 = vmax.f32 %v3433, %v3319
      %v3438 = vmax.f32 %v3434, %v3321
      %v3439 = vmax.f32 %v3435, %v3324
      %v3440 = vmax.f32 %v3436, %v3326
      %v3441 = vmax.f32 %v3437, %v3329
      %v3442 = vmax.f32 %v3438, %v3331
      %v3443 = vmax.f32 %v3439, %v3334
      %v3444 = vmax.f32 %v3440, %v3336
      %v3445 = vmax.f32 %v3441, %v3339
      %v3446 = vmax.f32 %v3442, %v3341
      %v3447 = vmax.f32 %v3443, %v3344
      %v3448 = vmax.f32 %v3444, %v3346
      %v3449 = vmax.f32 %v3445, %v3349
      %v3450 = vmax.f32 %v3446, %v3351
      %v3451 = vmax.f32 %v3447, %v3354
      %v3452 = vmax.f32 %v3448, %v3356
      %v3453 = vmax.f32 %v3449, %v3359
      %v3454 = vmax.f32 %v3450, %v3361
      %v3455 = vmax.f32 %v3451, %v3452
      %v3456 = vmax.f32 %v3453, %v3454
      %v3457 = vmax.f32 %v3455, %v3456
      %v3458 = vrot.slane %v3457, 4
      %v3459 = vmax.f32 %v3457, %v3458
      %v3460 = vrot.slane %v3459, 2
      %v3461 = vmax.f32 %v3459, %v3460
      %v3462 = vrot.slane %v3461, 1
      %v3463 = vmax.f32 %v3461, %v3462
      %3464 = vst [vmem:[%s256] sm:$0x1] %v3463
      %s3465 = smul.u32 32, %s21
      %p3466 = scmp.lt.s32.totalorder %s20, 1
      %s3467 = scalar_select %p3466, %s20, 1
      %p3468 = scmp.lt.s32.totalorder %s3465, 31
      %s3469 = scalar_select %p3468, %s3465, 31
      %s3470 = smul.addr %s3467, 32
      %s3471 = sadd.s32 %s3469, %s3470
      %s3472 = smul.addr %s3471, 4
      %s3473 = scalar_lea.vmem %s3, %s3472
      %p3474 = scmp.lt.s32.totalorder %s20, 1
      %s3475 = scalar_select %p3474, %s20, 1
      %p3476 = scmp.lt.s32.totalorder %s21, 0
      %s3477 = scalar_select %p3476, %s21, 0
      %s3478 = sadd.s32 %s3477, %s3475
      %s3479 = scalar_lea.vmem %s4, %s3478
      // Predicated region
      $region33: #{gamma_forward.1} parent=31 // pred_check
        %p3480 = pneg %p118
      $region34: #{gamma_forward.1} parent=31 // pred_check_branch
        %3482 = sbr.rel (%p3480) target = $region36
      $region35: #{gamma_forward.1} parent=31 // pred_region
        %s3483 = smul.u32 32, %s21
      $region36: #{gamma_forward.1} parent=31 // pred_fallthru
        _
      // Predicated region
      $region37: #{gamma_forward.1} parent=31 // pred_check
        %p3484 = pneg %p146
      $region38: #{gamma_forward.1} parent=31 // pred_check_branch
        %3486 = sbr.rel (%p3484) target = $region40
      $region39: #{gamma_forward.1} parent=31 // pred_region
        _
      $region40: #{gamma_forward.1} parent=31 // pred_fallthru
        _
    $region32: #{gamma_forward.1} parent=5 // pred_fallthru
      _
    %p3487 = scmp.le.s32.totalorder 2, %s11
    // Predicated region
    $region41: #{gamma_forward.1} parent=5 // pred_check
      %p3488 = pneg %p3487
    $region42: #{gamma_forward.1} parent=5 // pred_check_branch
      %3490 = sbr.rel (%p3488) target = $region44
    $region43: #{gamma_forward.1} parent=5 // pred_region
      %s3491 = ssub.s32 %s11, 2
      // Predicated region
      $region45: #{gamma_forward.1} parent=43 // pred_check
        %p3492 = pneg %p124
      $region46: #{gamma_forward.1} parent=43 // pred_check_branch
        %3494 = sbr.rel (%p3492) target = $region48
      $region47: #{gamma_forward.1} parent=43 // pred_region
        %s3495 = smul.u32 32, %s23
        %p3496 = scmp.lt.s32.totalorder %s22, 1
        %s3497 = scalar_select %p3496, %s22, 1
        %p3498 = scmp.lt.s32.totalorder %s3495, 31
        %s3499 = scalar_select %p3498, %s3495, 31
        %s3500 = smul.addr %s3497, 32
        %s3501 = sadd.s32 %s3499, %s3500
        %s3502 = smul.addr %s3501, 4
        %s3503 = scalar_lea.vmem %s3, %s3502
      $region48: #{gamma_forward.1} parent=43 // pred_fallthru
        _
      // Predicated region
      $region49: #{gamma_forward.1} parent=43 // pred_check
        %p3504 = pneg %p152
      $region50: #{gamma_forward.1} parent=43 // pred_check_branch
        %3506 = sbr.rel (%p3504) target = $region52
      $region51: #{gamma_forward.1} parent=43 // pred_region
        %p3507 = scmp.lt.s32.totalorder %s22, 1
        %s3508 = scalar_select %p3507, %s22, 1
        %p3509 = scmp.lt.s32.totalorder %s23, 0
        %s3510 = scalar_select %p3509, %s23, 0
        %s3511 = sadd.s32 %s3510, %s3508
        %s3512 = scalar_lea.vmem %s4, %s3511
      $region52: #{gamma_forward.1} parent=43 // pred_fallthru
        _
    $region44: #{gamma_forward.1} parent=5 // pred_fallthru
      _
  $region6: #{gamma_forward.1} parent=0 // loop_footer
    %s15 = sadd.s32 1, %s11
  $region7: #{gamma_forward.1} parent=0 // loop_footer_branch
    %10 = sbr.rel target = $region3
  $region8: #{gamma_forward.1} parent=0 // loop_exit
    _

</llo_original>
